<compile_context>
chip_gen: v7x
topology: tpu7x:2x2x1
jax: 0.10.0
libtpu: 0.0.40
codegen_flags: <defaults>
</compile_context>

<pallas_src>
import functools
import math

import jax
import jax.numpy as jnp
from jax import lax
from jax.experimental import pallas as pl
from jax.experimental.pallas import tpu as pltpu

EPS = 1e-5                       # LayerNorm eps used in the book's implementation
_GELU_C = math.sqrt(2.0 / math.pi)
_NEG_BIG = -1e30                 # additive causal bias (finite; applied on f32 scores only)


def _layernorm(x, g, b):
    # matches: mean over last dim, var(unbiased=False), scale * norm + shift
    mean = jnp.mean(x, axis=-1, keepdims=True)
    var = jnp.mean((x - mean) ** 2, axis=-1, keepdims=True)
    return (x - mean) * lax.rsqrt(var + EPS) * g + b


def _gelu_tanh(x):
    # the book's GELU: 0.5*x*(1+tanh(sqrt(2/pi)*(x+0.044715*x^3)))
    return 0.5 * x * (1.0 + jnp.tanh(_GELU_C * (x + 0.044715 * x * x * x)))


def transformer_block_kernel(
        x_ref,
        ln1g_ref, ln1b_ref,
        wqkv_ref, bqkv_ref,          # fused QKV: (3E, E) bf16 (scale folded into q rows) / (3E, 1) f32
        wo_ref, bo_ref,              # out proj:  (E, E) / (1, E)
        ln2g_ref, ln2b_ref,
        w1_ref, b1_ref,              # FF layer 1: (E, Hf) / (1, Hf)
        w2_ref, b2_ref,              # FF layer 2: (Hf, E) / (1, E)
        out_ref, *, num_heads):
    f32 = jnp.float32
    cd = wqkv_ref.dtype                               # matmul operand dtype (bf16)

    x = x_ref[0]                                      # (S, E) f32 residual, kept in f32
    S, E = x.shape
    H = num_heads
    Dh = E // H

    # ---- sub-block 1: LayerNorm -> causal MHA -> (dropout=id) -> residual ----
    xn = _layernorm(x, ln1g_ref[0], ln1b_ref[0])      # (S, E) f32

    # Fused QKV projection, feature-major output (3E, S).  A.B^T contraction
    # (contract the E dim of both operands) -- no activation transpose.
    qkv_t = lax.dot_general(
        wqkv_ref[...], xn.astype(cd),
        dimension_numbers=(((1,), (1,)), ((), ())),
        preferred_element_type=f32)                   # (3E, S) f32
    # NOTE: the feature-major orientation needs a per-sublane bias ((3E,1));
    # at GPT sizes fold this add into a flash-tile epilogue instead.
    qkv_t = qkv_t + bqkv_ref[...]

    # per-head split: tile-aligned sublane-dim slices + reshapes (no lane slicing)
    q_t = qkv_t[:E].reshape(H, Dh, S)                 # 1/sqrt(Dh) already folded in
    k_t = qkv_t[E:2 * E].reshape(H, Dh, S)
    v_t = qkv_t[2 * E:].reshape(H, Dh, S)

    # additive causal bias (0 / -1e30), shared across heads
    row = lax.broadcasted_iota(jnp.int32, (S, S), 0)
    col = lax.broadcasted_iota(jnp.int32, (S, S), 1)
    causal_bias = jnp.where(col > row, _NEG_BIG, 0.0).astype(f32)

    # scores: contract Dh of both operands (trans-A form), batch over heads
    s = lax.dot_general(
        q_t.astype(cd), k_t.astype(cd),
        dimension_numbers=(((1,), (1,)), ((0,), (0,))),
        preferred_element_type=f32)                   # (H, S, S) f32
    s = s + causal_bias
    m = jnp.max(s, axis=-1, keepdims=True)
    p = jnp.exp(s - m)
    denom = jnp.sum(p, axis=-1, keepdims=True)
    # approx reciprocal goes to the EUP slot; ~2^-12 rel err, fine for inference
    attn = p * pl.reciprocal(denom, approx=True)      # (H, S, S) f32
    # dropout on attention weights: rate 0.0 -> identity

    # context, feature-major (H, Dh, Sq): contract over keys, batch over heads
    ctx_t = lax.dot_general(
        v_t.astype(cd), attn.astype(cd),
        dimension_numbers=(((2,), (2,)), ((0,), (0,))),
        preferred_element_type=f32)                   # (H, Dh, S)

    # output projection: contract the feature (sublane) dims -> (S, E), no .T
    attn_out = lax.dot_general(
        ctx_t.reshape(E, S).astype(cd), wo_ref[...],
        dimension_numbers=(((0,), (0,)), ((), ())),
        preferred_element_type=f32) + bo_ref[...]     # (S, E) f32
    x1 = x + attn_out                                 # dropout(rate=0) == identity

    # ---- sub-block 2: LayerNorm -> FeedForward(GELU) -> (dropout=id) -> residual ----
    xn2 = _layernorm(x1, ln2g_ref[0], ln2b_ref[0])
    h1 = jnp.dot(xn2.astype(cd), w1_ref[...], preferred_element_type=f32) + b1_ref[...]
    h1 = _gelu_tanh(h1)
    ff = jnp.dot(h1.astype(cd), w2_ref[...], preferred_element_type=f32) + b2_ref[...]

    out_ref[0] = (x1 + ff).astype(out_ref.dtype)


def _vmem_limit_bytes():
    # Generation-aware VMEM budget: v5e/v6e have 128 MiB/TC, v7x only 64 MiB/TC.
    try:
        cap = int(pltpu.get_tpu_info().vmem_capacity_bytes)
    except Exception:
        cap = 64 * 1024 * 1024
    # leave ~1/8 headroom for compiler scratch; cap at ~100 MiB on 128 MiB parts
    return min(cap - cap // 8, 100 * 1024 * 1024)


def _build_and_call(x, params, num_heads, compute_dtype, single_buffer_weights):
    B, S, E = x.shape
    Hf = params["w1"].shape[1]
    Dh = E // num_heads
    scale = 1.0 / math.sqrt(Dh)
    cd = compute_dtype
    f32 = jnp.float32

    # Fuse Q/K/V into one (3E, E) weight in PyTorch (out, in) layout, with the
    # attention scale folded into the q rows (and q bias) at build time.
    wqkv = jnp.concatenate(
        [params["wq"] * scale, params["wk"], params["wv"]], axis=1).T.astype(cd)   # (3E, E)
    bqkv = jnp.concatenate(
        [params["bq"] * scale, params["bk"], params["bv"]],
        axis=1).reshape(3 * E, 1).astype(f32)                                       # (3E, 1)

    kernel = functools.partial(transformer_block_kernel, num_heads=num_heads)

    def const_spec(shape):
        zeros = (0,) * len(shape)
        index_map = lambda b, _z=zeros: _z
        if single_buffer_weights:
            # grid-invariant block: 1 buffer instead of the default 2 halves the
            # weights' VMEM residency (the big lever at GPT sizes / v7x 64 MiB).
            return pl.BlockSpec(shape, index_map, pipeline_mode=pl.Buffered(1))
        return pl.BlockSpec(shape, index_map)

    in_specs = [
        pl.BlockSpec((1, S, E), lambda b: (b, 0, 0)),   # x (f32 residual stream)
        const_spec((1, E)), const_spec((1, E)),         # ln1 scale / shift
        const_spec((3 * E, E)), const_spec((3 * E, 1)), # fused QKV weight / bias
        const_spec((E, E)), const_spec((1, E)),         # out proj
        const_spec((1, E)), const_spec((1, E)),         # ln2 scale / shift
        const_spec((E, Hf)), const_spec((1, Hf)),       # ff layer 1
        const_spec((Hf, E)), const_spec((1, E)),        # ff layer 2
    ]

    return pl.pallas_call(
        kernel,
        out_shape=jax.ShapeDtypeStruct((B, S, E), x.dtype),
        grid=(B,),
        in_specs=in_specs,
        out_specs=pl.BlockSpec((1, S, E), lambda b: (b, 0, 0)),
        compiler_params=pltpu.CompilerParams(
            dimension_semantics=("parallel",),
            vmem_limit_bytes=_vmem_limit_bytes()),
    )(x,
      params["ln1g"].astype(f32), params["ln1b"].astype(f32),
      wqkv, bqkv,
      params["wo"].astype(cd), params["bo"].astype(f32),
      params["ln2g"].astype(f32), params["ln2b"].astype(f32),
      params["w1"].astype(cd), params["b1"].astype(f32),
      params["w2"].astype(cd), params["b2"].astype(f32))


def transformer_block(x, params, num_heads, *, compute_dtype=jnp.bfloat16):
    """x: (B, S, E) float32.  params: standard (in, out)-layout f32 weights."""
    try:
        return _build_and_call(x, params, num_heads, compute_dtype,
                               single_buffer_weights=True)
    except Exception:
        # pipeline_mode=pl.Buffered(1) unsupported in this jax build ->
        # fall back to default double-buffered weight blocks (correctness identical).
        return _build_and_call(x, params, num_heads, compute_dtype,
                               single_buffer_weights=False)


# ---------------------------- pure-JAX reference ----------------------------
def _reference(x, p, num_heads):
    def ln(v, g, b):
        m = jnp.mean(v, -1, keepdims=True)
        var = jnp.mean((v - m) ** 2, -1, keepdims=True)
        return (v - m) / jnp.sqrt(var + EPS) * g[0] + b[0]

    B, S, E = x.shape
    Dh = E // num_heads
    resid = x
    xn = ln(x, p["ln1g"], p["ln1b"])
    q = xn @ p["wq"] + p["bq"][0]
    k = xn @ p["wk"] + p["bk"][0]
    v = xn @ p["wv"] + p["bv"][0]
    q = q.reshape(B, S, num_heads, Dh).transpose(0, 2, 1, 3)
    k = k.reshape(B, S, num_heads, Dh).transpose(0, 2, 1, 3)
    v = v.reshape(B, S, num_heads, Dh).transpose(0, 2, 1, 3)
    s = jnp.einsum("bhqd,bhkd->bhqk", q, k)
    mask = jnp.triu(jnp.ones((S, S), bool), 1)
    s = jnp.where(mask, -jnp.inf, s) / math.sqrt(Dh)
    a = jax.nn.softmax(s, axis=-1)
    ctx = jnp.einsum("bhqk,bhkd->bhqd", a, v).transpose(0, 2, 1, 3).reshape(B, S, E)
    x1 = ctx @ p["wo"] + p["bo"][0] + resid
    xn2 = ln(x1, p["ln2g"], p["ln2b"])
    h = xn2 @ p["w1"] + p["b1"][0]
    h = 0.5 * h * (1.0 + jnp.tanh(_GELU_C * (h + 0.044715 * h ** 3)))
    return h @ p["w2"] + p["b2"][0] + x1


if __name__ == "__main__":
    # cfg: emb_dim=32, n_heads=4, context_length=8, drop_rate=0.0, qkv_bias=True
    B, S, E, H = 2, 8, 32, 4
    Hf = 4 * E

    key = jax.random.PRNGKey(0)
    ks = jax.random.split(key, 18)
    f32 = jnp.float32

    def rnd(k, shape, s=0.02):
        return s * jax.random.normal(k, shape, f32)

    params = {
        "wq": rnd(ks[0], (E, E)), "bq": rnd(ks[1], (1, E)),
        "wk": rnd(ks[2], (E, E)), "bk": rnd(ks[3], (1, E)),
        "wv": rnd(ks[4], (E, E)), "bv": rnd(ks[5], (1, E)),
        "wo": rnd(ks[6], (E, E)), "bo": rnd(ks[7], (1, E)),
        "w1": rnd(ks[8], (E, Hf)), "b1": rnd(ks[9], (1, Hf)),
        "w2": rnd(ks[10], (Hf, E)), "b2": rnd(ks[11], (1, E)),
        "ln1g": 1.0 + rnd(ks[12], (1, E), 0.1), "ln1b": rnd(ks[13], (1, E), 0.1),
        "ln2g": 1.0 + rnd(ks[14], (1, E), 0.1), "ln2b": rnd(ks[15], (1, E), 0.1),
    }
    x = jax.random.normal(ks[16], (B, S, E), f32)

    # Pre-round inputs/weights to bf16-representable values so the f32 reference
    # sees exactly the operand values the bf16-matmul kernel does (isolates
    # rounding of kernel intermediates + approx reciprocal, well under tolerance).
    rb = lambda a: a.astype(jnp.bfloat16).astype(f32)
    params = jax.tree_util.tree_map(rb, params)
    x = rb(x)

    out = transformer_block(x, params, num_heads=H)
    out = jax.block_until_ready(out)

    ref = _reference(x, params, H)
    assert out.shape == (B, S, E)
    err = float(jnp.max(jnp.abs(out - ref)))
    assert err < 2e-3, f"mismatch vs pure-JAX reference: max abs err {err}"

    print("KERNEL_OK")
</pallas_src>

<mosaic_0001>
module attributes {stable_mosaic.version = 11 : i64} {
  func.func @transformer_block_kernel(%arg0: i32, %arg1: memref<1x8x32xf32, #tpu.memory_space<vmem>>, %arg2: memref<1x32xf32, #tpu.memory_space<vmem>>, %arg3: memref<1x32xf32, #tpu.memory_space<vmem>>, %arg4: memref<96x32xbf16, #tpu.memory_space<vmem>>, %arg5: memref<96x1xf32, #tpu.memory_space<vmem>>, %arg6: memref<32x32xbf16, #tpu.memory_space<vmem>>, %arg7: memref<1x32xf32, #tpu.memory_space<vmem>>, %arg8: memref<1x32xf32, #tpu.memory_space<vmem>>, %arg9: memref<1x32xf32, #tpu.memory_space<vmem>>, %arg10: memref<32x128xbf16, #tpu.memory_space<vmem>>, %arg11: memref<1x128xf32, #tpu.memory_space<vmem>>, %arg12: memref<128x32xbf16, #tpu.memory_space<vmem>>, %arg13: memref<1x32xf32, #tpu.memory_space<vmem>>, %arg14: memref<1x8x32xf32, #tpu.memory_space<vmem>>) attributes {dimension_semantics = [#tpu.dimension_semantics<parallel>], iteration_bounds = array<i64: 2>, scalar_prefetch = 0 : i64, scratch_operands = 0 : i64, tpu.core_type = #tpu.core_type<tc>, window_params = [{transform_indices = @transform_0, window_bounds = array<i64: 1, 8, 32>}, {pipeline_mode = #tpu.pipeline_mode<synchronous>, transform_indices = @transform_1, window_bounds = array<i64: 1, 32>}, {pipeline_mode = #tpu.pipeline_mode<synchronous>, transform_indices = @transform_2, window_bounds = array<i64: 1, 32>}, {pipeline_mode = #tpu.pipeline_mode<synchronous>, transform_indices = @transform_3, window_bounds = array<i64: 96, 32>}, {pipeline_mode = #tpu.pipeline_mode<synchronous>, transform_indices = @transform_4, window_bounds = array<i64: 96, 1>}, {pipeline_mode = #tpu.pipeline_mode<synchronous>, transform_indices = @transform_5, window_bounds = array<i64: 32, 32>}, {pipeline_mode = #tpu.pipeline_mode<synchronous>, transform_indices = @transform_6, window_bounds = array<i64: 1, 32>}, {pipeline_mode = #tpu.pipeline_mode<synchronous>, transform_indices = @transform_7, window_bounds = array<i64: 1, 32>}, {pipeline_mode = #tpu.pipeline_mode<synchronous>, transform_indices = @transform_8, window_bounds = array<i64: 1, 32>}, {pipeline_mode = #tpu.pipeline_mode<synchronous>, transform_indices = @transform_9, window_bounds = array<i64: 32, 128>}, {pipeline_mode = #tpu.pipeline_mode<synchronous>, transform_indices = @transform_10, window_bounds = array<i64: 1, 128>}, {pipeline_mode = #tpu.pipeline_mode<synchronous>, transform_indices = @transform_11, window_bounds = array<i64: 128, 32>}, {pipeline_mode = #tpu.pipeline_mode<synchronous>, transform_indices = @transform_12, window_bounds = array<i64: 1, 32>}, {transform_indices = @transform_13, window_bounds = array<i64: 1, 8, 32>}]} {
    %c0 = arith.constant 0 : index
    %c0_0 = arith.constant 0 : index
    %c0_1 = arith.constant 0 : index
    %0 = vector.load %arg1[%c0, %c0_0, %c0_1] : memref<1x8x32xf32, #tpu.memory_space<vmem>>, vector<1x8x32xf32>
    %1 = vector.shape_cast %0 : vector<1x8x32xf32> to vector<8x32xf32>
    %c0_2 = arith.constant 0 : index
    %c0_3 = arith.constant 0 : index
    %2 = vector.load %arg2[%c0_2, %c0_3] : memref<1x32xf32, #tpu.memory_space<vmem>>, vector<1x32xf32>
    %3 = vector.shape_cast %2 : vector<1x32xf32> to vector<32xf32>
    %c0_4 = arith.constant 0 : index
    %c0_5 = arith.constant 0 : index
    %4 = vector.load %arg3[%c0_4, %c0_5] : memref<1x32xf32, #tpu.memory_space<vmem>>, vector<1x32xf32>
    %5 = vector.shape_cast %4 : vector<1x32xf32> to vector<32xf32>
    %cst = arith.constant dense<0.000000e+00> : vector<8xf32>
    %6 = vector.multi_reduction <add>, %1, %cst [1] : vector<8x32xf32> to vector<8xf32>
    %7 = vector.shape_cast %6 : vector<8xf32> to vector<8x1xf32>
    %cst_6 = arith.constant 3.200000e+01 : f32
    %8 = vector.broadcast %cst_6 : f32 to vector<8x1xf32>
    %9 = arith.divf %7, %8 : vector<8x1xf32>
    %10 = vector.broadcast %9 : vector<8x1xf32> to vector<8x32xf32>
    %11 = arith.subf %1, %10 : vector<8x32xf32>
    %12 = arith.mulf %11, %11 : vector<8x32xf32>
    %cst_7 = arith.constant dense<0.000000e+00> : vector<8xf32>
    %13 = vector.multi_reduction <add>, %12, %cst_7 [1] : vector<8x32xf32> to vector<8xf32>
    %14 = vector.shape_cast %13 : vector<8xf32> to vector<8x1xf32>
    %cst_8 = arith.constant 3.200000e+01 : f32
    %15 = vector.broadcast %cst_8 : f32 to vector<8x1xf32>
    %16 = arith.divf %14, %15 : vector<8x1xf32>
    %17 = vector.broadcast %9 : vector<8x1xf32> to vector<8x32xf32>
    %18 = arith.subf %1, %17 : vector<8x32xf32>
    %cst_9 = arith.constant 9.99999974E-6 : f32
    %19 = vector.broadcast %cst_9 : f32 to vector<8x1xf32>
    %20 = arith.addf %16, %19 : vector<8x1xf32>
    %21 = math.rsqrt %20 : vector<8x1xf32>
    %22 = vector.broadcast %21 : vector<8x1xf32> to vector<8x32xf32>
    %23 = arith.mulf %18, %22 : vector<8x32xf32>
    %24 = vector.shape_cast %3 : vector<32xf32> to vector<1x32xf32>
    %25 = vector.broadcast %24 : vector<1x32xf32> to vector<8x32xf32>
    %26 = arith.mulf %23, %25 : vector<8x32xf32>
    %27 = vector.shape_cast %5 : vector<32xf32> to vector<1x32xf32>
    %28 = vector.broadcast %27 : vector<1x32xf32> to vector<8x32xf32>
    %29 = arith.addf %26, %28 : vector<8x32xf32>
    %c0_10 = arith.constant 0 : index
    %c0_11 = arith.constant 0 : index
    %30 = vector.load %arg4[%c0_10, %c0_11] : memref<96x32xbf16, #tpu.memory_space<vmem>>, vector<96x32xbf16>
    %31 = arith.truncf %29 : vector<8x32xf32> to vector<8x32xbf16>
    %cst_12 = arith.constant dense<0.000000e+00> : vector<96x8xf32>
    %32 = tpu.matmul %30, %31, %cst_12 {dimension_numbers = #tpu.dot_dimension_numbers<[1], [1], [0], [0], [0, 0, 1, 0], [], []>} : vector<96x32xbf16>, vector<8x32xbf16>, vector<96x8xf32> -> vector<96x8xf32>
    %c0_13 = arith.constant 0 : index
    %c0_14 = arith.constant 0 : index
    %33 = vector.load %arg5[%c0_13, %c0_14] : memref<96x1xf32, #tpu.memory_space<vmem>>, vector<96x1xf32>
    %34 = vector.broadcast %33 : vector<96x1xf32> to vector<96x8xf32>
    %35 = arith.addf %32, %34 : vector<96x8xf32>
    %36 = vector.extract_strided_slice %35 {offsets = [0, 0], sizes = [32, 8], strides = [1, 1]} : vector<96x8xf32> to vector<32x8xf32>
    %37 = vector.shape_cast %36 : vector<32x8xf32> to vector<4x8x8xf32>
    %38 = vector.extract_strided_slice %35 {offsets = [32, 0], sizes = [32, 8], strides = [1, 1]} : vector<96x8xf32> to vector<32x8xf32>
    %39 = vector.shape_cast %38 : vector<32x8xf32> to vector<4x8x8xf32>
    %40 = vector.extract_strided_slice %35 {offsets = [64, 0], sizes = [32, 8], strides = [1, 1]} : vector<96x8xf32> to vector<32x8xf32>
    %41 = vector.shape_cast %40 : vector<32x8xf32> to vector<4x8x8xf32>
    %42 = tpu.iota {dimensions = array<i32: 0>} : vector<8x8xi32>
    %43 = tpu.iota {dimensions = array<i32: 1>} : vector<8x8xi32>
    %44 = arith.cmpi sgt, %43, %42 : vector<8x8xi32>
    %cst_15 = arith.constant -1.000000e+30 : f32
    %cst_16 = arith.constant 0.000000e+00 : f32
    %45 = vector.broadcast %cst_15 : f32 to vector<8x8xf32>
    %46 = vector.broadcast %cst_16 : f32 to vector<8x8xf32>
    %47 = arith.select %44, %45, %46 : vector<8x8xi1>, vector<8x8xf32>
    %48 = arith.truncf %37 : vector<4x8x8xf32> to vector<4x8x8xbf16>
    %49 = arith.truncf %39 : vector<4x8x8xf32> to vector<4x8x8xbf16>
    %cst_17 = arith.constant dense<0.000000e+00> : vector<4x8x8xf32>
    %50 = tpu.matmul %48, %49, %cst_17 {dimension_numbers = #tpu.dot_dimension_numbers<[1], [1], [2], [2], [0, 0, 0, 2, 1, 2], [0], [0]>} : vector<4x8x8xbf16>, vector<4x8x8xbf16>, vector<4x8x8xf32> -> vector<4x8x8xf32>
    %51 = vector.shape_cast %47 : vector<8x8xf32> to vector<1x8x8xf32>
    %52 = vector.broadcast %51 : vector<1x8x8xf32> to vector<4x8x8xf32>
    %53 = arith.addf %50, %52 : vector<4x8x8xf32>
    %cst_18 = arith.constant dense<0xFF800000> : vector<4x8xf32>
    %54 = vector.multi_reduction <maximumf>, %53, %cst_18 [2] : vector<4x8x8xf32> to vector<4x8xf32>
    %55 = vector.shape_cast %54 : vector<4x8xf32> to vector<4x8x1xf32>
    %56 = vector.broadcast %55 : vector<4x8x1xf32> to vector<4x8x8xf32>
    %57 = arith.subf %53, %56 : vector<4x8x8xf32>
    %58 = math.exp %57 : vector<4x8x8xf32>
    %cst_19 = arith.constant dense<0.000000e+00> : vector<4x8xf32>
    %59 = vector.multi_reduction <add>, %58, %cst_19 [2] : vector<4x8x8xf32> to vector<4x8xf32>
    %60 = vector.shape_cast %59 : vector<4x8xf32> to vector<4x8x1xf32>
    %61 = tpu.reciprocal %60 {approx = true} : vector<4x8x1xf32> -> vector<4x8x1xf32>
    %62 = vector.broadcast %61 : vector<4x8x1xf32> to vector<4x8x8xf32>
    %63 = arith.mulf %58, %62 : vector<4x8x8xf32>
    %64 = arith.truncf %41 : vector<4x8x8xf32> to vector<4x8x8xbf16>
    %65 = arith.truncf %63 : vector<4x8x8xf32> to vector<4x8x8xbf16>
    %cst_20 = arith.constant dense<0.000000e+00> : vector<4x8x8xf32>
    %66 = tpu.matmul %64, %65, %cst_20 {dimension_numbers = #tpu.dot_dimension_numbers<[2], [2], [1], [1], [0, 0, 0, 1, 1, 1], [0], [0]>} : vector<4x8x8xbf16>, vector<4x8x8xbf16>, vector<4x8x8xf32> -> vector<4x8x8xf32>
    %67 = vector.shape_cast %66 : vector<4x8x8xf32> to vector<32x8xf32>
    %68 = arith.truncf %67 : vector<32x8xf32> to vector<32x8xbf16>
    %c0_21 = arith.constant 0 : index
    %c0_22 = arith.constant 0 : index
    %69 = vector.load %arg6[%c0_21, %c0_22] : memref<32x32xbf16, #tpu.memory_space<vmem>>, vector<32x32xbf16>
    %cst_23 = arith.constant dense<0.000000e+00> : vector<8x32xf32>
    %70 = tpu.matmul %68, %69, %cst_23 {dimension_numbers = #tpu.dot_dimension_numbers<[0], [0], [1], [1], [0, 1, 1, 1], [], []>} : vector<32x8xbf16>, vector<32x32xbf16>, vector<8x32xf32> -> vector<8x32xf32>
    %c0_24 = arith.constant 0 : index
    %c0_25 = arith.constant 0 : index
    %71 = vector.load %arg7[%c0_24, %c0_25] : memref<1x32xf32, #tpu.memory_space<vmem>>, vector<1x32xf32>
    %72 = vector.broadcast %71 : vector<1x32xf32> to vector<8x32xf32>
    %73 = arith.addf %70, %72 : vector<8x32xf32>
    %74 = arith.addf %1, %73 : vector<8x32xf32>
    %c0_26 = arith.constant 0 : index
    %c0_27 = arith.constant 0 : index
    %75 = vector.load %arg8[%c0_26, %c0_27] : memref<1x32xf32, #tpu.memory_space<vmem>>, vector<1x32xf32>
    %76 = vector.shape_cast %75 : vector<1x32xf32> to vector<32xf32>
    %c0_28 = arith.constant 0 : index
    %c0_29 = arith.constant 0 : index
    %77 = vector.load %arg9[%c0_28, %c0_29] : memref<1x32xf32, #tpu.memory_space<vmem>>, vector<1x32xf32>
    %78 = vector.shape_cast %77 : vector<1x32xf32> to vector<32xf32>
    %cst_30 = arith.constant dense<0.000000e+00> : vector<8xf32>
    %79 = vector.multi_reduction <add>, %74, %cst_30 [1] : vector<8x32xf32> to vector<8xf32>
    %80 = vector.shape_cast %79 : vector<8xf32> to vector<8x1xf32>
    %cst_31 = arith.constant 3.200000e+01 : f32
    %81 = vector.broadcast %cst_31 : f32 to vector<8x1xf32>
    %82 = arith.divf %80, %81 : vector<8x1xf32>
    %83 = vector.broadcast %82 : vector<8x1xf32> to vector<8x32xf32>
    %84 = arith.subf %74, %83 : vector<8x32xf32>
    %85 = arith.mulf %84, %84 : vector<8x32xf32>
    %cst_32 = arith.constant dense<0.000000e+00> : vector<8xf32>
    %86 = vector.multi_reduction <add>, %85, %cst_32 [1] : vector<8x32xf32> to vector<8xf32>
    %87 = vector.shape_cast %86 : vector<8xf32> to vector<8x1xf32>
    %cst_33 = arith.constant 3.200000e+01 : f32
    %88 = vector.broadcast %cst_33 : f32 to vector<8x1xf32>
    %89 = arith.divf %87, %88 : vector<8x1xf32>
    %90 = vector.broadcast %82 : vector<8x1xf32> to vector<8x32xf32>
    %91 = arith.subf %74, %90 : vector<8x32xf32>
    %cst_34 = arith.constant 9.99999974E-6 : f32
    %92 = vector.broadcast %cst_34 : f32 to vector<8x1xf32>
    %93 = arith.addf %89, %92 : vector<8x1xf32>
    %94 = math.rsqrt %93 : vector<8x1xf32>
    %95 = vector.broadcast %94 : vector<8x1xf32> to vector<8x32xf32>
    %96 = arith.mulf %91, %95 : vector<8x32xf32>
    %97 = vector.shape_cast %76 : vector<32xf32> to vector<1x32xf32>
    %98 = vector.broadcast %97 : vector<1x32xf32> to vector<8x32xf32>
    %99 = arith.mulf %96, %98 : vector<8x32xf32>
    %100 = vector.shape_cast %78 : vector<32xf32> to vector<1x32xf32>
    %101 = vector.broadcast %100 : vector<1x32xf32> to vector<8x32xf32>
    %102 = arith.addf %99, %101 : vector<8x32xf32>
    %103 = arith.truncf %102 : vector<8x32xf32> to vector<8x32xbf16>
    %c0_35 = arith.constant 0 : index
    %c0_36 = arith.constant 0 : index
    %104 = vector.load %arg10[%c0_35, %c0_36] : memref<32x128xbf16, #tpu.memory_space<vmem>>, vector<32x128xbf16>
    %cst_37 = arith.constant dense<0.000000e+00> : vector<8x128xf32>
    %105 = tpu.matmul %103, %104, %cst_37 {dimension_numbers = #tpu.dot_dimension_numbers<[1], [0], [0], [1], [0, 0, 1, 1], [], []>} : vector<8x32xbf16>, vector<32x128xbf16>, vector<8x128xf32> -> vector<8x128xf32>
    %c0_38 = arith.constant 0 : index
    %c0_39 = arith.constant 0 : index
    %106 = vector.load %arg11[%c0_38, %c0_39] : memref<1x128xf32, #tpu.memory_space<vmem>>, vector<1x128xf32>
    %107 = vector.broadcast %106 : vector<1x128xf32> to vector<8x128xf32>
    %108 = arith.addf %105, %107 : vector<8x128xf32>
    %cst_40 = arith.constant 5.000000e-01 : f32
    %109 = vector.broadcast %cst_40 : f32 to vector<8x128xf32>
    %110 = arith.mulf %109, %108 : vector<8x128xf32>
    %cst_41 = arith.constant 4.471500e-02 : f32
    %111 = vector.broadcast %cst_41 : f32 to vector<8x128xf32>
    %112 = arith.mulf %111, %108 : vector<8x128xf32>
    %113 = arith.mulf %112, %108 : vector<8x128xf32>
    %114 = arith.mulf %113, %108 : vector<8x128xf32>
    %115 = arith.addf %108, %114 : vector<8x128xf32>
    %cst_42 = arith.constant 0.797884583 : f32
    %116 = vector.broadcast %cst_42 : f32 to vector<8x128xf32>
    %117 = arith.mulf %116, %115 : vector<8x128xf32>
    %118 = math.tanh %117 : vector<8x128xf32>
    %cst_43 = arith.constant 1.000000e+00 : f32
    %119 = vector.broadcast %cst_43 : f32 to vector<8x128xf32>
    %120 = arith.addf %119, %118 : vector<8x128xf32>
    %121 = arith.mulf %110, %120 : vector<8x128xf32>
    %122 = arith.truncf %121 : vector<8x128xf32> to vector<8x128xbf16>
    %c0_44 = arith.constant 0 : index
    %c0_45 = arith.constant 0 : index
    %123 = vector.load %arg12[%c0_44, %c0_45] : memref<128x32xbf16, #tpu.memory_space<vmem>>, vector<128x32xbf16>
    %cst_46 = arith.constant dense<0.000000e+00> : vector<8x32xf32>
    %124 = tpu.matmul %122, %123, %cst_46 {dimension_numbers = #tpu.dot_dimension_numbers<[1], [0], [0], [1], [0, 0, 1, 1], [], []>} : vector<8x128xbf16>, vector<128x32xbf16>, vector<8x32xf32> -> vector<8x32xf32>
    %c0_47 = arith.constant 0 : index
    %c0_48 = arith.constant 0 : index
    %125 = vector.load %arg13[%c0_47, %c0_48] : memref<1x32xf32, #tpu.memory_space<vmem>>, vector<1x32xf32>
    %126 = vector.broadcast %125 : vector<1x32xf32> to vector<8x32xf32>
    %127 = arith.addf %124, %126 : vector<8x32xf32>
    %128 = arith.addf %74, %127 : vector<8x32xf32>
    %c0_49 = arith.constant 0 : index
    %c0_50 = arith.constant 0 : index
    %c0_51 = arith.constant 0 : index
    %129 = vector.load %arg14[%c0_49, %c0_50, %c0_51] : memref<1x8x32xf32, #tpu.memory_space<vmem>>, vector<1x8x32xf32>
    %130 = vector.shape_cast %129 : vector<1x8x32xf32> to vector<8x32xf32>
    %131 = vector.shape_cast %128 : vector<8x32xf32> to vector<1x8x32xf32>
    tpu.vector_store %arg14[%c0_49, %c0_50, %c0_51], %131 {strides = array<i32>} : memref<1x8x32xf32, #tpu.memory_space<vmem>>, vector<1x8x32xf32>,
    return
  }
  func.func @transform_0(%arg0: i32) -> (i32, i32, i32) {
    %c0_i32 = arith.constant 0 : i32
    %c0_i32_0 = arith.constant 0 : i32
    %c0_i32_1 = arith.constant 0 : i32
    return %arg0, %c0_i32, %c0_i32_0 : i32, i32, i32
  }
  func.func @transform_1(%arg0: i32) -> (i32, i32) {
    %c0_i32 = arith.constant 0 : i32
    %c0_i32_0 = arith.constant 0 : i32
    %c0_i32_1 = arith.constant 0 : i32
    return %c0_i32, %c0_i32_0 : i32, i32
  }
  func.func @transform_2(%arg0: i32) -> (i32, i32) {
    %c0_i32 = arith.constant 0 : i32
    %c0_i32_0 = arith.constant 0 : i32
    %c0_i32_1 = arith.constant 0 : i32
    return %c0_i32, %c0_i32_0 : i32, i32
  }
  func.func @transform_3(%arg0: i32) -> (i32, i32) {
    %c0_i32 = arith.constant 0 : i32
    %c0_i32_0 = arith.constant 0 : i32
    %c0_i32_1 = arith.constant 0 : i32
    return %c0_i32, %c0_i32_0 : i32, i32
  }
  func.func @transform_4(%arg0: i32) -> (i32, i32) {
    %c0_i32 = arith.constant 0 : i32
    %c0_i32_0 = arith.constant 0 : i32
    %c0_i32_1 = arith.constant 0 : i32
    return %c0_i32, %c0_i32_0 : i32, i32
  }
  func.func @transform_5(%arg0: i32) -> (i32, i32) {
    %c0_i32 = arith.constant 0 : i32
    %c0_i32_0 = arith.constant 0 : i32
    %c0_i32_1 = arith.constant 0 : i32
    return %c0_i32, %c0_i32_0 : i32, i32
  }
  func.func @transform_6(%arg0: i32) -> (i32, i32) {
    %c0_i32 = arith.constant 0 : i32
    %c0_i32_0 = arith.constant 0 : i32
    %c0_i32_1 = arith.constant 0 : i32
    return %c0_i32, %c0_i32_0 : i32, i32
  }
  func.func @transform_7(%arg0: i32) -> (i32, i32) {
    %c0_i32 = arith.constant 0 : i32
    %c0_i32_0 = arith.constant 0 : i32
    %c0_i32_1 = arith.constant 0 : i32
    return %c0_i32, %c0_i32_0 : i32, i32
  }
  func.func @transform_8(%arg0: i32) -> (i32, i32) {
    %c0_i32 = arith.constant 0 : i32
    %c0_i32_0 = arith.constant 0 : i32
    %c0_i32_1 = arith.constant 0 : i32
    return %c0_i32, %c0_i32_0 : i32, i32
  }
  func.func @transform_9(%arg0: i32) -> (i32, i32) {
    %c0_i32 = arith.constant 0 : i32
    %c0_i32_0 = arith.constant 0 : i32
    %c0_i32_1 = arith.constant 0 : i32
    return %c0_i32, %c0_i32_0 : i32, i32
  }
  func.func @transform_10(%arg0: i32) -> (i32, i32) {
    %c0_i32 = arith.constant 0 : i32
    %c0_i32_0 = arith.constant 0 : i32
    %c0_i32_1 = arith.constant 0 : i32
    return %c0_i32, %c0_i32_0 : i32, i32
  }
  func.func @transform_11(%arg0: i32) -> (i32, i32) {
    %c0_i32 = arith.constant 0 : i32
    %c0_i32_0 = arith.constant 0 : i32
    %c0_i32_1 = arith.constant 0 : i32
    return %c0_i32, %c0_i32_0 : i32, i32
  }
  func.func @transform_12(%arg0: i32) -> (i32, i32) {
    %c0_i32 = arith.constant 0 : i32
    %c0_i32_0 = arith.constant 0 : i32
    %c0_i32_1 = arith.constant 0 : i32
    return %c0_i32, %c0_i32_0 : i32, i32
  }
  func.func @transform_13(%arg0: i32) -> (i32, i32, i32) {
    %c0_i32 = arith.constant 0 : i32
    %c0_i32_0 = arith.constant 0 : i32
    %c0_i32_1 = arith.constant 0 : i32
    return %arg0, %c0_i32, %c0_i32_0 : i32, i32, i32
  }
}

module attributes {stable_mosaic.version = 11 : i64} {
  func.func @transformer_block_kernel(%arg0: i32, %arg1: memref<1x8x32xf32, #tpu.memory_space<vmem>>, %arg2: memref<1x32xf32, #tpu.memory_space<vmem>>, %arg3: memref<1x32xf32, #tpu.memory_space<vmem>>, %arg4: memref<96x32xbf16, #tpu.memory_space<vmem>>, %arg5: memref<96x1xf32, #tpu.memory_space<vmem>>, %arg6: memref<32x32xbf16, #tpu.memory_space<vmem>>, %arg7: memref<1x32xf32, #tpu.memory_space<vmem>>, %arg8: memref<1x32xf32, #tpu.memory_space<vmem>>, %arg9: memref<1x32xf32, #tpu.memory_space<vmem>>, %arg10: memref<32x128xbf16, #tpu.memory_space<vmem>>, %arg11: memref<1x128xf32, #tpu.memory_space<vmem>>, %arg12: memref<128x32xbf16, #tpu.memory_space<vmem>>, %arg13: memref<1x32xf32, #tpu.memory_space<vmem>>, %arg14: memref<1x8x32xf32, #tpu.memory_space<vmem>>) attributes {dimension_semantics = [#tpu.dimension_semantics<parallel>], iteration_bounds = array<i64: 2>, scalar_prefetch = 0 : i64, scratch_operands = 0 : i64, tpu.core_type = #tpu.core_type<tc>, window_params = [{transform_indices = @transform_0, window_bounds = array<i64: 1, 8, 32>}, {pipeline_mode = #tpu.pipeline_mode<synchronous>, transform_indices = @transform_1, window_bounds = array<i64: 1, 32>}, {pipeline_mode = #tpu.pipeline_mode<synchronous>, transform_indices = @transform_2, window_bounds = array<i64: 1, 32>}, {pipeline_mode = #tpu.pipeline_mode<synchronous>, transform_indices = @transform_3, window_bounds = array<i64: 96, 32>}, {pipeline_mode = #tpu.pipeline_mode<synchronous>, transform_indices = @transform_4, window_bounds = array<i64: 96, 1>}, {pipeline_mode = #tpu.pipeline_mode<synchronous>, transform_indices = @transform_5, window_bounds = array<i64: 32, 32>}, {pipeline_mode = #tpu.pipeline_mode<synchronous>, transform_indices = @transform_6, window_bounds = array<i64: 1, 32>}, {pipeline_mode = #tpu.pipeline_mode<synchronous>, transform_indices = @transform_7, window_bounds = array<i64: 1, 32>}, {pipeline_mode = #tpu.pipeline_mode<synchronous>, transform_indices = @transform_8, window_bounds = array<i64: 1, 32>}, {pipeline_mode = #tpu.pipeline_mode<synchronous>, transform_indices = @transform_9, window_bounds = array<i64: 32, 128>}, {pipeline_mode = #tpu.pipeline_mode<synchronous>, transform_indices = @transform_10, window_bounds = array<i64: 1, 128>}, {pipeline_mode = #tpu.pipeline_mode<synchronous>, transform_indices = @transform_11, window_bounds = array<i64: 128, 32>}, {pipeline_mode = #tpu.pipeline_mode<synchronous>, transform_indices = @transform_12, window_bounds = array<i64: 1, 32>}, {transform_indices = @transform_13, window_bounds = array<i64: 1, 8, 32>}]} {
    %c0 = arith.constant 0 : index
    %c0_0 = arith.constant 0 : index
    %c0_1 = arith.constant 0 : index
    %0 = vector.load %arg1[%c0, %c0_0, %c0_1] : memref<1x8x32xf32, #tpu.memory_space<vmem>>, vector<1x8x32xf32>
    %1 = vector.shape_cast %0 : vector<1x8x32xf32> to vector<8x32xf32>
    %c0_2 = arith.constant 0 : index
    %c0_3 = arith.constant 0 : index
    %2 = vector.load %arg2[%c0_2, %c0_3] : memref<1x32xf32, #tpu.memory_space<vmem>>, vector<1x32xf32>
    %3 = vector.shape_cast %2 : vector<1x32xf32> to vector<32xf32>
    %c0_4 = arith.constant 0 : index
    %c0_5 = arith.constant 0 : index
    %4 = vector.load %arg3[%c0_4, %c0_5] : memref<1x32xf32, #tpu.memory_space<vmem>>, vector<1x32xf32>
    %5 = vector.shape_cast %4 : vector<1x32xf32> to vector<32xf32>
    %cst = arith.constant dense<0.000000e+00> : vector<8xf32>
    %6 = vector.multi_reduction <add>, %1, %cst [1] : vector<8x32xf32> to vector<8xf32>
    %7 = vector.shape_cast %6 : vector<8xf32> to vector<8x1xf32>
    %cst_6 = arith.constant 3.200000e+01 : f32
    %8 = vector.broadcast %cst_6 : f32 to vector<8x1xf32>
    %9 = arith.divf %7, %8 : vector<8x1xf32>
    %10 = vector.broadcast %9 : vector<8x1xf32> to vector<8x32xf32>
    %11 = arith.subf %1, %10 : vector<8x32xf32>
    %12 = arith.mulf %11, %11 : vector<8x32xf32>
    %cst_7 = arith.constant dense<0.000000e+00> : vector<8xf32>
    %13 = vector.multi_reduction <add>, %12, %cst_7 [1] : vector<8x32xf32> to vector<8xf32>
    %14 = vector.shape_cast %13 : vector<8xf32> to vector<8x1xf32>
    %cst_8 = arith.constant 3.200000e+01 : f32
    %15 = vector.broadcast %cst_8 : f32 to vector<8x1xf32>
    %16 = arith.divf %14, %15 : vector<8x1xf32>
    %17 = vector.broadcast %9 : vector<8x1xf32> to vector<8x32xf32>
    %18 = arith.subf %1, %17 : vector<8x32xf32>
    %cst_9 = arith.constant 9.99999974E-6 : f32
    %19 = vector.broadcast %cst_9 : f32 to vector<8x1xf32>
    %20 = arith.addf %16, %19 : vector<8x1xf32>
    %21 = math.rsqrt %20 : vector<8x1xf32>
    %22 = vector.broadcast %21 : vector<8x1xf32> to vector<8x32xf32>
    %23 = arith.mulf %18, %22 : vector<8x32xf32>
    %24 = vector.shape_cast %3 : vector<32xf32> to vector<1x32xf32>
    %25 = vector.broadcast %24 : vector<1x32xf32> to vector<8x32xf32>
    %26 = arith.mulf %23, %25 : vector<8x32xf32>
    %27 = vector.shape_cast %5 : vector<32xf32> to vector<1x32xf32>
    %28 = vector.broadcast %27 : vector<1x32xf32> to vector<8x32xf32>
    %29 = arith.addf %26, %28 : vector<8x32xf32>
    %c0_10 = arith.constant 0 : index
    %c0_11 = arith.constant 0 : index
    %30 = vector.load %arg4[%c0_10, %c0_11] : memref<96x32xbf16, #tpu.memory_space<vmem>>, vector<96x32xbf16>
    %31 = arith.truncf %29 : vector<8x32xf32> to vector<8x32xbf16>
    %cst_12 = arith.constant dense<0.000000e+00> : vector<96x8xf32>
    %32 = tpu.matmul %30, %31, %cst_12 {dimension_numbers = #tpu.dot_dimension_numbers<[1], [1], [0], [0], [0, 0, 1, 0], [], []>} : vector<96x32xbf16>, vector<8x32xbf16>, vector<96x8xf32> -> vector<96x8xf32>
    %c0_13 = arith.constant 0 : index
    %c0_14 = arith.constant 0 : index
    %33 = vector.load %arg5[%c0_13, %c0_14] : memref<96x1xf32, #tpu.memory_space<vmem>>, vector<96x1xf32>
    %34 = vector.broadcast %33 : vector<96x1xf32> to vector<96x8xf32>
    %35 = arith.addf %32, %34 : vector<96x8xf32>
    %36 = vector.extract_strided_slice %35 {offsets = [0, 0], sizes = [32, 8], strides = [1, 1]} : vector<96x8xf32> to vector<32x8xf32>
    %37 = vector.shape_cast %36 : vector<32x8xf32> to vector<4x8x8xf32>
    %38 = vector.extract_strided_slice %35 {offsets = [32, 0], sizes = [32, 8], strides = [1, 1]} : vector<96x8xf32> to vector<32x8xf32>
    %39 = vector.shape_cast %38 : vector<32x8xf32> to vector<4x8x8xf32>
    %40 = vector.extract_strided_slice %35 {offsets = [64, 0], sizes = [32, 8], strides = [1, 1]} : vector<96x8xf32> to vector<32x8xf32>
    %41 = vector.shape_cast %40 : vector<32x8xf32> to vector<4x8x8xf32>
    %42 = tpu.iota {dimensions = array<i32: 0>} : vector<8x8xi32>
    %43 = tpu.iota {dimensions = array<i32: 1>} : vector<8x8xi32>
    %44 = arith.cmpi sgt, %43, %42 : vector<8x8xi32>
    %cst_15 = arith.constant -1.000000e+30 : f32
    %cst_16 = arith.constant 0.000000e+00 : f32
    %45 = vector.broadcast %cst_15 : f32 to vector<8x8xf32>
    %46 = vector.broadcast %cst_16 : f32 to vector<8x8xf32>
    %47 = arith.select %44, %45, %46 : vector<8x8xi1>, vector<8x8xf32>
    %48 = arith.truncf %37 : vector<4x8x8xf32> to vector<4x8x8xbf16>
    %49 = arith.truncf %39 : vector<4x8x8xf32> to vector<4x8x8xbf16>
    %cst_17 = arith.constant dense<0.000000e+00> : vector<4x8x8xf32>
    %50 = tpu.matmul %48, %49, %cst_17 {dimension_numbers = #tpu.dot_dimension_numbers<[1], [1], [2], [2], [0, 0, 0, 2, 1, 2], [0], [0]>} : vector<4x8x8xbf16>, vector<4x8x8xbf16>, vector<4x8x8xf32> -> vector<4x8x8xf32>
    %51 = vector.shape_cast %47 : vector<8x8xf32> to vector<1x8x8xf32>
    %52 = vector.broadcast %51 : vector<1x8x8xf32> to vector<4x8x8xf32>
    %53 = arith.addf %50, %52 : vector<4x8x8xf32>
    %cst_18 = arith.constant dense<0xFF800000> : vector<4x8xf32>
    %54 = vector.multi_reduction <maximumf>, %53, %cst_18 [2] : vector<4x8x8xf32> to vector<4x8xf32>
    %55 = vector.shape_cast %54 : vector<4x8xf32> to vector<4x8x1xf32>
    %56 = vector.broadcast %55 : vector<4x8x1xf32> to vector<4x8x8xf32>
    %57 = arith.subf %53, %56 : vector<4x8x8xf32>
    %58 = math.exp %57 : vector<4x8x8xf32>
    %cst_19 = arith.constant dense<0.000000e+00> : vector<4x8xf32>
    %59 = vector.multi_reduction <add>, %58, %cst_19 [2] : vector<4x8x8xf32> to vector<4x8xf32>
    %60 = vector.shape_cast %59 : vector<4x8xf32> to vector<4x8x1xf32>
    %61 = tpu.reciprocal %60 {approx = true} : vector<4x8x1xf32> -> vector<4x8x1xf32>
    %62 = vector.broadcast %61 : vector<4x8x1xf32> to vector<4x8x8xf32>
    %63 = arith.mulf %58, %62 : vector<4x8x8xf32>
    %64 = arith.truncf %41 : vector<4x8x8xf32> to vector<4x8x8xbf16>
    %65 = arith.truncf %63 : vector<4x8x8xf32> to vector<4x8x8xbf16>
    %cst_20 = arith.constant dense<0.000000e+00> : vector<4x8x8xf32>
    %66 = tpu.matmul %64, %65, %cst_20 {dimension_numbers = #tpu.dot_dimension_numbers<[2], [2], [1], [1], [0, 0, 0, 1, 1, 1], [0], [0]>} : vector<4x8x8xbf16>, vector<4x8x8xbf16>, vector<4x8x8xf32> -> vector<4x8x8xf32>
    %67 = vector.shape_cast %66 : vector<4x8x8xf32> to vector<32x8xf32>
    %68 = arith.truncf %67 : vector<32x8xf32> to vector<32x8xbf16>
    %c0_21 = arith.constant 0 : index
    %c0_22 = arith.constant 0 : index
    %69 = vector.load %arg6[%c0_21, %c0_22] : memref<32x32xbf16, #tpu.memory_space<vmem>>, vector<32x32xbf16>
    %cst_23 = arith.constant dense<0.000000e+00> : vector<8x32xf32>
    %70 = tpu.matmul %68, %69, %cst_23 {dimension_numbers = #tpu.dot_dimension_numbers<[0], [0], [1], [1], [0, 1, 1, 1], [], []>} : vector<32x8xbf16>, vector<32x32xbf16>, vector<8x32xf32> -> vector<8x32xf32>
    %c0_24 = arith.constant 0 : index
    %c0_25 = arith.constant 0 : index
    %71 = vector.load %arg7[%c0_24, %c0_25] : memref<1x32xf32, #tpu.memory_space<vmem>>, vector<1x32xf32>
    %72 = vector.broadcast %71 : vector<1x32xf32> to vector<8x32xf32>
    %73 = arith.addf %70, %72 : vector<8x32xf32>
    %74 = arith.addf %1, %73 : vector<8x32xf32>
    %c0_26 = arith.constant 0 : index
    %c0_27 = arith.constant 0 : index
    %75 = vector.load %arg8[%c0_26, %c0_27] : memref<1x32xf32, #tpu.memory_space<vmem>>, vector<1x32xf32>
    %76 = vector.shape_cast %75 : vector<1x32xf32> to vector<32xf32>
    %c0_28 = arith.constant 0 : index
    %c0_29 = arith.constant 0 : index
    %77 = vector.load %arg9[%c0_28, %c0_29] : memref<1x32xf32, #tpu.memory_space<vmem>>, vector<1x32xf32>
    %78 = vector.shape_cast %77 : vector<1x32xf32> to vector<32xf32>
    %cst_30 = arith.constant dense<0.000000e+00> : vector<8xf32>
    %79 = vector.multi_reduction <add>, %74, %cst_30 [1] : vector<8x32xf32> to vector<8xf32>
    %80 = vector.shape_cast %79 : vector<8xf32> to vector<8x1xf32>
    %cst_31 = arith.constant 3.200000e+01 : f32
    %81 = vector.broadcast %cst_31 : f32 to vector<8x1xf32>
    %82 = arith.divf %80, %81 : vector<8x1xf32>
    %83 = vector.broadcast %82 : vector<8x1xf32> to vector<8x32xf32>
    %84 = arith.subf %74, %83 : vector<8x32xf32>
    %85 = arith.mulf %84, %84 : vector<8x32xf32>
    %cst_32 = arith.constant dense<0.000000e+00> : vector<8xf32>
    %86 = vector.multi_reduction <add>, %85, %cst_32 [1] : vector<8x32xf32> to vector<8xf32>
    %87 = vector.shape_cast %86 : vector<8xf32> to vector<8x1xf32>
    %cst_33 = arith.constant 3.200000e+01 : f32
    %88 = vector.broadcast %cst_33 : f32 to vector<8x1xf32>
    %89 = arith.divf %87, %88 : vector<8x1xf32>
    %90 = vector.broadcast %82 : vector<8x1xf32> to vector<8x32xf32>
    %91 = arith.subf %74, %90 : vector<8x32xf32>
    %cst_34 = arith.constant 9.99999974E-6 : f32
    %92 = vector.broadcast %cst_34 : f32 to vector<8x1xf32>
    %93 = arith.addf %89, %92 : vector<8x1xf32>
    %94 = math.rsqrt %93 : vector<8x1xf32>
    %95 = vector.broadcast %94 : vector<8x1xf32> to vector<8x32xf32>
    %96 = arith.mulf %91, %95 : vector<8x32xf32>
    %97 = vector.shape_cast %76 : vector<32xf32> to vector<1x32xf32>
    %98 = vector.broadcast %97 : vector<1x32xf32> to vector<8x32xf32>
    %99 = arith.mulf %96, %98 : vector<8x32xf32>
    %100 = vector.shape_cast %78 : vector<32xf32> to vector<1x32xf32>
    %101 = vector.broadcast %100 : vector<1x32xf32> to vector<8x32xf32>
    %102 = arith.addf %99, %101 : vector<8x32xf32>
    %103 = arith.truncf %102 : vector<8x32xf32> to vector<8x32xbf16>
    %c0_35 = arith.constant 0 : index
    %c0_36 = arith.constant 0 : index
    %104 = vector.load %arg10[%c0_35, %c0_36] : memref<32x128xbf16, #tpu.memory_space<vmem>>, vector<32x128xbf16>
    %cst_37 = arith.constant dense<0.000000e+00> : vector<8x128xf32>
    %105 = tpu.matmul %103, %104, %cst_37 {dimension_numbers = #tpu.dot_dimension_numbers<[1], [0], [0], [1], [0, 0, 1, 1], [], []>} : vector<8x32xbf16>, vector<32x128xbf16>, vector<8x128xf32> -> vector<8x128xf32>
    %c0_38 = arith.constant 0 : index
    %c0_39 = arith.constant 0 : index
    %106 = vector.load %arg11[%c0_38, %c0_39] : memref<1x128xf32, #tpu.memory_space<vmem>>, vector<1x128xf32>
    %107 = vector.broadcast %106 : vector<1x128xf32> to vector<8x128xf32>
    %108 = arith.addf %105, %107 : vector<8x128xf32>
    %cst_40 = arith.constant 5.000000e-01 : f32
    %109 = vector.broadcast %cst_40 : f32 to vector<8x128xf32>
    %110 = arith.mulf %109, %108 : vector<8x128xf32>
    %cst_41 = arith.constant 4.471500e-02 : f32
    %111 = vector.broadcast %cst_41 : f32 to vector<8x128xf32>
    %112 = arith.mulf %111, %108 : vector<8x128xf32>
    %113 = arith.mulf %112, %108 : vector<8x128xf32>
    %114 = arith.mulf %113, %108 : vector<8x128xf32>
    %115 = arith.addf %108, %114 : vector<8x128xf32>
    %cst_42 = arith.constant 0.797884583 : f32
    %116 = vector.broadcast %cst_42 : f32 to vector<8x128xf32>
    %117 = arith.mulf %116, %115 : vector<8x128xf32>
    %118 = math.tanh %117 : vector<8x128xf32>
    %cst_43 = arith.constant 1.000000e+00 : f32
    %119 = vector.broadcast %cst_43 : f32 to vector<8x128xf32>
    %120 = arith.addf %119, %118 : vector<8x128xf32>
    %121 = arith.mulf %110, %120 : vector<8x128xf32>
    %122 = arith.truncf %121 : vector<8x128xf32> to vector<8x128xbf16>
    %c0_44 = arith.constant 0 : index
    %c0_45 = arith.constant 0 : index
    %123 = vector.load %arg12[%c0_44, %c0_45] : memref<128x32xbf16, #tpu.memory_space<vmem>>, vector<128x32xbf16>
    %cst_46 = arith.constant dense<0.000000e+00> : vector<8x32xf32>
    %124 = tpu.matmul %122, %123, %cst_46 {dimension_numbers = #tpu.dot_dimension_numbers<[1], [0], [0], [1], [0, 0, 1, 1], [], []>} : vector<8x128xbf16>, vector<128x32xbf16>, vector<8x32xf32> -> vector<8x32xf32>
    %c0_47 = arith.constant 0 : index
    %c0_48 = arith.constant 0 : index
    %125 = vector.load %arg13[%c0_47, %c0_48] : memref<1x32xf32, #tpu.memory_space<vmem>>, vector<1x32xf32>
    %126 = vector.broadcast %125 : vector<1x32xf32> to vector<8x32xf32>
    %127 = arith.addf %124, %126 : vector<8x32xf32>
    %128 = arith.addf %74, %127 : vector<8x32xf32>
    %c0_49 = arith.constant 0 : index
    %c0_50 = arith.constant 0 : index
    %c0_51 = arith.constant 0 : index
    %129 = vector.load %arg14[%c0_49, %c0_50, %c0_51] : memref<1x8x32xf32, #tpu.memory_space<vmem>>, vector<1x8x32xf32>
    %130 = vector.shape_cast %129 : vector<1x8x32xf32> to vector<8x32xf32>
    %131 = vector.shape_cast %128 : vector<8x32xf32> to vector<1x8x32xf32>
    tpu.vector_store %arg14[%c0_49, %c0_50, %c0_51], %131 {strides = array<i32>} : memref<1x8x32xf32, #tpu.memory_space<vmem>>, vector<1x8x32xf32>,
    return
  }
  func.func @transform_0(%arg0: i32) -> (i32, i32, i32) {
    %c0_i32 = arith.constant 0 : i32
    %c0_i32_0 = arith.constant 0 : i32
    %c0_i32_1 = arith.constant 0 : i32
    return %arg0, %c0_i32, %c0_i32_0 : i32, i32, i32
  }
  func.func @transform_1(%arg0: i32) -> (i32, i32) {
    %c0_i32 = arith.constant 0 : i32
    %c0_i32_0 = arith.constant 0 : i32
    %c0_i32_1 = arith.constant 0 : i32
    return %c0_i32, %c0_i32_0 : i32, i32
  }
  func.func @transform_2(%arg0: i32) -> (i32, i32) {
    %c0_i32 = arith.constant 0 : i32
    %c0_i32_0 = arith.constant 0 : i32
    %c0_i32_1 = arith.constant 0 : i32
    return %c0_i32, %c0_i32_0 : i32, i32
  }
  func.func @transform_3(%arg0: i32) -> (i32, i32) {
    %c0_i32 = arith.constant 0 : i32
    %c0_i32_0 = arith.constant 0 : i32
    %c0_i32_1 = arith.constant 0 : i32
    return %c0_i32, %c0_i32_0 : i32, i32
  }
  func.func @transform_4(%arg0: i32) -> (i32, i32) {
    %c0_i32 = arith.constant 0 : i32
    %c0_i32_0 = arith.constant 0 : i32
    %c0_i32_1 = arith.constant 0 : i32
    return %c0_i32, %c0_i32_0 : i32, i32
  }
  func.func @transform_5(%arg0: i32) -> (i32, i32) {
    %c0_i32 = arith.constant 0 : i32
    %c0_i32_0 = arith.constant 0 : i32
    %c0_i32_1 = arith.constant 0 : i32
    return %c0_i32, %c0_i32_0 : i32, i32
  }
  func.func @transform_6(%arg0: i32) -> (i32, i32) {
    %c0_i32 = arith.constant 0 : i32
    %c0_i32_0 = arith.constant 0 : i32
    %c0_i32_1 = arith.constant 0 : i32
    return %c0_i32, %c0_i32_0 : i32, i32
  }
  func.func @transform_7(%arg0: i32) -> (i32, i32) {
    %c0_i32 = arith.constant 0 : i32
    %c0_i32_0 = arith.constant 0 : i32
    %c0_i32_1 = arith.constant 0 : i32
    return %c0_i32, %c0_i32_0 : i32, i32
  }
  func.func @transform_8(%arg0: i32) -> (i32, i32) {
    %c0_i32 = arith.constant 0 : i32
    %c0_i32_0 = arith.constant 0 : i32
    %c0_i32_1 = arith.constant 0 : i32
    return %c0_i32, %c0_i32_0 : i32, i32
  }
  func.func @transform_9(%arg0: i32) -> (i32, i32) {
    %c0_i32 = arith.constant 0 : i32
    %c0_i32_0 = arith.constant 0 : i32
    %c0_i32_1 = arith.constant 0 : i32
    return %c0_i32, %c0_i32_0 : i32, i32
  }
  func.func @transform_10(%arg0: i32) -> (i32, i32) {
    %c0_i32 = arith.constant 0 : i32
    %c0_i32_0 = arith.constant 0 : i32
    %c0_i32_1 = arith.constant 0 : i32
    return %c0_i32, %c0_i32_0 : i32, i32
  }
  func.func @transform_11(%arg0: i32) -> (i32, i32) {
    %c0_i32 = arith.constant 0 : i32
    %c0_i32_0 = arith.constant 0 : i32
    %c0_i32_1 = arith.constant 0 : i32
    return %c0_i32, %c0_i32_0 : i32, i32
  }
  func.func @transform_12(%arg0: i32) -> (i32, i32) {
    %c0_i32 = arith.constant 0 : i32
    %c0_i32_0 = arith.constant 0 : i32
    %c0_i32_1 = arith.constant 0 : i32
    return %c0_i32, %c0_i32_0 : i32, i32
  }
  func.func @transform_13(%arg0: i32) -> (i32, i32, i32) {
    %c0_i32 = arith.constant 0 : i32
    %c0_i32_0 = arith.constant 0 : i32
    %c0_i32_1 = arith.constant 0 : i32
    return %arg0, %c0_i32, %c0_i32_0 : i32, i32, i32
  }
}

</mosaic_0001>

<llo_original>
// kernel: tpu_custom_call.1
$region0: #{tpu_custom_call.1}
  #allocation0 [shape = 'u32[]', space=smem, size = 0x4, offset = 0x4, fixed_abs, tag = 'smem constant byte address 0x4 - core index']
  #allocation1 [shape = 'u32[144,128]{1,0:T(1,128)}', space=vmem, size = 0x12000, scoped, tag = 'internal scratch']
  %s0 = inlined_call_operand.vmem [shape: f32[2,8,32], index: 0, kind: input, shape index: {}]
  %s1 = inlined_call_operand.vmem [shape: f32[1,32], index: 1, kind: input, shape index: {}]
  %s2 = inlined_call_operand.vmem [shape: f32[1,32], index: 2, kind: input, shape index: {}]
  %s3 = inlined_call_operand.vmem [shape: bf16[96,32], index: 3, kind: input, shape index: {}]
  %s4 = inlined_call_operand.vmem [shape: f32[96,1], index: 4, kind: input, shape index: {}]
  %s5 = inlined_call_operand.vmem [shape: bf16[32,32], index: 5, kind: input, shape index: {}]
  %s6 = inlined_call_operand.vmem [shape: f32[1,32], index: 6, kind: input, shape index: {}]
  %s7 = inlined_call_operand.vmem [shape: f32[1,32], index: 7, kind: input, shape index: {}]
  %s8 = inlined_call_operand.vmem [shape: f32[1,32], index: 8, kind: input, shape index: {}]
  %s9 = inlined_call_operand.vmem [shape: bf16[32,128], index: 9, kind: input, shape index: {}]
  %s10 = inlined_call_operand.vmem [shape: f32[1,128], index: 10, kind: input, shape index: {}]
  %s11 = inlined_call_operand.vmem [shape: bf16[128,32], index: 11, kind: input, shape index: {}]
  %s12 = inlined_call_operand.vmem [shape: f32[1,32], index: 12, kind: input, shape index: {}]
  %s13 = inlined_call_operand.hbm [shape: f32[2,8,32], index: 13, kind: output, shape index: {}]
  %s14 = sld [smem:[#allocation0]]
  $region85: #{tpu_custom_call.1} parent=0
    _
  %s16 = ssub.s32 1, %s14
  %s17 = scalar_select 0, %s16, %s14
  $region1: #{tpu_custom_call.1} parent=0
    #allocation2 [shape = 'u8[8192]{0}', space=vmem, size = 0x2000, scoped, tag = 'output window, operand 0']
    #allocation3 [shape = 's32[2]{0}', space=sflag, size = 0x8, scoped, tag = 'scoped memory for tpu_custom_call.1']
    %18 = vsyncpa [#allocation3], 0
    %s19 = scalar_lea.sflag [#allocation3], 1
    %20 = vsyncpa %s19, 0
    loop: start=0, step=1, limit=4
    $region2: #{tpu_custom_call.1} parent=1 // loop_pre_header
      _
    $region3: #{tpu_custom_call.1} parent=1 // loop_header
      %s22 = sphi 0, %s26
      %p23 = scmp.ge.s32.totalorder %s22, 4
      %s32 = sphi 0, %s34
      %s35 = sphi 0, %s32
      %s36 = sphi 0, %s35
      %s52 = sphi 0, %s36
      %s56 = sphi 0, %s56
      %s58 = sphi 0, %s56
      %s59 = sphi 0, %s58
      %s73 = sphi 0, %s59
      %s77 = sphi 0, %s77
      %s79 = sphi 0, %s77
      %s80 = sphi 0, %s79
      %s94 = sphi 0, %s80
      %s98 = sphi 0, %s98
      %s100 = sphi 0, %s98
      %s101 = sphi 0, %s100
      %s115 = sphi 0, %s101
      %s119 = sphi 0, %s119
      %s121 = sphi 0, %s119
      %s122 = sphi 0, %s121
      %s136 = sphi 0, %s122
      %s140 = sphi 0, %s140
      %s142 = sphi 0, %s140
      %s143 = sphi 0, %s142
      %s157 = sphi 0, %s143
      %s161 = sphi 0, %s161
      %s163 = sphi 0, %s161
      %s164 = sphi 0, %s163
      %s178 = sphi 0, %s164
      %s182 = sphi 0, %s182
      %s184 = sphi 0, %s182
      %s185 = sphi 0, %s184
      %s199 = sphi 0, %s185
      %s203 = sphi 0, %s203
      %s205 = sphi 0, %s203
      %s206 = sphi 0, %s205
      %s220 = sphi 0, %s206
      %s224 = sphi 0, %s224
      %s226 = sphi 0, %s224
      %s227 = sphi 0, %s226
      %s241 = sphi 0, %s227
      %s245 = sphi 0, %s245
      %s247 = sphi 0, %s245
      %s248 = sphi 0, %s247
      %s262 = sphi 0, %s248
      %s266 = sphi 0, %s266
      %s268 = sphi 0, %s266
      %s269 = sphi 0, %s268
      %s283 = sphi 0, %s269
      %s287 = sphi 0, %s287
      %s289 = sphi 0, %s287
      %s290 = sphi 0, %s289
      %s304 = sphi 0, %s290
      %s310 = sphi 0, %s312
      %s313 = sphi 0, %s310
      %s314 = sphi 0, %s313
      %s330 = sphi 0, %s314
    $region4: #{tpu_custom_call.1} parent=1 // loop_header_branch
      %25 = sbr.rel (%p23) target = $region8
    $region5: #{tpu_custom_call.1} parent=1 // loop_body
      %s27 = ssub.s32 %s22, 1
      %s28 = ssub.s32 %s22, 2
      %s29 = sadd.s32 %s22, 1
      %s30 = ssub.s32 %s22, %s29
      %p31 = scmp.eq.s32.totalorder %s30, 0
      %s33 = sadd.s32 %s32, 1
      %s34 = scalar_select %p31, %s32, %s33
      %p37 = pneg %p31
      %p38 = scmp.eq.s32.totalorder %s22, 1
      %p39 = por %p37, %p38
      %p40 = scmp.ne.s32.totalorder %s32, %s35
      %p41 = scmp.eq.s32.totalorder %s22, 0
      %p42 = por %p40, %p41
      %p43 = scmp.ne.s32.totalorder %s32, %s35
      %p44 = scmp.eq.s32.totalorder %s27, 1
      %p45 = por %p43, %p44
      %p46 = scmp.ne.s32.totalorder %s35, %s36
      %p47 = scmp.eq.s32.totalorder %s27, 0
      %p48 = por %p46, %p47
      %p49 = scmp.ne.s32.totalorder %s35, %s36
      %p50 = scmp.eq.s32.totalorder %s28, 1
      %p51 = por %p49, %p50
      %p53 = scmp.ne.s32.totalorder %s36, %s52
      %p54 = scmp.eq.s32.totalorder %s28, 0
      %p55 = por %p53, %p54
      %s57 = sadd.s32 %s56, 1
      %p60 = scmp.eq.s32.totalorder %s22, 1
      %p61 = scmp.ne.s32.totalorder %s56, %s58
      %p62 = scmp.eq.s32.totalorder %s22, 0
      %p63 = por %p61, %p62
      %p64 = scmp.ne.s32.totalorder %s56, %s58
      %p65 = scmp.eq.s32.totalorder %s27, 1
      %p66 = por %p64, %p65
      %p67 = scmp.ne.s32.totalorder %s58, %s59
      %p68 = scmp.eq.s32.totalorder %s27, 0
      %p69 = por %p67, %p68
      %p70 = scmp.ne.s32.totalorder %s58, %s59
      %p71 = scmp.eq.s32.totalorder %s28, 1
      %p72 = por %p70, %p71
      %p74 = scmp.ne.s32.totalorder %s59, %s73
      %p75 = scmp.eq.s32.totalorder %s28, 0
      %p76 = por %p74, %p75
      %s78 = sadd.s32 %s77, 1
      %p81 = scmp.eq.s32.totalorder %s22, 1
      %p82 = scmp.ne.s32.totalorder %s77, %s79
      %p83 = scmp.eq.s32.totalorder %s22, 0
      %p84 = por %p82, %p83
      %p85 = scmp.ne.s32.totalorder %s77, %s79
      %p86 = scmp.eq.s32.totalorder %s27, 1
      %p87 = por %p85, %p86
      %p88 = scmp.ne.s32.totalorder %s79, %s80
      %p89 = scmp.eq.s32.totalorder %s27, 0
      %p90 = por %p88, %p89
      %p91 = scmp.ne.s32.totalorder %s79, %s80
      %p92 = scmp.eq.s32.totalorder %s28, 1
      %p93 = por %p91, %p92
      %p95 = scmp.ne.s32.totalorder %s80, %s94
      %p96 = scmp.eq.s32.totalorder %s28, 0
      %p97 = por %p95, %p96
      %s99 = sadd.s32 %s98, 1
      %p102 = scmp.eq.s32.totalorder %s22, 1
      %p103 = scmp.ne.s32.totalorder %s98, %s100
      %p104 = scmp.eq.s32.totalorder %s22, 0
      %p105 = por %p103, %p104
      %p106 = scmp.ne.s32.totalorder %s98, %s100
      %p107 = scmp.eq.s32.totalorder %s27, 1
      %p108 = por %p106, %p107
      %p109 = scmp.ne.s32.totalorder %s100, %s101
      %p110 = scmp.eq.s32.totalorder %s27, 0
      %p111 = por %p109, %p110
      %p112 = scmp.ne.s32.totalorder %s100, %s101
      %p113 = scmp.eq.s32.totalorder %s28, 1
      %p114 = por %p112, %p113
      %p116 = scmp.ne.s32.totalorder %s101, %s115
      %p117 = scmp.eq.s32.totalorder %s28, 0
      %p118 = por %p116, %p117
      %s120 = sadd.s32 %s119, 1
      %p123 = scmp.eq.s32.totalorder %s22, 1
      %p124 = scmp.ne.s32.totalorder %s119, %s121
      %p125 = scmp.eq.s32.totalorder %s22, 0
      %p126 = por %p124, %p125
      %p127 = scmp.ne.s32.totalorder %s119, %s121
      %p128 = scmp.eq.s32.totalorder %s27, 1
      %p129 = por %p127, %p128
      %p130 = scmp.ne.s32.totalorder %s121, %s122
      %p131 = scmp.eq.s32.totalorder %s27, 0
      %p132 = por %p130, %p131
      %p133 = scmp.ne.s32.totalorder %s121, %s122
      %p134 = scmp.eq.s32.totalorder %s28, 1
      %p135 = por %p133, %p134
      %p137 = scmp.ne.s32.totalorder %s122, %s136
      %p138 = scmp.eq.s32.totalorder %s28, 0
      %p139 = por %p137, %p138
      %s141 = sadd.s32 %s140, 1
      %p144 = scmp.eq.s32.totalorder %s22, 1
      %p145 = scmp.ne.s32.totalorder %s140, %s142
      %p146 = scmp.eq.s32.totalorder %s22, 0
      %p147 = por %p145, %p146
      %p148 = scmp.ne.s32.totalorder %s140, %s142
      %p149 = scmp.eq.s32.totalorder %s27, 1
      %p150 = por %p148, %p149
      %p151 = scmp.ne.s32.totalorder %s142, %s143
      %p152 = scmp.eq.s32.totalorder %s27, 0
      %p153 = por %p151, %p152
      %p154 = scmp.ne.s32.totalorder %s142, %s143
      %p155 = scmp.eq.s32.totalorder %s28, 1
      %p156 = por %p154, %p155
      %p158 = scmp.ne.s32.totalorder %s143, %s157
      %p159 = scmp.eq.s32.totalorder %s28, 0
      %p160 = por %p158, %p159
      %s162 = sadd.s32 %s161, 1
      %p165 = scmp.eq.s32.totalorder %s22, 1
      %p166 = scmp.ne.s32.totalorder %s161, %s163
      %p167 = scmp.eq.s32.totalorder %s22, 0
      %p168 = por %p166, %p167
      %p169 = scmp.ne.s32.totalorder %s161, %s163
      %p170 = scmp.eq.s32.totalorder %s27, 1
      %p171 = por %p169, %p170
      %p172 = scmp.ne.s32.totalorder %s163, %s164
      %p173 = scmp.eq.s32.totalorder %s27, 0
      %p174 = por %p172, %p173
      %p175 = scmp.ne.s32.totalorder %s163, %s164
      %p176 = scmp.eq.s32.totalorder %s28, 1
      %p177 = por %p175, %p176
      %p179 = scmp.ne.s32.totalorder %s164, %s178
      %p180 = scmp.eq.s32.totalorder %s28, 0
      %p181 = por %p179, %p180
      %s183 = sadd.s32 %s182, 1
      %p186 = scmp.eq.s32.totalorder %s22, 1
      %p187 = scmp.ne.s32.totalorder %s182, %s184
      %p188 = scmp.eq.s32.totalorder %s22, 0
      %p189 = por %p187, %p188
      %p190 = scmp.ne.s32.totalorder %s182, %s184
      %p191 = scmp.eq.s32.totalorder %s27, 1
      %p192 = por %p190, %p191
      %p193 = scmp.ne.s32.totalorder %s184, %s185
      %p194 = scmp.eq.s32.totalorder %s27, 0
      %p195 = por %p193, %p194
      %p196 = scmp.ne.s32.totalorder %s184, %s185
      %p197 = scmp.eq.s32.totalorder %s28, 1
      %p198 = por %p196, %p197
      %p200 = scmp.ne.s32.totalorder %s185, %s199
      %p201 = scmp.eq.s32.totalorder %s28, 0
      %p202 = por %p200, %p201
      %s204 = sadd.s32 %s203, 1
      %p207 = scmp.eq.s32.totalorder %s22, 1
      %p208 = scmp.ne.s32.totalorder %s203, %s205
      %p209 = scmp.eq.s32.totalorder %s22, 0
      %p210 = por %p208, %p209
      %p211 = scmp.ne.s32.totalorder %s203, %s205
      %p212 = scmp.eq.s32.totalorder %s27, 1
      %p213 = por %p211, %p212
      %p214 = scmp.ne.s32.totalorder %s205, %s206
      %p215 = scmp.eq.s32.totalorder %s27, 0
      %p216 = por %p214, %p215
      %p217 = scmp.ne.s32.totalorder %s205, %s206
      %p218 = scmp.eq.s32.totalorder %s28, 1
      %p219 = por %p217, %p218
      %p221 = scmp.ne.s32.totalorder %s206, %s220
      %p222 = scmp.eq.s32.totalorder %s28, 0
      %p223 = por %p221, %p222
      %s225 = sadd.s32 %s224, 1
      %p228 = scmp.eq.s32.totalorder %s22, 1
      %p229 = scmp.ne.s32.totalorder %s224, %s226
      %p230 = scmp.eq.s32.totalorder %s22, 0
      %p231 = por %p229, %p230
      %p232 = scmp.ne.s32.totalorder %s224, %s226
      %p233 = scmp.eq.s32.totalorder %s27, 1
      %p234 = por %p232, %p233
      %p235 = scmp.ne.s32.totalorder %s226, %s227
      %p236 = scmp.eq.s32.totalorder %s27, 0
      %p237 = por %p235, %p236
      %p238 = scmp.ne.s32.totalorder %s226, %s227
      %p239 = scmp.eq.s32.totalorder %s28, 1
      %p240 = por %p238, %p239
      %p242 = scmp.ne.s32.totalorder %s227, %s241
      %p243 = scmp.eq.s32.totalorder %s28, 0
      %p244 = por %p242, %p243
      %s246 = sadd.s32 %s245, 1
      %p249 = scmp.eq.s32.totalorder %s22, 1
      %p250 = scmp.ne.s32.totalorder %s245, %s247
      %p251 = scmp.eq.s32.totalorder %s22, 0
      %p252 = por %p250, %p251
      %p253 = scmp.ne.s32.totalorder %s245, %s247
      %p254 = scmp.eq.s32.totalorder %s27, 1
      %p255 = por %p253, %p254
      %p256 = scmp.ne.s32.totalorder %s247, %s248
      %p257 = scmp.eq.s32.totalorder %s27, 0
      %p258 = por %p256, %p257
      %p259 = scmp.ne.s32.totalorder %s247, %s248
      %p260 = scmp.eq.s32.totalorder %s28, 1
      %p261 = por %p259, %p260
      %p263 = scmp.ne.s32.totalorder %s248, %s262
      %p264 = scmp.eq.s32.totalorder %s28, 0
      %p265 = por %p263, %p264
      %s267 = sadd.s32 %s266, 1
      %p270 = scmp.eq.s32.totalorder %s22, 1
      %p271 = scmp.ne.s32.totalorder %s266, %s268
      %p272 = scmp.eq.s32.totalorder %s22, 0
      %p273 = por %p271, %p272
      %p274 = scmp.ne.s32.totalorder %s266, %s268
      %p275 = scmp.eq.s32.totalorder %s27, 1
      %p276 = por %p274, %p275
      %p277 = scmp.ne.s32.totalorder %s268, %s269
      %p278 = scmp.eq.s32.totalorder %s27, 0
      %p279 = por %p277, %p278
      %p280 = scmp.ne.s32.totalorder %s268, %s269
      %p281 = scmp.eq.s32.totalorder %s28, 1
      %p282 = por %p280, %p281
      %p284 = scmp.ne.s32.totalorder %s269, %s283
      %p285 = scmp.eq.s32.totalorder %s28, 0
      %p286 = por %p284, %p285
      %s288 = sadd.s32 %s287, 1
      %p291 = scmp.eq.s32.totalorder %s22, 1
      %p292 = scmp.ne.s32.totalorder %s287, %s289
      %p293 = scmp.eq.s32.totalorder %s22, 0
      %p294 = por %p292, %p293
      %p295 = scmp.ne.s32.totalorder %s287, %s289
      %p296 = scmp.eq.s32.totalorder %s27, 1
      %p297 = por %p295, %p296
      %p298 = scmp.ne.s32.totalorder %s289, %s290
      %p299 = scmp.eq.s32.totalorder %s27, 0
      %p300 = por %p298, %p299
      %p301 = scmp.ne.s32.totalorder %s289, %s290
      %p302 = scmp.eq.s32.totalorder %s28, 1
      %p303 = por %p301, %p302
      %p305 = scmp.ne.s32.totalorder %s290, %s304
      %p306 = scmp.eq.s32.totalorder %s28, 0
      %p307 = por %p305, %p306
      %s308 = ssub.s32 %s22, %s29
      %p309 = scmp.eq.s32.totalorder %s308, 0
      %s311 = sadd.s32 %s310, 1
      %s312 = scalar_select %p309, %s310, %s311
      %p315 = pneg %p309
      %p316 = scmp.eq.s32.totalorder %s22, 1
      %p317 = por %p315, %p316
      %p318 = scmp.ne.s32.totalorder %s310, %s313
      %p319 = scmp.eq.s32.totalorder %s22, 0
      %p320 = por %p318, %p319
      %p321 = scmp.ne.s32.totalorder %s310, %s313
      %p322 = scmp.eq.s32.totalorder %s27, 1
      %p323 = por %p321, %p322
      %p324 = scmp.ne.s32.totalorder %s313, %s314
      %p325 = scmp.eq.s32.totalorder %s27, 0
      %p326 = por %p324, %p325
      %p327 = scmp.ne.s32.totalorder %s313, %s314
      %p328 = scmp.eq.s32.totalorder %s28, 1
      %p329 = por %p327, %p328
      %p331 = scmp.ne.s32.totalorder %s314, %s330
      %p332 = scmp.eq.s32.totalorder %s28, 0
      %p333 = por %p331, %p332
      %p334 = scmp.le.s32.totalorder 1, %s22
      %p335 = scmp.lt.s32.totalorder %s22, 3
      %p336 = pnand %p334, %p335
      %p337 = pneg %p336
      // Predicated region
      $region9: #{tpu_custom_call.1} parent=5 // pred_check
        _
      $region10: #{tpu_custom_call.1} parent=5 // pred_check_branch
        %339 = sbr.rel (%p336) target = $region12
      $region11: #{tpu_custom_call.1} parent=5 // pred_region
        %s340 = ssub.s32 %s22, 1
        // Predicated region
        $region13: #{tpu_custom_call.1} parent=11 // pred_check
          %p341 = pneg %p69
        $region14: #{tpu_custom_call.1} parent=11 // pred_check_branch
          %343 = sbr.rel (%p341) target = $region16
        $region15: #{tpu_custom_call.1} parent=11 // pred_region
          _
        $region16: #{tpu_custom_call.1} parent=11 // pred_fallthru
          _
        // Predicated region
        $region17: #{tpu_custom_call.1} parent=11 // pred_check
          %p344 = pneg %p90
        $region18: #{tpu_custom_call.1} parent=11 // pred_check_branch
          %346 = sbr.rel (%p344) target = $region20
        $region19: #{tpu_custom_call.1} parent=11 // pred_region
          _
        $region20: #{tpu_custom_call.1} parent=11 // pred_fallthru
          _
        // Predicated region
        $region21: #{tpu_custom_call.1} parent=11 // pred_check
          %p347 = pneg %p111
        $region22: #{tpu_custom_call.1} parent=11 // pred_check_branch
          %349 = sbr.rel (%p347) target = $region24
        $region23: #{tpu_custom_call.1} parent=11 // pred_region
          _
        $region24: #{tpu_custom_call.1} parent=11 // pred_fallthru
          _
        // Predicated region
        $region25: #{tpu_custom_call.1} parent=11 // pred_check
          %p350 = pneg %p132
        $region26: #{tpu_custom_call.1} parent=11 // pred_check_branch
          %352 = sbr.rel (%p350) target = $region28
        $region27: #{tpu_custom_call.1} parent=11 // pred_region
          _
        $region28: #{tpu_custom_call.1} parent=11 // pred_fallthru
          _
        // Predicated region
        $region29: #{tpu_custom_call.1} parent=11 // pred_check
          %p353 = pneg %p153
        $region30: #{tpu_custom_call.1} parent=11 // pred_check_branch
          %355 = sbr.rel (%p353) target = $region32
        $region31: #{tpu_custom_call.1} parent=11 // pred_region
          _
        $region32: #{tpu_custom_call.1} parent=11 // pred_fallthru
          _
        // Predicated region
        $region33: #{tpu_custom_call.1} parent=11 // pred_check
          %p356 = pneg %p174
        $region34: #{tpu_custom_call.1} parent=11 // pred_check_branch
          %358 = sbr.rel (%p356) target = $region36
        $region35: #{tpu_custom_call.1} parent=11 // pred_region
          _
        $region36: #{tpu_custom_call.1} parent=11 // pred_fallthru
          _
        // Predicated region
        $region37: #{tpu_custom_call.1} parent=11 // pred_check
          %p359 = pneg %p195
        $region38: #{tpu_custom_call.1} parent=11 // pred_check_branch
          %361 = sbr.rel (%p359) target = $region40
        $region39: #{tpu_custom_call.1} parent=11 // pred_region
          _
        $region40: #{tpu_custom_call.1} parent=11 // pred_fallthru
          _
        // Predicated region
        $region41: #{tpu_custom_call.1} parent=11 // pred_check
          %p362 = pneg %p216
        $region42: #{tpu_custom_call.1} parent=11 // pred_check_branch
          %364 = sbr.rel (%p362) target = $region44
        $region43: #{tpu_custom_call.1} parent=11 // pred_region
          _
        $region44: #{tpu_custom_call.1} parent=11 // pred_fallthru
          _
        // Predicated region
        $region45: #{tpu_custom_call.1} parent=11 // pred_check
          %p365 = pneg %p237
        $region46: #{tpu_custom_call.1} parent=11 // pred_check_branch
          %367 = sbr.rel (%p365) target = $region48
        $region47: #{tpu_custom_call.1} parent=11 // pred_region
          _
        $region48: #{tpu_custom_call.1} parent=11 // pred_fallthru
          _
        // Predicated region
        $region49: #{tpu_custom_call.1} parent=11 // pred_check
          %p368 = pneg %p258
        $region50: #{tpu_custom_call.1} parent=11 // pred_check_branch
          %370 = sbr.rel (%p368) target = $region52
        $region51: #{tpu_custom_call.1} parent=11 // pred_region
          _
        $region52: #{tpu_custom_call.1} parent=11 // pred_fallthru
          _
        // Predicated region
        $region53: #{tpu_custom_call.1} parent=11 // pred_check
          %p371 = pneg %p279
        $region54: #{tpu_custom_call.1} parent=11 // pred_check_branch
          %373 = sbr.rel (%p371) target = $region56
        $region55: #{tpu_custom_call.1} parent=11 // pred_region
          _
        $region56: #{tpu_custom_call.1} parent=11 // pred_fallthru
          _
        // Predicated region
        $region57: #{tpu_custom_call.1} parent=11 // pred_check
          %p374 = pneg %p300
        $region58: #{tpu_custom_call.1} parent=11 // pred_check_branch
          %376 = sbr.rel (%p374) target = $region60
        $region59: #{tpu_custom_call.1} parent=11 // pred_region
          _
        $region60: #{tpu_custom_call.1} parent=11 // pred_fallthru
          _
      $region12: #{tpu_custom_call.1} parent=5 // pred_fallthru
        _
      %p377 = scmp.lt.s32.totalorder %s22, 2
      // Predicated region
      $region61: #{tpu_custom_call.1} parent=5 // pred_check
        %p378 = pneg %p377
      $region62: #{tpu_custom_call.1} parent=5 // pred_check_branch
        %380 = sbr.rel (%p378) target = $region64
      $region63: #{tpu_custom_call.1} parent=5 // pred_region
        // Predicated region
        $region65: #{tpu_custom_call.1} parent=63 // pred_check
          %p381 = pneg %p42
        $region66: #{tpu_custom_call.1} parent=63 // pred_check_branch
          %383 = sbr.rel (%p381) target = $region68
        $region67: #{tpu_custom_call.1} parent=63 // pred_region
          %p384 = scmp.lt.s32.totalorder %s22, 1
          %s385 = scalar_select %p384, %s22, 1
          %s386 = smul.addr %s385, 8
          %s387 = scalar_lea.vmem %s0, %s386
        $region68: #{tpu_custom_call.1} parent=63 // pred_fallthru
          _
      $region64: #{tpu_custom_call.1} parent=5 // pred_fallthru
        _
      %p388 = scmp.le.s32.totalorder 1, %s22
      %p389 = scmp.lt.s32.totalorder %s22, 3
      %p390 = pnand %p388, %p389
      %p391 = pneg %p390
      // Predicated region
      $region69: #{tpu_custom_call.1} parent=5 // pred_check
        _
      $region70: #{tpu_custom_call.1} parent=5 // pred_check_branch
        %393 = sbr.rel (%p390) target = $region72
      $region71: #{tpu_custom_call.1} parent=5 // pred_region
        %s394 = ssub.s32 %s22, 1
        %p395 = scmp.lt.s32.totalorder %s27, 1
        %s396 = scalar_select %p395, %s27, 1
        %s397 = smul.addr %s396, 8
        %s398 = scalar_lea.vmem %s0, %s397
        %p399 = pneg %p48
        %p400 = pneg %p45
        %p401 = pneg %p69
        %p402 = pneg %p66
        %p403 = pneg %p90
        %p404 = pneg %p87
        %p405 = pneg %p111
        %p406 = pneg %p108
        %p407 = pneg %p132
        %p408 = pneg %p129
        %p409 = pneg %p153
        %p410 = pneg %p150
        %p411 = pneg %p174
        %p412 = pneg %p171
        %p413 = pneg %p195
        %p414 = pneg %p192
        %p415 = pneg %p216
        %p416 = pneg %p213
        %p417 = pneg %p237
        %p418 = pneg %p234
        %p419 = pneg %p258
        %p420 = pneg %p255
        %p421 = pneg %p279
        %p422 = pneg %p276
        %p423 = pneg %p300
        %p424 = pneg %p297
        %p425 = pneg %p326
        %p426 = pneg %p323
        %s427 = sand.u32 %s313, 1
        %s428 = scalar_lea.sflag [#allocation3], %s427
        %s429 = sand.u32 %s313, 1
        %s430 = smul.addr %s429, 8
        %s431 = scalar_lea.vmem [#allocation2], %s430
        %p432 = scmp.lt.s32.totalorder %s27, 1
        %s433 = scalar_select %p432, %s27, 1
        %s434 = smul.addr %s433, 8
        %s435 = scalar_lea.vmem %s0, %s434
        %v437 = vld [vmem:[%s435] sm:$0xff]
        %v438 = vld [vmem:[%s1] sm:$0x1]
        %v439 = vld [vmem:[%s2] sm:$0x1]
        %vm440 = vcmask 261120
        %v441 = vsel %vm440, %v437, 0.0
        %442 = vadd.xlane.f32.xlu0 %v441
        %v443 = vpop.xlane.xlu0 %442
        %v444 = vrcp.pop 32.0
        %v445 = vmul.f32 %v443, %v444
        %v446 = vsub.f32 %v437, %v445
        %v447 = vmul.f32 %v446, %v446
        %v448 = vsel %vm440, %v447, 0.0
        %449 = vadd.xlane.f32.xlu0 %v448
        %v450 = vpop.xlane.xlu0 %449
        %v451 = vmul.f32 %v450, %v444
        %v452 = vadd.f32 %v451, 1e-05
        %v453 = vrsqrt.pop %v452
        %v454 = vmul.f32 %v446, %v453
        %v456 = vlaneseq
        %v457 = vshrl.u32 %v456, 7
        %v458 = vsub.s32 0, %v457
        %v459 = vrot.slane %v438, %v458
        %v461 = vmul.f32 %v454, %v459
        %v463 = vlaneseq
        %v464 = vshrl.u32 %v463, 7
        %v465 = vsub.s32 0, %v464
        %v466 = vrot.slane %v439, %v465
        %v468 = vadd.f32 %v461, %v466
        %v469 = vld [vmem:[%s3] sm:$0xf]
        %v470 = vld [vmem:[%s3 + $0x4] sm:$0xf]
        %v471 = vld [vmem:[%s3 + $0x8] sm:$0xf]
        %v472 = vld [vmem:[%s3 + $0xc] sm:$0xf]
        %v473 = vld [vmem:[%s3 + $0x10] sm:$0xf]
        %v474 = vld [vmem:[%s3 + $0x14] sm:$0xf]
        %v475 = vld [vmem:[%s3 + $0x18] sm:$0xf]
        %v476 = vld [vmem:[%s3 + $0x1c] sm:$0xf]
        %v477 = vld [vmem:[%s3 + $0x20] sm:$0xf]
        %v478 = vld [vmem:[%s3 + $0x24] sm:$0xf]
        %v479 = vld [vmem:[%s3 + $0x28] sm:$0xf]
        %v480 = vld [vmem:[%s3 + $0x2c] sm:$0xf]
        %v481 = vpack.c.bf16 %v468, %v468
        %v482 = vld [vmem:[%s4] sm:$0xff]
        %v483 = vld [vmem:[%s4 + $0x8] sm:$0xff]
        %v484 = vld [vmem:[%s4 + $0x10] sm:$0xff]
        %v485 = vld [vmem:[%s4 + $0x18] sm:$0xff]
        %v486 = vld [vmem:[%s4 + $0x20] sm:$0xff]
        %v487 = vld [vmem:[%s4 + $0x28] sm:$0xff]
        %v488 = vld [vmem:[%s4 + $0x30] sm:$0xff]
        %v489 = vld [vmem:[%s4 + $0x38] sm:$0xff]
        %v490 = vld [vmem:[%s4 + $0x40] sm:$0xff]
        %v491 = vld [vmem:[%s4 + $0x48] sm:$0xff]
        %v492 = vld [vmem:[%s4 + $0x50] sm:$0xff]
        %v493 = vld [vmem:[%s4 + $0x58] sm:$0xff]
        %495 = vset.pattern.permute.xlu0 0
        %496 = vperm.xlu0 %495, %v482
        %v497 = vpop.permute.xlu0 %496
        %500 = vset.pattern.permute.xlu0 0
        %501 = vperm.xlu0 %500, %v483
        %v502 = vpop.permute.xlu0 %501
        %505 = vset.pattern.permute.xlu0 0
        %506 = vperm.xlu0 %505, %v484
        %v507 = vpop.permute.xlu0 %506
        %510 = vset.pattern.permute.xlu0 0
        %511 = vperm.xlu0 %510, %v485
        %v512 = vpop.permute.xlu0 %511
        %515 = vset.pattern.permute.xlu0 0
        %516 = vperm.xlu0 %515, %v486
        %v517 = vpop.permute.xlu0 %516
        %520 = vset.pattern.permute.xlu0 0
        %521 = vperm.xlu0 %520, %v487
        %v522 = vpop.permute.xlu0 %521
        %525 = vset.pattern.permute.xlu0 0
        %526 = vperm.xlu0 %525, %v488
        %v527 = vpop.permute.xlu0 %526
        %530 = vset.pattern.permute.xlu0 0
        %531 = vperm.xlu0 %530, %v489
        %v532 = vpop.permute.xlu0 %531
        %535 = vset.pattern.permute.xlu0 0
        %536 = vperm.xlu0 %535, %v490
        %v537 = vpop.permute.xlu0 %536
        %540 = vset.pattern.permute.xlu0 0
        %541 = vperm.xlu0 %540, %v491
        %v542 = vpop.permute.xlu0 %541
        %545 = vset.pattern.permute.xlu0 0
        %546 = vperm.xlu0 %545, %v492
        %v547 = vpop.permute.xlu0 %546
        %550 = vset.pattern.permute.xlu0 0
        %551 = vperm.xlu0 %550, %v493
        %v552 = vpop.permute.xlu0 %551
        %v566 = vunpack.c.l.b16 %v469
        %v567 = vunpack.c.l.b16 %v470
        %v568 = vunpack.c.l.b16 %v471
        %v569 = vunpack.c.l.b16 %v472
        %v570 = vunpack.c.l.b16 %v473
        %v571 = vunpack.c.l.b16 %v474
        %v572 = vunpack.c.l.b16 %v475
        %v573 = vunpack.c.l.b16 %v476
        %v574 = vunpack.c.l.b16 %v477
        %v575 = vunpack.c.l.b16 %v478
        %v576 = vunpack.c.l.b16 %v479
        %v577 = vunpack.c.l.b16 %v480
        %v578 = vpack.c.b16 %v567, %v566
        %v579 = vpack.c.b16 %v569, %v568
        %v580 = vpack.c.b16 %v571, %v570
        %v581 = vpack.c.b16 %v573, %v572
        %v582 = vpack.c.b16 %v575, %v574
        %v583 = vpack.c.b16 %v577, %v576
        %v585 = vsel %vm440, %v578, 0
        %v588 = vsel %vm440, %v579, 0
        %v591 = vsel %vm440, %v580, 0
        %v594 = vsel %vm440, %v581, 0
        %v597 = vsel %vm440, %v582, 0
        %v600 = vsel %vm440, %v583, 0
        %v603 = vsel %vm440, %v481, 0
        %605 = vmatprep.subr.bf16.mxu0 0
        %606 = vmatpush1.bf16.xpose.msra.mxu0 %v603
        %607 = vmatprep.subr.bf16.mxu0 0
        %608 = vmatpush1.bf16.xpose.msra.mxu0 0
        %609 = vmatprep.subr.bf16.mxu0 0
        %610 = vmatpush1.bf16.xpose.msra.mxu0 0
        %611 = vmatprep.subr.bf16.mxu0 0
        %612 = vmatpush1.bf16.xpose.msra.mxu0 0
        %613 = vmatprep.subr.bf16.mxu0 0
        %614 = vmatpush1.bf16.xpose.msra.mxu0 0
        %615 = vmatprep.subr.bf16.mxu0 0
        %616 = vmatpush1.bf16.xpose.msra.mxu0 0
        %617 = vmatprep.subr.bf16.mxu0 0
        %618 = vmatpush1.bf16.xpose.msra.mxu0 0
        %619 = vmatprep.subr.bf16.mxu0 0
        %620 = vmatpush1.bf16.xpose.msra.mxu0 0
        %621 = vmatprep.subr.bf16.mxu0 0
        %622 = vmatpush1.bf16.xpose.msra.mxu0 0
        %623 = vmatprep.subr.bf16.mxu0 0
        %624 = vmatpush1.bf16.xpose.msra.mxu0 0
        %625 = vmatprep.subr.bf16.mxu0 0
        %626 = vmatpush1.bf16.xpose.msra.mxu0 0
        %627 = vmatprep.subr.bf16.mxu0 0
        %628 = vmatpush1.bf16.xpose.msra.mxu0 0
        %629 = vmatprep.subr.bf16.mxu0 0
        %630 = vmatpush1.bf16.xpose.msra.mxu0 0
        %631 = vmatprep.subr.bf16.mxu0 0
        %632 = vmatpush1.bf16.xpose.msra.mxu0 0
        %633 = vmatprep.subr.bf16.mxu0 0
        %634 = vmatpush1.bf16.xpose.msra.mxu0 0
        %635 = vmatprep.subr.bf16.mxu0 0
        %636 = vmatpush1.bf16.xpose.msra.mxu0 0
        %637 = vmatprep.mubr.bf16.mxu0 0
        %638 = vmatmul.mubr.bf16.gmra.mrb[0].mxu0 %v585
        %v639 = vpop.f32.mrb[0].mxu0
        %v640 = vadd.f32 %v497, %v639
        %v641 = vpop.f32.mrb[0].mxu0
        %v642 = vpop.f32.mrb[0].mxu0
        %v643 = vadd.f32 %v502, %v642
        %v644 = vpop.f32.mrb[0].mxu0
        %645 = vmatprep.mubr.bf16.mxu0 0
        %646 = vmatmul.mubr.bf16.gmra.mrb[0].mxu0 %v588
        %v647 = vpop.f32.mrb[0].mxu0
        %v648 = vadd.f32 %v507, %v647
        %v649 = vpop.f32.mrb[0].mxu0
        %v650 = vpop.f32.mrb[0].mxu0
        %v651 = vadd.f32 %v512, %v650
        %v652 = vpop.f32.mrb[0].mxu0
        %653 = vmatprep.mubr.bf16.mxu0 0
        %654 = vmatmul.mubr.bf16.gmra.mrb[0].mxu0 %v591
        %v655 = vpop.f32.mrb[0].mxu0
        %v656 = vadd.f32 %v517, %v655
        %v657 = vpop.f32.mrb[0].mxu0
        %v658 = vpop.f32.mrb[0].mxu0
        %v659 = vadd.f32 %v522, %v658
        %v660 = vpop.f32.mrb[0].mxu0
        %661 = vmatprep.mubr.bf16.mxu0 0
        %662 = vmatmul.mubr.bf16.gmra.mrb[0].mxu0 %v594
        %v663 = vpop.f32.mrb[0].mxu0
        %v664 = vadd.f32 %v527, %v663
        %v665 = vpop.f32.mrb[0].mxu0
        %v666 = vpop.f32.mrb[0].mxu0
        %v667 = vadd.f32 %v532, %v666
        %v668 = vpop.f32.mrb[0].mxu0
        %669 = vmatprep.mubr.bf16.mxu0 0
        %670 = vmatmul.mubr.bf16.gmra.mrb[0].mxu0 %v597
        %v671 = vpop.f32.mrb[0].mxu0
        %v672 = vadd.f32 %v537, %v671
        %v673 = vpop.f32.mrb[0].mxu0
        %v674 = vpop.f32.mrb[0].mxu0
        %v675 = vadd.f32 %v542, %v674
        %v676 = vpop.f32.mrb[0].mxu0
        %677 = vmatprep.mubr.bf16.mxu0 0
        %678 = vmatmul.mubr.bf16.gmra.mrb[0].mxu0 %v600
        %v679 = vpop.f32.mrb[0].mxu0
        %v680 = vadd.f32 %v547, %v679
        %v681 = vpop.f32.mrb[0].mxu0
        %v682 = vpop.f32.mrb[0].mxu0
        %v683 = vadd.f32 %v552, %v682
        %v684 = vpop.f32.mrb[0].mxu0
        %685 = vdwg.mxu0
        %v686 = vlaneseq
        %v687 = vshrl.u32 %v686, 7
        %v688 = vlaneseq
        %v689 = vand.u32 %v688, 127
        %vm690 = vcmp.gt.s32.totalorder %v689, %v687
        %v691 = vsel %vm690, -1e+30, 0.0
        %v692 = vpack.c.bf16 %v640, %v640
        %v693 = vpack.c.bf16 %v643, %v643
        %v694 = vpack.c.bf16 %v648, %v648
        %v695 = vpack.c.bf16 %v651, %v651
        %v696 = vpack.c.bf16 %v656, %v656
        %v697 = vpack.c.bf16 %v659, %v659
        %v698 = vpack.c.bf16 %v664, %v664
        %v699 = vpack.c.bf16 %v667, %v667
        %700 = vxpose.xlu0.c.b16.start [1/8] %v692, 128
        %701 = vxpose.xlu0.c.b16.cont [2/8] 0, 128
        %702 = vxpose.xlu0.c.b16.cont [3/8] 0, 128
        %703 = vxpose.xlu0.c.b16.cont [4/8] 0, 128
        %704 = vxpose.xlu0.c.b16.cont [5/8] 0, 128
        %705 = vxpose.xlu0.c.b16.cont [6/8] 0, 128
        %706 = vxpose.xlu0.c.b16.cont [7/8] 0, 128
        %707 = vxpose.xlu0.c.b16.end [8/8] 0, 128
        %v708 = vpop.trf.xlu0
        %v709 = vpop.trf.xlu0
        %v710 = vpop.trf.xlu0
        %v711 = vpop.trf.xlu0
        %v712 = vpop.trf.xlu0
        %v713 = vpop.trf.xlu0
        %v714 = vpop.trf.xlu0
        %v715 = vpop.trf.xlu0
        %vm716 = vcmask 64512
        %v718 = vsel %vm716, %v708, 0
        %vm720 = vcmask 1043456
        %v722 = vsel %vm720, %v696, 0
        %724 = vmatprep.subr.bf16.mxu0 0
        %725 = vmatpush1.bf16.msra.mxu0 %v722
        %726 = vmatprep.subr.bf16.mxu0 0
        %727 = vmatpush1.bf16.msra.mxu0 0
        %728 = vmatprep.subr.bf16.mxu0 0
        %729 = vmatpush1.bf16.msra.mxu0 0
        %730 = vmatprep.subr.bf16.mxu0 0
        %731 = vmatpush1.bf16.msra.mxu0 0
        %732 = vmatprep.subr.bf16.mxu0 0
        %733 = vmatpush1.bf16.msra.mxu0 0
        %734 = vmatprep.subr.bf16.mxu0 0
        %735 = vmatpush1.bf16.msra.mxu0 0
        %736 = vmatprep.subr.bf16.mxu0 0
        %737 = vmatpush1.bf16.msra.mxu0 0
        %738 = vmatprep.subr.bf16.mxu0 0
        %739 = vmatpush1.bf16.msra.mxu0 0
        %740 = vmatprep.subr.bf16.mxu0 0
        %741 = vmatpush1.bf16.msra.mxu0 0
        %742 = vmatprep.subr.bf16.mxu0 0
        %743 = vmatpush1.bf16.msra.mxu0 0
        %744 = vmatprep.subr.bf16.mxu0 0
        %745 = vmatpush1.bf16.msra.mxu0 0
        %746 = vmatprep.subr.bf16.mxu0 0
        %747 = vmatpush1.bf16.msra.mxu0 0
        %748 = vmatprep.subr.bf16.mxu0 0
        %749 = vmatpush1.bf16.msra.mxu0 0
        %750 = vmatprep.subr.bf16.mxu0 0
        %751 = vmatpush1.bf16.msra.mxu0 0
        %752 = vmatprep.subr.bf16.mxu0 0
        %753 = vmatpush1.bf16.msra.mxu0 0
        %754 = vmatprep.subr.bf16.mxu0 0
        %755 = vmatpush1.bf16.msra.mxu0 0
        %756 = vmatprep.mubr.bf16.mxu0 0
        %757 = vmatmul.mubr.bf16.gmra.mrb[0].mxu0 %v718
        %v758 = vpop.f32.mrb[0].mxu0
        %v759 = vadd.f32 %v691, %v758
        %v760 = vpop.f32.mrb[0].mxu0
        %v761 = vpop.f32.mrb[0].mxu0
        %v762 = vpop.f32.mrb[0].mxu0
        %763 = vdwg.mxu0
        %764 = vxpose.xlu0.c.b16.start [1/8] %v693, 128
        %765 = vxpose.xlu0.c.b16.cont [2/8] 0, 128
        %766 = vxpose.xlu0.c.b16.cont [3/8] 0, 128
        %767 = vxpose.xlu0.c.b16.cont [4/8] 0, 128
        %768 = vxpose.xlu0.c.b16.cont [5/8] 0, 128
        %769 = vxpose.xlu0.c.b16.cont [6/8] 0, 128
        %770 = vxpose.xlu0.c.b16.cont [7/8] 0, 128
        %771 = vxpose.xlu0.c.b16.end [8/8] 0, 128
        %v772 = vpop.trf.xlu0
        %v773 = vpop.trf.xlu0
        %v774 = vpop.trf.xlu0
        %v775 = vpop.trf.xlu0
        %v776 = vpop.trf.xlu0
        %v777 = vpop.trf.xlu0
        %v778 = vpop.trf.xlu0
        %v779 = vpop.trf.xlu0
        %v781 = vsel %vm716, %v772, 0
        %v784 = vsel %vm720, %v697, 0
        %786 = vmatprep.subr.bf16.mxu0 0
        %787 = vmatpush1.bf16.msra.mxu0 %v784
        %788 = vmatprep.subr.bf16.mxu0 0
        %789 = vmatpush1.bf16.msra.mxu0 0
        %790 = vmatprep.subr.bf16.mxu0 0
        %791 = vmatpush1.bf16.msra.mxu0 0
        %792 = vmatprep.subr.bf16.mxu0 0
        %793 = vmatpush1.bf16.msra.mxu0 0
        %794 = vmatprep.subr.bf16.mxu0 0
        %795 = vmatpush1.bf16.msra.mxu0 0
        %796 = vmatprep.subr.bf16.mxu0 0
        %797 = vmatpush1.bf16.msra.mxu0 0
        %798 = vmatprep.subr.bf16.mxu0 0
        %799 = vmatpush1.bf16.msra.mxu0 0
        %800 = vmatprep.subr.bf16.mxu0 0
        %801 = vmatpush1.bf16.msra.mxu0 0
        %802 = vmatprep.subr.bf16.mxu0 0
        %803 = vmatpush1.bf16.msra.mxu0 0
        %804 = vmatprep.subr.bf16.mxu0 0
        %805 = vmatpush1.bf16.msra.mxu0 0
        %806 = vmatprep.subr.bf16.mxu0 0
        %807 = vmatpush1.bf16.msra.mxu0 0
        %808 = vmatprep.subr.bf16.mxu0 0
        %809 = vmatpush1.bf16.msra.mxu0 0
        %810 = vmatprep.subr.bf16.mxu0 0
        %811 = vmatpush1.bf16.msra.mxu0 0
        %812 = vmatprep.subr.bf16.mxu0 0
        %813 = vmatpush1.bf16.msra.mxu0 0
        %814 = vmatprep.subr.bf16.mxu0 0
        %815 = vmatpush1.bf16.msra.mxu0 0
        %816 = vmatprep.subr.bf16.mxu0 0
        %817 = vmatpush1.bf16.msra.mxu0 0
        %818 = vmatprep.mubr.bf16.mxu0 0
        %819 = vmatmul.mubr.bf16.gmra.mrb[0].mxu0 %v781
        %v820 = vpop.f32.mrb[0].mxu0
        %v821 = vadd.f32 %v691, %v820
        %v822 = vpop.f32.mrb[0].mxu0
        %v823 = vpop.f32.mrb[0].mxu0
        %v824 = vpop.f32.mrb[0].mxu0
        %825 = vdwg.mxu0
        %826 = vxpose.xlu0.c.b16.start [1/8] %v694, 128
        %827 = vxpose.xlu0.c.b16.cont [2/8] 0, 128
        %828 = vxpose.xlu0.c.b16.cont [3/8] 0, 128
        %829 = vxpose.xlu0.c.b16.cont [4/8] 0, 128
        %830 = vxpose.xlu0.c.b16.cont [5/8] 0, 128
        %831 = vxpose.xlu0.c.b16.cont [6/8] 0, 128
        %832 = vxpose.xlu0.c.b16.cont [7/8] 0, 128
        %833 = vxpose.xlu0.c.b16.end [8/8] 0, 128
        %v834 = vpop.trf.xlu0
        %v835 = vpop.trf.xlu0
        %v836 = vpop.trf.xlu0
        %v837 = vpop.trf.xlu0
        %v838 = vpop.trf.xlu0
        %v839 = vpop.trf.xlu0
        %v840 = vpop.trf.xlu0
        %v841 = vpop.trf.xlu0
        %v843 = vsel %vm716, %v834, 0
        %v846 = vsel %vm720, %v698, 0
        %848 = vmatprep.subr.bf16.mxu0 0
        %849 = vmatpush1.bf16.msra.mxu0 %v846
        %850 = vmatprep.subr.bf16.mxu0 0
        %851 = vmatpush1.bf16.msra.mxu0 0
        %852 = vmatprep.subr.bf16.mxu0 0
        %853 = vmatpush1.bf16.msra.mxu0 0
        %854 = vmatprep.subr.bf16.mxu0 0
        %855 = vmatpush1.bf16.msra.mxu0 0
        %856 = vmatprep.subr.bf16.mxu0 0
        %857 = vmatpush1.bf16.msra.mxu0 0
        %858 = vmatprep.subr.bf16.mxu0 0
        %859 = vmatpush1.bf16.msra.mxu0 0
        %860 = vmatprep.subr.bf16.mxu0 0
        %861 = vmatpush1.bf16.msra.mxu0 0
        %862 = vmatprep.subr.bf16.mxu0 0
        %863 = vmatpush1.bf16.msra.mxu0 0
        %864 = vmatprep.subr.bf16.mxu0 0
        %865 = vmatpush1.bf16.msra.mxu0 0
        %866 = vmatprep.subr.bf16.mxu0 0
        %867 = vmatpush1.bf16.msra.mxu0 0
        %868 = vmatprep.subr.bf16.mxu0 0
        %869 = vmatpush1.bf16.msra.mxu0 0
        %870 = vmatprep.subr.bf16.mxu0 0
        %871 = vmatpush1.bf16.msra.mxu0 0
        %872 = vmatprep.subr.bf16.mxu0 0
        %873 = vmatpush1.bf16.msra.mxu0 0
        %874 = vmatprep.subr.bf16.mxu0 0
        %875 = vmatpush1.bf16.msra.mxu0 0
        %876 = vmatprep.subr.bf16.mxu0 0
        %877 = vmatpush1.bf16.msra.mxu0 0
        %878 = vmatprep.subr.bf16.mxu0 0
        %879 = vmatpush1.bf16.msra.mxu0 0
        %880 = vmatprep.mubr.bf16.mxu0 0
        %881 = vmatmul.mubr.bf16.gmra.mrb[0].mxu0 %v843
        %v882 = vpop.f32.mrb[0].mxu0
        %v883 = vadd.f32 %v691, %v882
        %v884 = vpop.f32.mrb[0].mxu0
        %v885 = vpop.f32.mrb[0].mxu0
        %v886 = vpop.f32.mrb[0].mxu0
        %887 = vdwg.mxu0
        %888 = vxpose.xlu0.c.b16.start [1/8] %v695, 128
        %889 = vxpose.xlu0.c.b16.cont [2/8] 0, 128
        %890 = vxpose.xlu0.c.b16.cont [3/8] 0, 128
        %891 = vxpose.xlu0.c.b16.cont [4/8] 0, 128
        %892 = vxpose.xlu0.c.b16.cont [5/8] 0, 128
        %893 = vxpose.xlu0.c.b16.cont [6/8] 0, 128
        %894 = vxpose.xlu0.c.b16.cont [7/8] 0, 128
        %895 = vxpose.xlu0.c.b16.end [8/8] 0, 128
        %v896 = vpop.trf.xlu0
        %v897 = vpop.trf.xlu0
        %v898 = vpop.trf.xlu0
        %v899 = vpop.trf.xlu0
        %v900 = vpop.trf.xlu0
        %v901 = vpop.trf.xlu0
        %v902 = vpop.trf.xlu0
        %v903 = vpop.trf.xlu0
        %v905 = vsel %vm716, %v896, 0
        %v908 = vsel %vm720, %v699, 0
        %910 = vmatprep.subr.bf16.mxu0 0
        %911 = vmatpush1.bf16.msra.mxu0 %v908
        %912 = vmatprep.subr.bf16.mxu0 0
        %913 = vmatpush1.bf16.msra.mxu0 0
        %914 = vmatprep.subr.bf16.mxu0 0
        %915 = vmatpush1.bf16.msra.mxu0 0
        %916 = vmatprep.subr.bf16.mxu0 0
        %917 = vmatpush1.bf16.msra.mxu0 0
        %918 = vmatprep.subr.bf16.mxu0 0
        %919 = vmatpush1.bf16.msra.mxu0 0
        %920 = vmatprep.subr.bf16.mxu0 0
        %921 = vmatpush1.bf16.msra.mxu0 0
        %922 = vmatprep.subr.bf16.mxu0 0
        %923 = vmatpush1.bf16.msra.mxu0 0
        %924 = vmatprep.subr.bf16.mxu0 0
        %925 = vmatpush1.bf16.msra.mxu0 0
        %926 = vmatprep.subr.bf16.mxu0 0
        %927 = vmatpush1.bf16.msra.mxu0 0
        %928 = vmatprep.subr.bf16.mxu0 0
        %929 = vmatpush1.bf16.msra.mxu0 0
        %930 = vmatprep.subr.bf16.mxu0 0
        %931 = vmatpush1.bf16.msra.mxu0 0
        %932 = vmatprep.subr.bf16.mxu0 0
        %933 = vmatpush1.bf16.msra.mxu0 0
        %934 = vmatprep.subr.bf16.mxu0 0
        %935 = vmatpush1.bf16.msra.mxu0 0
        %936 = vmatprep.subr.bf16.mxu0 0
        %937 = vmatpush1.bf16.msra.mxu0 0
        %938 = vmatprep.subr.bf16.mxu0 0
        %939 = vmatpush1.bf16.msra.mxu0 0
        %940 = vmatprep.subr.bf16.mxu0 0
        %941 = vmatpush1.bf16.msra.mxu0 0
        %942 = vmatprep.mubr.bf16.mxu0 0
        %943 = vmatmul.mubr.bf16.gmra.mrb[0].mxu0 %v905
        %v944 = vpop.f32.mrb[0].mxu0
        %v945 = vadd.f32 %v691, %v944
        %v946 = vpop.f32.mrb[0].mxu0
        %v947 = vpop.f32.mrb[0].mxu0
        %v948 = vpop.f32.mrb[0].mxu0
        %949 = vdwg.mxu0
        %v950 = vsel %vm716, %v759, -inf
        %951 = vmax.xlane.f32.xlu0 %v950
        %v952 = vpop.xlane.xlu0 %951
        %v953 = vsel %vm716, %v821, -inf
        %954 = vmax.xlane.f32.xlu0 %v953
        %v955 = vpop.xlane.xlu0 %954
        %v956 = vsel %vm716, %v883, -inf
        %957 = vmax.xlane.f32.xlu0 %v956
        %v958 = vpop.xlane.xlu0 %957
        %v959 = vsel %vm716, %v945, -inf
        %960 = vmax.xlane.f32.xlu0 %v959
        %v961 = vpop.xlane.xlu0 %960
        %v962 = vsub.f32 %v759, %v952
        %v963 = vsub.f32 %v821, %v955
        %v964 = vsub.f32 %v883, %v958
        %v965 = vsub.f32 %v945, %v961
        %v966 = vmul.f32 %v962, 1.442695
        %v967 = vpow.pop %v966
        %v968 = vmul.f32 %v963, 1.442695
        %v969 = vpow.pop %v968
        %v970 = vmul.f32 %v964, 1.442695
        %v971 = vpow.pop %v970
        %v972 = vmul.f32 %v965, 1.442695
        %v973 = vpow.pop %v972
        %v974 = vsel %vm716, %v967, 0.0
        %975 = vadd.xlane.f32.xlu0 %v974
        %v976 = vpop.xlane.xlu0 %975
        %v977 = vsel %vm716, %v969, 0.0
        %978 = vadd.xlane.f32.xlu0 %v977
        %v979 = vpop.xlane.xlu0 %978
        %v980 = vsel %vm716, %v971, 0.0
        %981 = vadd.xlane.f32.xlu0 %v980
        %v982 = vpop.xlane.xlu0 %981
        %v983 = vsel %vm716, %v973, 0.0
        %984 = vadd.xlane.f32.xlu0 %v983
        %v985 = vpop.xlane.xlu0 %984
        %v986 = vrcp.pop %v976
        %v987 = vrcp.pop %v979
        %v988 = vrcp.pop %v982
        %v989 = vrcp.pop %v985
        %v990 = vmul.f32 %v967, %v986
        %v991 = vmul.f32 %v969, %v987
        %v992 = vmul.f32 %v971, %v988
        %v993 = vmul.f32 %v973, %v989
        %v994 = vpack.c.bf16 %v672, %v672
        %v995 = vpack.c.bf16 %v675, %v675
        %v996 = vpack.c.bf16 %v680, %v680
        %v997 = vpack.c.bf16 %v683, %v683
        %v998 = vpack.c.bf16 %v990, %v990
        %v999 = vpack.c.bf16 %v991, %v991
        %v1000 = vpack.c.bf16 %v992, %v992
        %v1001 = vpack.c.bf16 %v993, %v993
        %v1003 = vsel %vm716, %v994, 0
        %v1006 = vsel %vm716, %v998, 0
        %1008 = vmatprep.subr.bf16.mxu0 0
        %1009 = vmatpush1.bf16.xpose.msra.mxu0 %v1006
        %1010 = vmatprep.subr.bf16.mxu0 0
        %1011 = vmatpush1.bf16.xpose.msra.mxu0 0
        %1012 = vmatprep.subr.bf16.mxu0 0
        %1013 = vmatpush1.bf16.xpose.msra.mxu0 0
        %1014 = vmatprep.subr.bf16.mxu0 0
        %1015 = vmatpush1.bf16.xpose.msra.mxu0 0
        %1016 = vmatprep.subr.bf16.mxu0 0
        %1017 = vmatpush1.bf16.xpose.msra.mxu0 0
        %1018 = vmatprep.subr.bf16.mxu0 0
        %1019 = vmatpush1.bf16.xpose.msra.mxu0 0
        %1020 = vmatprep.subr.bf16.mxu0 0
        %1021 = vmatpush1.bf16.xpose.msra.mxu0 0
        %1022 = vmatprep.subr.bf16.mxu0 0
        %1023 = vmatpush1.bf16.xpose.msra.mxu0 0
        %1024 = vmatprep.subr.bf16.mxu0 0
        %1025 = vmatpush1.bf16.xpose.msra.mxu0 0
        %1026 = vmatprep.subr.bf16.mxu0 0
        %1027 = vmatpush1.bf16.xpose.msra.mxu0 0
        %1028 = vmatprep.subr.bf16.mxu0 0
        %1029 = vmatpush1.bf16.xpose.msra.mxu0 0
        %1030 = vmatprep.subr.bf16.mxu0 0
        %1031 = vmatpush1.bf16.xpose.msra.mxu0 0
        %1032 = vmatprep.subr.bf16.mxu0 0
        %1033 = vmatpush1.bf16.xpose.msra.mxu0 0
        %1034 = vmatprep.subr.bf16.mxu0 0
        %1035 = vmatpush1.bf16.xpose.msra.mxu0 0
        %1036 = vmatprep.subr.bf16.mxu0 0
        %1037 = vmatpush1.bf16.xpose.msra.mxu0 0
        %1038 = vmatprep.subr.bf16.mxu0 0
        %1039 = vmatpush1.bf16.xpose.msra.mxu0 0
        %1040 = vmatprep.mubr.bf16.mxu0 0
        %1041 = vmatmul.mubr.bf16.gmra.mrb[0].mxu0 %v1003
        %v1042 = vpop.f32.mrb[0].mxu0
        %v1043 = vadd.f32 0.0, %v1042
        %v1044 = vpop.f32.mrb[0].mxu0
        %v1045 = vpop.f32.mrb[0].mxu0
        %v1046 = vpop.f32.mrb[0].mxu0
        %1047 = vdwg.mxu0
        %v1049 = vsel %vm716, %v995, 0
        %v1052 = vsel %vm716, %v999, 0
        %1054 = vmatprep.subr.bf16.mxu0 0
        %1055 = vmatpush1.bf16.xpose.msra.mxu0 %v1052
        %1056 = vmatprep.subr.bf16.mxu0 0
        %1057 = vmatpush1.bf16.xpose.msra.mxu0 0
        %1058 = vmatprep.subr.bf16.mxu0 0
        %1059 = vmatpush1.bf16.xpose.msra.mxu0 0
        %1060 = vmatprep.subr.bf16.mxu0 0
        %1061 = vmatpush1.bf16.xpose.msra.mxu0 0
        %1062 = vmatprep.subr.bf16.mxu0 0
        %1063 = vmatpush1.bf16.xpose.msra.mxu0 0
        %1064 = vmatprep.subr.bf16.mxu0 0
        %1065 = vmatpush1.bf16.xpose.msra.mxu0 0
        %1066 = vmatprep.subr.bf16.mxu0 0
        %1067 = vmatpush1.bf16.xpose.msra.mxu0 0
        %1068 = vmatprep.subr.bf16.mxu0 0
        %1069 = vmatpush1.bf16.xpose.msra.mxu0 0
        %1070 = vmatprep.subr.bf16.mxu0 0
        %1071 = vmatpush1.bf16.xpose.msra.mxu0 0
        %1072 = vmatprep.subr.bf16.mxu0 0
        %1073 = vmatpush1.bf16.xpose.msra.mxu0 0
        %1074 = vmatprep.subr.bf16.mxu0 0
        %1075 = vmatpush1.bf16.xpose.msra.mxu0 0
        %1076 = vmatprep.subr.bf16.mxu0 0
        %1077 = vmatpush1.bf16.xpose.msra.mxu0 0
        %1078 = vmatprep.subr.bf16.mxu0 0
        %1079 = vmatpush1.bf16.xpose.msra.mxu0 0
        %1080 = vmatprep.subr.bf16.mxu0 0
        %1081 = vmatpush1.bf16.xpose.msra.mxu0 0
        %1082 = vmatprep.subr.bf16.mxu0 0
        %1083 = vmatpush1.bf16.xpose.msra.mxu0 0
        %1084 = vmatprep.subr.bf16.mxu0 0
        %1085 = vmatpush1.bf16.xpose.msra.mxu0 0
        %1086 = vmatprep.mubr.bf16.mxu0 0
        %1087 = vmatmul.mubr.bf16.gmra.mrb[0].mxu0 %v1049
        %v1088 = vpop.f32.mrb[0].mxu0
        %v1089 = vadd.f32 0.0, %v1088
        %v1090 = vpop.f32.mrb[0].mxu0
        %v1091 = vpop.f32.mrb[0].mxu0
        %v1092 = vpop.f32.mrb[0].mxu0
        %1093 = vdwg.mxu0
        %v1095 = vsel %vm716, %v996, 0
        %v1098 = vsel %vm716, %v1000, 0
        %1100 = vmatprep.subr.bf16.mxu0 0
        %1101 = vmatpush1.bf16.xpose.msra.mxu0 %v1098
        %1102 = vmatprep.subr.bf16.mxu0 0
        %1103 = vmatpush1.bf16.xpose.msra.mxu0 0
        %1104 = vmatprep.subr.bf16.mxu0 0
        %1105 = vmatpush1.bf16.xpose.msra.mxu0 0
        %1106 = vmatprep.subr.bf16.mxu0 0
        %1107 = vmatpush1.bf16.xpose.msra.mxu0 0
        %1108 = vmatprep.subr.bf16.mxu0 0
        %1109 = vmatpush1.bf16.xpose.msra.mxu0 0
        %1110 = vmatprep.subr.bf16.mxu0 0
        %1111 = vmatpush1.bf16.xpose.msra.mxu0 0
        %1112 = vmatprep.subr.bf16.mxu0 0
        %1113 = vmatpush1.bf16.xpose.msra.mxu0 0
        %1114 = vmatprep.subr.bf16.mxu0 0
        %1115 = vmatpush1.bf16.xpose.msra.mxu0 0
        %1116 = vmatprep.subr.bf16.mxu0 0
        %1117 = vmatpush1.bf16.xpose.msra.mxu0 0
        %1118 = vmatprep.subr.bf16.mxu0 0
        %1119 = vmatpush1.bf16.xpose.msra.mxu0 0
        %1120 = vmatprep.subr.bf16.mxu0 0
        %1121 = vmatpush1.bf16.xpose.msra.mxu0 0
        %1122 = vmatprep.subr.bf16.mxu0 0
        %1123 = vmatpush1.bf16.xpose.msra.mxu0 0
        %1124 = vmatprep.subr.bf16.mxu0 0
        %1125 = vmatpush1.bf16.xpose.msra.mxu0 0
        %1126 = vmatprep.subr.bf16.mxu0 0
        %1127 = vmatpush1.bf16.xpose.msra.mxu0 0
        %1128 = vmatprep.subr.bf16.mxu0 0
        %1129 = vmatpush1.bf16.xpose.msra.mxu0 0
        %1130 = vmatprep.subr.bf16.mxu0 0
        %1131 = vmatpush1.bf16.xpose.msra.mxu0 0
        %1132 = vmatprep.mubr.bf16.mxu0 0
        %1133 = vmatmul.mubr.bf16.gmra.mrb[0].mxu0 %v1095
        %v1134 = vpop.f32.mrb[0].mxu0
        %v1135 = vadd.f32 0.0, %v1134
        %v1136 = vpop.f32.mrb[0].mxu0
        %v1137 = vpop.f32.mrb[0].mxu0
        %v1138 = vpop.f32.mrb[0].mxu0
        %1139 = vdwg.mxu0
        %v1141 = vsel %vm716, %v997, 0
        %v1144 = vsel %vm716, %v1001, 0
        %1146 = vmatprep.subr.bf16.mxu0 0
        %1147 = vmatpush1.bf16.xpose.msra.mxu0 %v1144
        %1148 = vmatprep.subr.bf16.mxu0 0
        %1149 = vmatpush1.bf16.xpose.msra.mxu0 0
        %1150 = vmatprep.subr.bf16.mxu0 0
        %1151 = vmatpush1.bf16.xpose.msra.mxu0 0
        %1152 = vmatprep.subr.bf16.mxu0 0
        %1153 = vmatpush1.bf16.xpose.msra.mxu0 0
        %1154 = vmatprep.subr.bf16.mxu0 0
        %1155 = vmatpush1.bf16.xpose.msra.mxu0 0
        %1156 = vmatprep.subr.bf16.mxu0 0
        %1157 = vmatpush1.bf16.xpose.msra.mxu0 0
        %1158 = vmatprep.subr.bf16.mxu0 0
        %1159 = vmatpush1.bf16.xpose.msra.mxu0 0
        %1160 = vmatprep.subr.bf16.mxu0 0
        %1161 = vmatpush1.bf16.xpose.msra.mxu0 0
        %1162 = vmatprep.subr.bf16.mxu0 0
        %1163 = vmatpush1.bf16.xpose.msra.mxu0 0
        %1164 = vmatprep.subr.bf16.mxu0 0
        %1165 = vmatpush1.bf16.xpose.msra.mxu0 0
        %1166 = vmatprep.subr.bf16.mxu0 0
        %1167 = vmatpush1.bf16.xpose.msra.mxu0 0
        %1168 = vmatprep.subr.bf16.mxu0 0
        %1169 = vmatpush1.bf16.xpose.msra.mxu0 0
        %1170 = vmatprep.subr.bf16.mxu0 0
        %1171 = vmatpush1.bf16.xpose.msra.mxu0 0
        %1172 = vmatprep.subr.bf16.mxu0 0
        %1173 = vmatpush1.bf16.xpose.msra.mxu0 0
        %1174 = vmatprep.subr.bf16.mxu0 0
        %1175 = vmatpush1.bf16.xpose.msra.mxu0 0
        %1176 = vmatprep.subr.bf16.mxu0 0
        %1177 = vmatpush1.bf16.xpose.msra.mxu0 0
        %1178 = vmatprep.mubr.bf16.mxu0 0
        %1179 = vmatmul.mubr.bf16.gmra.mrb[0].mxu0 %v1141
        %v1180 = vpop.f32.mrb[0].mxu0
        %v1181 = vadd.f32 0.0, %v1180
        %v1182 = vpop.f32.mrb[0].mxu0
        %v1183 = vpop.f32.mrb[0].mxu0
        %v1184 = vpop.f32.mrb[0].mxu0
        %1185 = vdwg.mxu0
        %v1186 = vpack.c.bf16 %v1089, %v1043
        %v1187 = vpack.c.bf16 %v1181, %v1135
        %v1188 = vld [vmem:[%s5] sm:$0xf]
        %v1189 = vld [vmem:[%s5 + $0x4] sm:$0xf]
        %v1190 = vld [vmem:[%s5 + $0x8] sm:$0xf]
        %v1191 = vld [vmem:[%s5 + $0xc] sm:$0xf]
        %v1192 = vld [vmem:[%s6] sm:$0x1]
        %v1194 = vlaneseq
        %v1195 = vshrl.u32 %v1194, 7
        %v1196 = vsub.s32 0, %v1195
        %v1197 = vrot.slane %v1192, %v1196
        %1199 = vxpose.xlu0.c.b16.start [1/8] %v1186, 128
        %1200 = vxpose.xlu0.c.b16.cont [2/8] %v1187, 128
        %1201 = vxpose.xlu0.c.b16.cont [3/8] 0, 128
        %1202 = vxpose.xlu0.c.b16.cont [4/8] 0, 128
        %1203 = vxpose.xlu0.c.b16.cont [5/8] 0, 128
        %1204 = vxpose.xlu0.c.b16.cont [6/8] 0, 128
        %1205 = vxpose.xlu0.c.b16.cont [7/8] 0, 128
        %1206 = vxpose.xlu0.c.b16.end [8/8] 0, 128
        %v1207 = vpop.trf.xlu0
        %v1208 = vpop.trf.xlu0
        %v1209 = vpop.trf.xlu0
        %v1210 = vpop.trf.xlu0
        %v1211 = vpop.trf.xlu0
        %v1212 = vpop.trf.xlu0
        %v1213 = vpop.trf.xlu0
        %v1214 = vpop.trf.xlu0
        %v1219 = vunpack.c.l.b16 %v1188
        %v1220 = vunpack.c.l.b16 %v1189
        %v1221 = vunpack.c.l.b16 %v1190
        %v1222 = vunpack.c.l.b16 %v1191
        %v1223 = vpack.c.b16 %v1220, %v1219
        %v1224 = vpack.c.b16 %v1222, %v1221
        %v1228 = vsel %vm440, %v1207, 0
        %1230 = vmatprep.subr.bf16.mxu0 0
        %1231 = vmatpush1.bf16.msra.mxu0 %v1223
        %1232 = vmatprep.subr.bf16.mxu0 0
        %1233 = vmatpush1.bf16.msra.mxu0 %v1224
        %1234 = vmatprep.subr.bf16.mxu0 0
        %1235 = vmatpush1.bf16.msra.mxu0 0
        %1236 = vmatprep.subr.bf16.mxu0 0
        %1237 = vmatpush1.bf16.msra.mxu0 0
        %1238 = vmatprep.subr.bf16.mxu0 0
        %1239 = vmatpush1.bf16.msra.mxu0 0
        %1240 = vmatprep.subr.bf16.mxu0 0
        %1241 = vmatpush1.bf16.msra.mxu0 0
        %1242 = vmatprep.subr.bf16.mxu0 0
        %1243 = vmatpush1.bf16.msra.mxu0 0
        %1244 = vmatprep.subr.bf16.mxu0 0
        %1245 = vmatpush1.bf16.msra.mxu0 0
        %1246 = vmatprep.subr.bf16.mxu0 0
        %1247 = vmatpush1.bf16.msra.mxu0 0
        %1248 = vmatprep.subr.bf16.mxu0 0
        %1249 = vmatpush1.bf16.msra.mxu0 0
        %1250 = vmatprep.subr.bf16.mxu0 0
        %1251 = vmatpush1.bf16.msra.mxu0 0
        %1252 = vmatprep.subr.bf16.mxu0 0
        %1253 = vmatpush1.bf16.msra.mxu0 0
        %1254 = vmatprep.subr.bf16.mxu0 0
        %1255 = vmatpush1.bf16.msra.mxu0 0
        %1256 = vmatprep.subr.bf16.mxu0 0
        %1257 = vmatpush1.bf16.msra.mxu0 0
        %1258 = vmatprep.subr.bf16.mxu0 0
        %1259 = vmatpush1.bf16.msra.mxu0 0
        %1260 = vmatprep.subr.bf16.mxu0 0
        %1261 = vmatpush1.bf16.msra.mxu0 0
        %1262 = vmatprep.mubr.bf16.mxu0 0
        %1263 = vmatmul.mubr.bf16.gmra.mrb[0].mxu0 %v1228
        %v1264 = vpop.f32.mrb[0].mxu0
        %v1265 = vadd.f32 %v1197, %v1264
        %v1266 = vpop.f32.mrb[0].mxu0
        %v1267 = vpop.f32.mrb[0].mxu0
        %v1268 = vpop.f32.mrb[0].mxu0
        %1269 = vdwg.mxu0
        %v1270 = vadd.f32 %v437, %v1265
        %v1271 = vld [vmem:[%s7] sm:$0x1]
        %v1272 = vld [vmem:[%s8] sm:$0x1]
        %v1273 = vsel %vm440, %v1270, 0.0
        %1274 = vadd.xlane.f32.xlu0 %v1273
        %v1275 = vpop.xlane.xlu0 %1274
        %v1276 = vmul.f32 %v1275, %v444
        %v1277 = vsub.f32 %v1270, %v1276
        %v1278 = vmul.f32 %v1277, %v1277
        %v1279 = vsel %vm440, %v1278, 0.0
        %1280 = vadd.xlane.f32.xlu0 %v1279
        %v1281 = vpop.xlane.xlu0 %1280
        %v1282 = vmul.f32 %v1281, %v444
        %v1283 = vadd.f32 %v1282, 1e-05
        %v1284 = vrsqrt.pop %v1283
        %v1285 = vmul.f32 %v1277, %v1284
        %v1287 = vlaneseq
        %v1288 = vshrl.u32 %v1287, 7
        %v1289 = vsub.s32 0, %v1288
        %v1290 = vrot.slane %v1271, %v1289
        %v1292 = vmul.f32 %v1285, %v1290
        %v1294 = vlaneseq
        %v1295 = vshrl.u32 %v1294, 7
        %v1296 = vsub.s32 0, %v1295
        %v1297 = vrot.slane %v1272, %v1296
        %v1299 = vadd.f32 %v1292, %v1297
        %v1300 = vpack.c.bf16 %v1299, %v1299
        %v1301 = vld [vmem:[%s9] sm:$0xf]
        %v1302 = vld [vmem:[%s9 + $0x4] sm:$0xf]
        %v1303 = vld [vmem:[%s9 + $0x8] sm:$0xf]
        %v1304 = vld [vmem:[%s9 + $0xc] sm:$0xf]
        %v1305 = vld [vmem:[%s10] sm:$0x1]
        %v1307 = vlaneseq
        %v1308 = vshrl.u32 %v1307, 7
        %v1309 = vsub.s32 0, %v1308
        %v1310 = vrot.slane %v1305, %v1309
        %v1316 = vunpack.c.l.b16 %v1301
        %v1317 = vunpack.c.l.b16 %v1302
        %v1318 = vunpack.c.l.b16 %v1303
        %v1319 = vunpack.c.l.b16 %v1304
        %v1320 = vpack.c.b16 %v1317, %v1316
        %v1321 = vpack.c.b16 %v1319, %v1318
        %v1325 = vsel %vm440, %v1300, 0
        %1327 = vmatprep.subr.bf16.mxu0 0
        %1328 = vmatpush1.bf16.msra.mxu0 %v1320
        %1329 = vmatprep.subr.bf16.mxu0 0
        %1330 = vmatpush1.bf16.msra.mxu0 %v1321
        %1331 = vmatprep.subr.bf16.mxu0 0
        %1332 = vmatpush1.bf16.msra.mxu0 0
        %1333 = vmatprep.subr.bf16.mxu0 0
        %1334 = vmatpush1.bf16.msra.mxu0 0
        %1335 = vmatprep.subr.bf16.mxu0 0
        %1336 = vmatpush1.bf16.msra.mxu0 0
        %1337 = vmatprep.subr.bf16.mxu0 0
        %1338 = vmatpush1.bf16.msra.mxu0 0
        %1339 = vmatprep.subr.bf16.mxu0 0
        %1340 = vmatpush1.bf16.msra.mxu0 0
        %1341 = vmatprep.subr.bf16.mxu0 0
        %1342 = vmatpush1.bf16.msra.mxu0 0
        %1343 = vmatprep.subr.bf16.mxu0 0
        %1344 = vmatpush1.bf16.msra.mxu0 0
        %1345 = vmatprep.subr.bf16.mxu0 0
        %1346 = vmatpush1.bf16.msra.mxu0 0
        %1347 = vmatprep.subr.bf16.mxu0 0
        %1348 = vmatpush1.bf16.msra.mxu0 0
        %1349 = vmatprep.subr.bf16.mxu0 0
        %1350 = vmatpush1.bf16.msra.mxu0 0
        %1351 = vmatprep.subr.bf16.mxu0 0
        %1352 = vmatpush1.bf16.msra.mxu0 0
        %1353 = vmatprep.subr.bf16.mxu0 0
        %1354 = vmatpush1.bf16.msra.mxu0 0
        %1355 = vmatprep.subr.bf16.mxu0 0
        %1356 = vmatpush1.bf16.msra.mxu0 0
        %1357 = vmatprep.subr.bf16.mxu0 0
        %1358 = vmatpush1.bf16.msra.mxu0 0
        %1359 = vmatprep.mubr.bf16.mxu0 0
        %1360 = vmatmul.mubr.bf16.gmra.mrb[0].mxu0 %v1325
        %v1361 = vpop.f32.mrb[0].mxu0
        %v1362 = vadd.f32 %v1310, %v1361
        %v1363 = vpop.f32.mrb[0].mxu0
        %v1364 = vpop.f32.mrb[0].mxu0
        %v1365 = vpop.f32.mrb[0].mxu0
        %1366 = vdwg.mxu0
        %v1367 = vmul.f32 %v1362, 0.5
        %v1368 = vmul.f32 %v1362, 0.044715
        %v1369 = vmul.f32 %v1368, %v1362
        %v1370 = vmul.f32 %v1369, %v1362
        %v1371 = vadd.f32 %v1362, %v1370
        %v1372 = vmul.f32 %v1371, 0.7978846
        %v1373 = vtanh.pop %v1372
        %v1374 = vadd.f32 %v1373, 1.0
        %v1375 = vmul.f32 %v1367, %v1374
        %v1376 = vpack.c.bf16 %v1375, %v1375
        %v1377 = vld [vmem:[%s11] sm:$0xf]
        %v1378 = vld [vmem:[%s11 + $0x4] sm:$0xf]
        %v1379 = vld [vmem:[%s11 + $0x8] sm:$0xf]
        %v1380 = vld [vmem:[%s11 + $0xc] sm:$0xf]
        %v1381 = vld [vmem:[%s11 + $0x10] sm:$0xf]
        %v1382 = vld [vmem:[%s11 + $0x14] sm:$0xf]
        %v1383 = vld [vmem:[%s11 + $0x18] sm:$0xf]
        %v1384 = vld [vmem:[%s11 + $0x1c] sm:$0xf]
        %v1385 = vld [vmem:[%s11 + $0x20] sm:$0xf]
        %v1386 = vld [vmem:[%s11 + $0x24] sm:$0xf]
        %v1387 = vld [vmem:[%s11 + $0x28] sm:$0xf]
        %v1388 = vld [vmem:[%s11 + $0x2c] sm:$0xf]
        %v1389 = vld [vmem:[%s11 + $0x30] sm:$0xf]
        %v1390 = vld [vmem:[%s11 + $0x34] sm:$0xf]
        %v1391 = vld [vmem:[%s11 + $0x38] sm:$0xf]
        %v1392 = vld [vmem:[%s11 + $0x3c] sm:$0xf]
        %v1393 = vld [vmem:[%s12] sm:$0x1]
        %v1395 = vlaneseq
        %v1396 = vshrl.u32 %v1395, 7
        %v1397 = vsub.s32 0, %v1396
        %v1398 = vrot.slane %v1393, %v1397
        %v1416 = vunpack.c.l.b16 %v1377
        %v1417 = vunpack.c.l.b16 %v1378
        %v1418 = vunpack.c.l.b16 %v1379
        %v1419 = vunpack.c.l.b16 %v1380
        %v1420 = vunpack.c.l.b16 %v1381
        %v1421 = vunpack.c.l.b16 %v1382
        %v1422 = vunpack.c.l.b16 %v1383
        %v1423 = vunpack.c.l.b16 %v1384
        %v1424 = vunpack.c.l.b16 %v1385
        %v1425 = vunpack.c.l.b16 %v1386
        %v1426 = vunpack.c.l.b16 %v1387
        %v1427 = vunpack.c.l.b16 %v1388
        %v1428 = vunpack.c.l.b16 %v1389
        %v1429 = vunpack.c.l.b16 %v1390
        %v1430 = vunpack.c.l.b16 %v1391
        %v1431 = vunpack.c.l.b16 %v1392
        %v1432 = vpack.c.b16 %v1417, %v1416
        %v1433 = vpack.c.b16 %v1419, %v1418
        %v1434 = vpack.c.b16 %v1421, %v1420
        %v1435 = vpack.c.b16 %v1423, %v1422
        %v1436 = vpack.c.b16 %v1425, %v1424
        %v1437 = vpack.c.b16 %v1427, %v1426
        %v1438 = vpack.c.b16 %v1429, %v1428
        %v1439 = vpack.c.b16 %v1431, %v1430
        %1448 = vmatprep.subr.bf16.mxu0 0
        %1449 = vmatpush1.bf16.msra.mxu0 %v1432
        %1450 = vmatprep.subr.bf16.mxu0 0
        %1451 = vmatpush1.bf16.msra.mxu0 %v1433
        %1452 = vmatprep.subr.bf16.mxu0 0
        %1453 = vmatpush1.bf16.msra.mxu0 %v1434
        %1454 = vmatprep.subr.bf16.mxu0 0
        %1455 = vmatpush1.bf16.msra.mxu0 %v1435
        %1456 = vmatprep.subr.bf16.mxu0 0
        %1457 = vmatpush1.bf16.msra.mxu0 %v1436
        %1458 = vmatprep.subr.bf16.mxu0 0
        %1459 = vmatpush1.bf16.msra.mxu0 %v1437
        %1460 = vmatprep.subr.bf16.mxu0 0
        %1461 = vmatpush1.bf16.msra.mxu0 %v1438
        %1462 = vmatprep.subr.bf16.mxu0 0
        %1463 = vmatpush1.bf16.msra.mxu0 %v1439
        %1464 = vmatprep.subr.bf16.mxu0 0
        %1465 = vmatpush1.bf16.msra.mxu0 0
        %1466 = vmatprep.subr.bf16.mxu0 0
        %1467 = vmatpush1.bf16.msra.mxu0 0
        %1468 = vmatprep.subr.bf16.mxu0 0
        %1469 = vmatpush1.bf16.msra.mxu0 0
        %1470 = vmatprep.subr.bf16.mxu0 0
        %1471 = vmatpush1.bf16.msra.mxu0 0
        %1472 = vmatprep.subr.bf16.mxu0 0
        %1473 = vmatpush1.bf16.msra.mxu0 0
        %1474 = vmatprep.subr.bf16.mxu0 0
        %1475 = vmatpush1.bf16.msra.mxu0 0
        %1476 = vmatprep.subr.bf16.mxu0 0
        %1477 = vmatpush1.bf16.msra.mxu0 0
        %1478 = vmatprep.subr.bf16.mxu0 0
        %1479 = vmatpush1.bf16.msra.mxu0 0
        %1480 = vmatprep.mubr.bf16.mxu0 0
        %1481 = vmatmul.mubr.bf16.gmra.mrb[0].mxu0 %v1376
        %v1482 = vpop.f32.mrb[0].mxu0
        %v1483 = vadd.f32 %v1398, %v1482
        %v1484 = vpop.f32.mrb[0].mxu0
        %v1485 = vpop.f32.mrb[0].mxu0
        %v1486 = vpop.f32.mrb[0].mxu0
        %1487 = vdwg.mxu0
        %v1488 = vadd.f32 %v1270, %v1483
        %1489 = vst.msk [vmem:[%s431] sm:$0xff] %vm440, %v1488
        %s1490 = sand.u32 %s313, 1
        %s1491 = scalar_lea.sflag [#allocation3], %s1490
        %s1492 = sand.u32 %s313, 1
        %s1493 = smul.addr %s1492, 8
        %s1494 = scalar_lea.vmem [#allocation2], %s1493
        // Predicated region
        $region73: #{tpu_custom_call.1} parent=71 // pred_check
          %p1495 = pneg %p323
        $region74: #{tpu_custom_call.1} parent=71 // pred_check_branch
          %1497 = sbr.rel (%p1495) target = $region76
        $region75: #{tpu_custom_call.1} parent=71 // pred_region
          %s1499 = ssub.s32 128, 128
          %1500 = vsyncadd %s1491, %s1499
          %s1501 = smul.addr %s27, 128
          %s1502 = scalar_lea.hbm %s13, %s1501
          %s1504 = sshll.u32 %s1494, 4
          %s1505 = int_to_ptr.vmem [resolvable:$true] %s1504
          %1507 = dma.vmem_to_hbm [thread:$0]  %s1505, 128, %s1502, %s1491
        $region76: #{tpu_custom_call.1} parent=71 // pred_fallthru
          _
      $region72: #{tpu_custom_call.1} parent=5 // pred_fallthru
        _
      %p1508 = scmp.le.s32.totalorder 2, %s22
      // Predicated region
      $region77: #{tpu_custom_call.1} parent=5 // pred_check
        %p1509 = pneg %p1508
      $region78: #{tpu_custom_call.1} parent=5 // pred_check_branch
        %1511 = sbr.rel (%p1509) target = $region80
      $region79: #{tpu_custom_call.1} parent=5 // pred_region
        %s1512 = ssub.s32 %s22, 2
        // Predicated region
        $region81: #{tpu_custom_call.1} parent=79 // pred_check
          %p1513 = pneg %p329
        $region82: #{tpu_custom_call.1} parent=79 // pred_check_branch
          %1515 = sbr.rel (%p1513) target = $region84
        $region83: #{tpu_custom_call.1} parent=79 // pred_region
          %s1516 = sand.u32 %s314, 1
          %s1517 = scalar_lea.sflag [#allocation3], %s1516
          %s1518 = sand.u32 %s314, 1
          %s1519 = smul.addr %s1518, 8
          %s1520 = scalar_lea.vmem [#allocation2], %s1519
          %1521 = dma.done %s1517, 128
        $region84: #{tpu_custom_call.1} parent=79 // pred_fallthru
          _
      $region80: #{tpu_custom_call.1} parent=5 // pred_fallthru
        _
    $region6: #{tpu_custom_call.1} parent=1 // loop_footer
      %s26 = sadd.s32 1, %s22
    $region7: #{tpu_custom_call.1} parent=1 // loop_footer_branch
      %21 = sbr.rel target = $region3
    $region8: #{tpu_custom_call.1} parent=1 // loop_exit
      _
    %1522 = vsyncpa [#allocation3], 1
    %s1523 = scalar_lea.sflag [#allocation3], 1
    %1524 = vsyncpa %s1523, 1

// kernel: tpu_custom_call.1
$region0: #{tpu_custom_call.1}
  #allocation0 [shape = 'u32[]', space=smem, size = 0x4, offset = 0x4, fixed_abs, tag = 'smem constant byte address 0x4 - core index']
  #allocation1 [shape = 'u32[144,128]{1,0:T(1,128)}', space=vmem, size = 0x12000, scoped, tag = 'internal scratch']
  %s0 = inlined_call_operand.vmem [shape: f32[2,8,32], index: 0, kind: input, shape index: {}]
  %s1 = inlined_call_operand.vmem [shape: f32[1,32], index: 1, kind: input, shape index: {}]
  %s2 = inlined_call_operand.vmem [shape: f32[1,32], index: 2, kind: input, shape index: {}]
  %s3 = inlined_call_operand.vmem [shape: bf16[96,32], index: 3, kind: input, shape index: {}]
  %s4 = inlined_call_operand.vmem [shape: f32[96,1], index: 4, kind: input, shape index: {}]
  %s5 = inlined_call_operand.vmem [shape: bf16[32,32], index: 5, kind: input, shape index: {}]
  %s6 = inlined_call_operand.vmem [shape: f32[1,32], index: 6, kind: input, shape index: {}]
  %s7 = inlined_call_operand.vmem [shape: f32[1,32], index: 7, kind: input, shape index: {}]
  %s8 = inlined_call_operand.vmem [shape: f32[1,32], index: 8, kind: input, shape index: {}]
  %s9 = inlined_call_operand.vmem [shape: bf16[32,128], index: 9, kind: input, shape index: {}]
  %s10 = inlined_call_operand.vmem [shape: f32[1,128], index: 10, kind: input, shape index: {}]
  %s11 = inlined_call_operand.vmem [shape: bf16[128,32], index: 11, kind: input, shape index: {}]
  %s12 = inlined_call_operand.vmem [shape: f32[1,32], index: 12, kind: input, shape index: {}]
  %s13 = inlined_call_operand.hbm [shape: f32[2,8,32], index: 13, kind: output, shape index: {}]
  %s14 = sld [smem:[#allocation0]]
  $region85: #{tpu_custom_call.1} parent=0
    _
  %s16 = ssub.s32 1, %s14
  %s17 = scalar_select 0, %s16, %s14
  $region1: #{tpu_custom_call.1} parent=0
    #allocation2 [shape = 'u8[8192]{0}', space=vmem, size = 0x2000, scoped, tag = 'output window, operand 0']
    #allocation3 [shape = 's32[2]{0}', space=sflag, size = 0x8, scoped, tag = 'scoped memory for tpu_custom_call.1']
    %18 = vsyncpa [#allocation3], 0
    %s19 = scalar_lea.sflag [#allocation3], 1
    %20 = vsyncpa %s19, 0
    loop: start=0, step=1, limit=4
    $region2: #{tpu_custom_call.1} parent=1 // loop_pre_header
      _
    $region3: #{tpu_custom_call.1} parent=1 // loop_header
      %s22 = sphi 0, %s26
      %p23 = scmp.ge.s32.totalorder %s22, 4
      %s32 = sphi 0, %s34
      %s35 = sphi 0, %s32
      %s36 = sphi 0, %s35
      %s52 = sphi 0, %s36
      %s56 = sphi 0, %s56
      %s58 = sphi 0, %s56
      %s59 = sphi 0, %s58
      %s73 = sphi 0, %s59
      %s77 = sphi 0, %s77
      %s79 = sphi 0, %s77
      %s80 = sphi 0, %s79
      %s94 = sphi 0, %s80
      %s98 = sphi 0, %s98
      %s100 = sphi 0, %s98
      %s101 = sphi 0, %s100
      %s115 = sphi 0, %s101
      %s119 = sphi 0, %s119
      %s121 = sphi 0, %s119
      %s122 = sphi 0, %s121
      %s136 = sphi 0, %s122
      %s140 = sphi 0, %s140
      %s142 = sphi 0, %s140
      %s143 = sphi 0, %s142
      %s157 = sphi 0, %s143
      %s161 = sphi 0, %s161
      %s163 = sphi 0, %s161
      %s164 = sphi 0, %s163
      %s178 = sphi 0, %s164
      %s182 = sphi 0, %s182
      %s184 = sphi 0, %s182
      %s185 = sphi 0, %s184
      %s199 = sphi 0, %s185
      %s203 = sphi 0, %s203
      %s205 = sphi 0, %s203
      %s206 = sphi 0, %s205
      %s220 = sphi 0, %s206
      %s224 = sphi 0, %s224
      %s226 = sphi 0, %s224
      %s227 = sphi 0, %s226
      %s241 = sphi 0, %s227
      %s245 = sphi 0, %s245
      %s247 = sphi 0, %s245
      %s248 = sphi 0, %s247
      %s262 = sphi 0, %s248
      %s266 = sphi 0, %s266
      %s268 = sphi 0, %s266
      %s269 = sphi 0, %s268
      %s283 = sphi 0, %s269
      %s287 = sphi 0, %s287
      %s289 = sphi 0, %s287
      %s290 = sphi 0, %s289
      %s304 = sphi 0, %s290
      %s310 = sphi 0, %s312
      %s313 = sphi 0, %s310
      %s314 = sphi 0, %s313
      %s330 = sphi 0, %s314
    $region4: #{tpu_custom_call.1} parent=1 // loop_header_branch
      %25 = sbr.rel (%p23) target = $region8
    $region5: #{tpu_custom_call.1} parent=1 // loop_body
      %s27 = ssub.s32 %s22, 1
      %s28 = ssub.s32 %s22, 2
      %s29 = sadd.s32 %s22, 1
      %s30 = ssub.s32 %s22, %s29
      %p31 = scmp.eq.s32.totalorder %s30, 0
      %s33 = sadd.s32 %s32, 1
      %s34 = scalar_select %p31, %s32, %s33
      %p37 = pneg %p31
      %p38 = scmp.eq.s32.totalorder %s22, 1
      %p39 = por %p37, %p38
      %p40 = scmp.ne.s32.totalorder %s32, %s35
      %p41 = scmp.eq.s32.totalorder %s22, 0
      %p42 = por %p40, %p41
      %p43 = scmp.ne.s32.totalorder %s32, %s35
      %p44 = scmp.eq.s32.totalorder %s27, 1
      %p45 = por %p43, %p44
      %p46 = scmp.ne.s32.totalorder %s35, %s36
      %p47 = scmp.eq.s32.totalorder %s27, 0
      %p48 = por %p46, %p47
      %p49 = scmp.ne.s32.totalorder %s35, %s36
      %p50 = scmp.eq.s32.totalorder %s28, 1
      %p51 = por %p49, %p50
      %p53 = scmp.ne.s32.totalorder %s36, %s52
      %p54 = scmp.eq.s32.totalorder %s28, 0
      %p55 = por %p53, %p54
      %s57 = sadd.s32 %s56, 1
      %p60 = scmp.eq.s32.totalorder %s22, 1
      %p61 = scmp.ne.s32.totalorder %s56, %s58
      %p62 = scmp.eq.s32.totalorder %s22, 0
      %p63 = por %p61, %p62
      %p64 = scmp.ne.s32.totalorder %s56, %s58
      %p65 = scmp.eq.s32.totalorder %s27, 1
      %p66 = por %p64, %p65
      %p67 = scmp.ne.s32.totalorder %s58, %s59
      %p68 = scmp.eq.s32.totalorder %s27, 0
      %p69 = por %p67, %p68
      %p70 = scmp.ne.s32.totalorder %s58, %s59
      %p71 = scmp.eq.s32.totalorder %s28, 1
      %p72 = por %p70, %p71
      %p74 = scmp.ne.s32.totalorder %s59, %s73
      %p75 = scmp.eq.s32.totalorder %s28, 0
      %p76 = por %p74, %p75
      %s78 = sadd.s32 %s77, 1
      %p81 = scmp.eq.s32.totalorder %s22, 1
      %p82 = scmp.ne.s32.totalorder %s77, %s79
      %p83 = scmp.eq.s32.totalorder %s22, 0
      %p84 = por %p82, %p83
      %p85 = scmp.ne.s32.totalorder %s77, %s79
      %p86 = scmp.eq.s32.totalorder %s27, 1
      %p87 = por %p85, %p86
      %p88 = scmp.ne.s32.totalorder %s79, %s80
      %p89 = scmp.eq.s32.totalorder %s27, 0
      %p90 = por %p88, %p89
      %p91 = scmp.ne.s32.totalorder %s79, %s80
      %p92 = scmp.eq.s32.totalorder %s28, 1
      %p93 = por %p91, %p92
      %p95 = scmp.ne.s32.totalorder %s80, %s94
      %p96 = scmp.eq.s32.totalorder %s28, 0
      %p97 = por %p95, %p96
      %s99 = sadd.s32 %s98, 1
      %p102 = scmp.eq.s32.totalorder %s22, 1
      %p103 = scmp.ne.s32.totalorder %s98, %s100
      %p104 = scmp.eq.s32.totalorder %s22, 0
      %p105 = por %p103, %p104
      %p106 = scmp.ne.s32.totalorder %s98, %s100
      %p107 = scmp.eq.s32.totalorder %s27, 1
      %p108 = por %p106, %p107
      %p109 = scmp.ne.s32.totalorder %s100, %s101
      %p110 = scmp.eq.s32.totalorder %s27, 0
      %p111 = por %p109, %p110
      %p112 = scmp.ne.s32.totalorder %s100, %s101
      %p113 = scmp.eq.s32.totalorder %s28, 1
      %p114 = por %p112, %p113
      %p116 = scmp.ne.s32.totalorder %s101, %s115
      %p117 = scmp.eq.s32.totalorder %s28, 0
      %p118 = por %p116, %p117
      %s120 = sadd.s32 %s119, 1
      %p123 = scmp.eq.s32.totalorder %s22, 1
      %p124 = scmp.ne.s32.totalorder %s119, %s121
      %p125 = scmp.eq.s32.totalorder %s22, 0
      %p126 = por %p124, %p125
      %p127 = scmp.ne.s32.totalorder %s119, %s121
      %p128 = scmp.eq.s32.totalorder %s27, 1
      %p129 = por %p127, %p128
      %p130 = scmp.ne.s32.totalorder %s121, %s122
      %p131 = scmp.eq.s32.totalorder %s27, 0
      %p132 = por %p130, %p131
      %p133 = scmp.ne.s32.totalorder %s121, %s122
      %p134 = scmp.eq.s32.totalorder %s28, 1
      %p135 = por %p133, %p134
      %p137 = scmp.ne.s32.totalorder %s122, %s136
      %p138 = scmp.eq.s32.totalorder %s28, 0
      %p139 = por %p137, %p138
      %s141 = sadd.s32 %s140, 1
      %p144 = scmp.eq.s32.totalorder %s22, 1
      %p145 = scmp.ne.s32.totalorder %s140, %s142
      %p146 = scmp.eq.s32.totalorder %s22, 0
      %p147 = por %p145, %p146
      %p148 = scmp.ne.s32.totalorder %s140, %s142
      %p149 = scmp.eq.s32.totalorder %s27, 1
      %p150 = por %p148, %p149
      %p151 = scmp.ne.s32.totalorder %s142, %s143
      %p152 = scmp.eq.s32.totalorder %s27, 0
      %p153 = por %p151, %p152
      %p154 = scmp.ne.s32.totalorder %s142, %s143
      %p155 = scmp.eq.s32.totalorder %s28, 1
      %p156 = por %p154, %p155
      %p158 = scmp.ne.s32.totalorder %s143, %s157
      %p159 = scmp.eq.s32.totalorder %s28, 0
      %p160 = por %p158, %p159
      %s162 = sadd.s32 %s161, 1
      %p165 = scmp.eq.s32.totalorder %s22, 1
      %p166 = scmp.ne.s32.totalorder %s161, %s163
      %p167 = scmp.eq.s32.totalorder %s22, 0
      %p168 = por %p166, %p167
      %p169 = scmp.ne.s32.totalorder %s161, %s163
      %p170 = scmp.eq.s32.totalorder %s27, 1
      %p171 = por %p169, %p170
      %p172 = scmp.ne.s32.totalorder %s163, %s164
      %p173 = scmp.eq.s32.totalorder %s27, 0
      %p174 = por %p172, %p173
      %p175 = scmp.ne.s32.totalorder %s163, %s164
      %p176 = scmp.eq.s32.totalorder %s28, 1
      %p177 = por %p175, %p176
      %p179 = scmp.ne.s32.totalorder %s164, %s178
      %p180 = scmp.eq.s32.totalorder %s28, 0
      %p181 = por %p179, %p180
      %s183 = sadd.s32 %s182, 1
      %p186 = scmp.eq.s32.totalorder %s22, 1
      %p187 = scmp.ne.s32.totalorder %s182, %s184
      %p188 = scmp.eq.s32.totalorder %s22, 0
      %p189 = por %p187, %p188
      %p190 = scmp.ne.s32.totalorder %s182, %s184
      %p191 = scmp.eq.s32.totalorder %s27, 1
      %p192 = por %p190, %p191
      %p193 = scmp.ne.s32.totalorder %s184, %s185
      %p194 = scmp.eq.s32.totalorder %s27, 0
      %p195 = por %p193, %p194
      %p196 = scmp.ne.s32.totalorder %s184, %s185
      %p197 = scmp.eq.s32.totalorder %s28, 1
      %p198 = por %p196, %p197
      %p200 = scmp.ne.s32.totalorder %s185, %s199
      %p201 = scmp.eq.s32.totalorder %s28, 0
      %p202 = por %p200, %p201
      %s204 = sadd.s32 %s203, 1
      %p207 = scmp.eq.s32.totalorder %s22, 1
      %p208 = scmp.ne.s32.totalorder %s203, %s205
      %p209 = scmp.eq.s32.totalorder %s22, 0
      %p210 = por %p208, %p209
      %p211 = scmp.ne.s32.totalorder %s203, %s205
      %p212 = scmp.eq.s32.totalorder %s27, 1
      %p213 = por %p211, %p212
      %p214 = scmp.ne.s32.totalorder %s205, %s206
      %p215 = scmp.eq.s32.totalorder %s27, 0
      %p216 = por %p214, %p215
      %p217 = scmp.ne.s32.totalorder %s205, %s206
      %p218 = scmp.eq.s32.totalorder %s28, 1
      %p219 = por %p217, %p218
      %p221 = scmp.ne.s32.totalorder %s206, %s220
      %p222 = scmp.eq.s32.totalorder %s28, 0
      %p223 = por %p221, %p222
      %s225 = sadd.s32 %s224, 1
      %p228 = scmp.eq.s32.totalorder %s22, 1
      %p229 = scmp.ne.s32.totalorder %s224, %s226
      %p230 = scmp.eq.s32.totalorder %s22, 0
      %p231 = por %p229, %p230
      %p232 = scmp.ne.s32.totalorder %s224, %s226
      %p233 = scmp.eq.s32.totalorder %s27, 1
      %p234 = por %p232, %p233
      %p235 = scmp.ne.s32.totalorder %s226, %s227
      %p236 = scmp.eq.s32.totalorder %s27, 0
      %p237 = por %p235, %p236
      %p238 = scmp.ne.s32.totalorder %s226, %s227
      %p239 = scmp.eq.s32.totalorder %s28, 1
      %p240 = por %p238, %p239
      %p242 = scmp.ne.s32.totalorder %s227, %s241
      %p243 = scmp.eq.s32.totalorder %s28, 0
      %p244 = por %p242, %p243
      %s246 = sadd.s32 %s245, 1
      %p249 = scmp.eq.s32.totalorder %s22, 1
      %p250 = scmp.ne.s32.totalorder %s245, %s247
      %p251 = scmp.eq.s32.totalorder %s22, 0
      %p252 = por %p250, %p251
      %p253 = scmp.ne.s32.totalorder %s245, %s247
      %p254 = scmp.eq.s32.totalorder %s27, 1
      %p255 = por %p253, %p254
      %p256 = scmp.ne.s32.totalorder %s247, %s248
      %p257 = scmp.eq.s32.totalorder %s27, 0
      %p258 = por %p256, %p257
      %p259 = scmp.ne.s32.totalorder %s247, %s248
      %p260 = scmp.eq.s32.totalorder %s28, 1
      %p261 = por %p259, %p260
      %p263 = scmp.ne.s32.totalorder %s248, %s262
      %p264 = scmp.eq.s32.totalorder %s28, 0
      %p265 = por %p263, %p264
      %s267 = sadd.s32 %s266, 1
      %p270 = scmp.eq.s32.totalorder %s22, 1
      %p271 = scmp.ne.s32.totalorder %s266, %s268
      %p272 = scmp.eq.s32.totalorder %s22, 0
      %p273 = por %p271, %p272
      %p274 = scmp.ne.s32.totalorder %s266, %s268
      %p275 = scmp.eq.s32.totalorder %s27, 1
      %p276 = por %p274, %p275
      %p277 = scmp.ne.s32.totalorder %s268, %s269
      %p278 = scmp.eq.s32.totalorder %s27, 0
      %p279 = por %p277, %p278
      %p280 = scmp.ne.s32.totalorder %s268, %s269
      %p281 = scmp.eq.s32.totalorder %s28, 1
      %p282 = por %p280, %p281
      %p284 = scmp.ne.s32.totalorder %s269, %s283
      %p285 = scmp.eq.s32.totalorder %s28, 0
      %p286 = por %p284, %p285
      %s288 = sadd.s32 %s287, 1
      %p291 = scmp.eq.s32.totalorder %s22, 1
      %p292 = scmp.ne.s32.totalorder %s287, %s289
      %p293 = scmp.eq.s32.totalorder %s22, 0
      %p294 = por %p292, %p293
      %p295 = scmp.ne.s32.totalorder %s287, %s289
      %p296 = scmp.eq.s32.totalorder %s27, 1
      %p297 = por %p295, %p296
      %p298 = scmp.ne.s32.totalorder %s289, %s290
      %p299 = scmp.eq.s32.totalorder %s27, 0
      %p300 = por %p298, %p299
      %p301 = scmp.ne.s32.totalorder %s289, %s290
      %p302 = scmp.eq.s32.totalorder %s28, 1
      %p303 = por %p301, %p302
      %p305 = scmp.ne.s32.totalorder %s290, %s304
      %p306 = scmp.eq.s32.totalorder %s28, 0
      %p307 = por %p305, %p306
      %s308 = ssub.s32 %s22, %s29
      %p309 = scmp.eq.s32.totalorder %s308, 0
      %s311 = sadd.s32 %s310, 1
      %s312 = scalar_select %p309, %s310, %s311
      %p315 = pneg %p309
      %p316 = scmp.eq.s32.totalorder %s22, 1
      %p317 = por %p315, %p316
      %p318 = scmp.ne.s32.totalorder %s310, %s313
      %p319 = scmp.eq.s32.totalorder %s22, 0
      %p320 = por %p318, %p319
      %p321 = scmp.ne.s32.totalorder %s310, %s313
      %p322 = scmp.eq.s32.totalorder %s27, 1
      %p323 = por %p321, %p322
      %p324 = scmp.ne.s32.totalorder %s313, %s314
      %p325 = scmp.eq.s32.totalorder %s27, 0
      %p326 = por %p324, %p325
      %p327 = scmp.ne.s32.totalorder %s313, %s314
      %p328 = scmp.eq.s32.totalorder %s28, 1
      %p329 = por %p327, %p328
      %p331 = scmp.ne.s32.totalorder %s314, %s330
      %p332 = scmp.eq.s32.totalorder %s28, 0
      %p333 = por %p331, %p332
      %p334 = scmp.le.s32.totalorder 1, %s22
      %p335 = scmp.lt.s32.totalorder %s22, 3
      %p336 = pnand %p334, %p335
      %p337 = pneg %p336
      // Predicated region
      $region9: #{tpu_custom_call.1} parent=5 // pred_check
        _
      $region10: #{tpu_custom_call.1} parent=5 // pred_check_branch
        %339 = sbr.rel (%p336) target = $region12
      $region11: #{tpu_custom_call.1} parent=5 // pred_region
        %s340 = ssub.s32 %s22, 1
        // Predicated region
        $region13: #{tpu_custom_call.1} parent=11 // pred_check
          %p341 = pneg %p69
        $region14: #{tpu_custom_call.1} parent=11 // pred_check_branch
          %343 = sbr.rel (%p341) target = $region16
        $region15: #{tpu_custom_call.1} parent=11 // pred_region
          _
        $region16: #{tpu_custom_call.1} parent=11 // pred_fallthru
          _
        // Predicated region
        $region17: #{tpu_custom_call.1} parent=11 // pred_check
          %p344 = pneg %p90
        $region18: #{tpu_custom_call.1} parent=11 // pred_check_branch
          %346 = sbr.rel (%p344) target = $region20
        $region19: #{tpu_custom_call.1} parent=11 // pred_region
          _
        $region20: #{tpu_custom_call.1} parent=11 // pred_fallthru
          _
        // Predicated region
        $region21: #{tpu_custom_call.1} parent=11 // pred_check
          %p347 = pneg %p111
        $region22: #{tpu_custom_call.1} parent=11 // pred_check_branch
          %349 = sbr.rel (%p347) target = $region24
        $region23: #{tpu_custom_call.1} parent=11 // pred_region
          _
        $region24: #{tpu_custom_call.1} parent=11 // pred_fallthru
          _
        // Predicated region
        $region25: #{tpu_custom_call.1} parent=11 // pred_check
          %p350 = pneg %p132
        $region26: #{tpu_custom_call.1} parent=11 // pred_check_branch
          %352 = sbr.rel (%p350) target = $region28
        $region27: #{tpu_custom_call.1} parent=11 // pred_region
          _
        $region28: #{tpu_custom_call.1} parent=11 // pred_fallthru
          _
        // Predicated region
        $region29: #{tpu_custom_call.1} parent=11 // pred_check
          %p353 = pneg %p153
        $region30: #{tpu_custom_call.1} parent=11 // pred_check_branch
          %355 = sbr.rel (%p353) target = $region32
        $region31: #{tpu_custom_call.1} parent=11 // pred_region
          _
        $region32: #{tpu_custom_call.1} parent=11 // pred_fallthru
          _
        // Predicated region
        $region33: #{tpu_custom_call.1} parent=11 // pred_check
          %p356 = pneg %p174
        $region34: #{tpu_custom_call.1} parent=11 // pred_check_branch
          %358 = sbr.rel (%p356) target = $region36
        $region35: #{tpu_custom_call.1} parent=11 // pred_region
          _
        $region36: #{tpu_custom_call.1} parent=11 // pred_fallthru
          _
        // Predicated region
        $region37: #{tpu_custom_call.1} parent=11 // pred_check
          %p359 = pneg %p195
        $region38: #{tpu_custom_call.1} parent=11 // pred_check_branch
          %361 = sbr.rel (%p359) target = $region40
        $region39: #{tpu_custom_call.1} parent=11 // pred_region
          _
        $region40: #{tpu_custom_call.1} parent=11 // pred_fallthru
          _
        // Predicated region
        $region41: #{tpu_custom_call.1} parent=11 // pred_check
          %p362 = pneg %p216
        $region42: #{tpu_custom_call.1} parent=11 // pred_check_branch
          %364 = sbr.rel (%p362) target = $region44
        $region43: #{tpu_custom_call.1} parent=11 // pred_region
          _
        $region44: #{tpu_custom_call.1} parent=11 // pred_fallthru
          _
        // Predicated region
        $region45: #{tpu_custom_call.1} parent=11 // pred_check
          %p365 = pneg %p237
        $region46: #{tpu_custom_call.1} parent=11 // pred_check_branch
          %367 = sbr.rel (%p365) target = $region48
        $region47: #{tpu_custom_call.1} parent=11 // pred_region
          _
        $region48: #{tpu_custom_call.1} parent=11 // pred_fallthru
          _
        // Predicated region
        $region49: #{tpu_custom_call.1} parent=11 // pred_check
          %p368 = pneg %p258
        $region50: #{tpu_custom_call.1} parent=11 // pred_check_branch
          %370 = sbr.rel (%p368) target = $region52
        $region51: #{tpu_custom_call.1} parent=11 // pred_region
          _
        $region52: #{tpu_custom_call.1} parent=11 // pred_fallthru
          _
        // Predicated region
        $region53: #{tpu_custom_call.1} parent=11 // pred_check
          %p371 = pneg %p279
        $region54: #{tpu_custom_call.1} parent=11 // pred_check_branch
          %373 = sbr.rel (%p371) target = $region56
        $region55: #{tpu_custom_call.1} parent=11 // pred_region
          _
        $region56: #{tpu_custom_call.1} parent=11 // pred_fallthru
          _
        // Predicated region
        $region57: #{tpu_custom_call.1} parent=11 // pred_check
          %p374 = pneg %p300
        $region58: #{tpu_custom_call.1} parent=11 // pred_check_branch
          %376 = sbr.rel (%p374) target = $region60
        $region59: #{tpu_custom_call.1} parent=11 // pred_region
          _
        $region60: #{tpu_custom_call.1} parent=11 // pred_fallthru
          _
      $region12: #{tpu_custom_call.1} parent=5 // pred_fallthru
        _
      %p377 = scmp.lt.s32.totalorder %s22, 2
      // Predicated region
      $region61: #{tpu_custom_call.1} parent=5 // pred_check
        %p378 = pneg %p377
      $region62: #{tpu_custom_call.1} parent=5 // pred_check_branch
        %380 = sbr.rel (%p378) target = $region64
      $region63: #{tpu_custom_call.1} parent=5 // pred_region
        // Predicated region
        $region65: #{tpu_custom_call.1} parent=63 // pred_check
          %p381 = pneg %p42
        $region66: #{tpu_custom_call.1} parent=63 // pred_check_branch
          %383 = sbr.rel (%p381) target = $region68
        $region67: #{tpu_custom_call.1} parent=63 // pred_region
          %p384 = scmp.lt.s32.totalorder %s22, 1
          %s385 = scalar_select %p384, %s22, 1
          %s386 = smul.addr %s385, 8
          %s387 = scalar_lea.vmem %s0, %s386
        $region68: #{tpu_custom_call.1} parent=63 // pred_fallthru
          _
      $region64: #{tpu_custom_call.1} parent=5 // pred_fallthru
        _
      %p388 = scmp.le.s32.totalorder 1, %s22
      %p389 = scmp.lt.s32.totalorder %s22, 3
      %p390 = pnand %p388, %p389
      %p391 = pneg %p390
      // Predicated region
      $region69: #{tpu_custom_call.1} parent=5 // pred_check
        _
      $region70: #{tpu_custom_call.1} parent=5 // pred_check_branch
        %393 = sbr.rel (%p390) target = $region72
      $region71: #{tpu_custom_call.1} parent=5 // pred_region
        %s394 = ssub.s32 %s22, 1
        %p395 = scmp.lt.s32.totalorder %s27, 1
        %s396 = scalar_select %p395, %s27, 1
        %s397 = smul.addr %s396, 8
        %s398 = scalar_lea.vmem %s0, %s397
        %p399 = pneg %p48
        %p400 = pneg %p45
        %p401 = pneg %p69
        %p402 = pneg %p66
        %p403 = pneg %p90
        %p404 = pneg %p87
        %p405 = pneg %p111
        %p406 = pneg %p108
        %p407 = pneg %p132
        %p408 = pneg %p129
        %p409 = pneg %p153
        %p410 = pneg %p150
        %p411 = pneg %p174
        %p412 = pneg %p171
        %p413 = pneg %p195
        %p414 = pneg %p192
        %p415 = pneg %p216
        %p416 = pneg %p213
        %p417 = pneg %p237
        %p418 = pneg %p234
        %p419 = pneg %p258
        %p420 = pneg %p255
        %p421 = pneg %p279
        %p422 = pneg %p276
        %p423 = pneg %p300
        %p424 = pneg %p297
        %p425 = pneg %p326
        %p426 = pneg %p323
        %s427 = sand.u32 %s313, 1
        %s428 = scalar_lea.sflag [#allocation3], %s427
        %s429 = sand.u32 %s313, 1
        %s430 = smul.addr %s429, 8
        %s431 = scalar_lea.vmem [#allocation2], %s430
        %p432 = scmp.lt.s32.totalorder %s27, 1
        %s433 = scalar_select %p432, %s27, 1
        %s434 = smul.addr %s433, 8
        %s435 = scalar_lea.vmem %s0, %s434
        %v437 = vld [vmem:[%s435] sm:$0xff]
        %v438 = vld [vmem:[%s1] sm:$0x1]
        %v439 = vld [vmem:[%s2] sm:$0x1]
        %vm440 = vcmask 261120
        %v441 = vsel %vm440, %v437, 0.0
        %442 = vadd.xlane.f32.xlu0 %v441
        %v443 = vpop.xlane.xlu0 %442
        %v444 = vrcp.pop 32.0
        %v445 = vmul.f32 %v443, %v444
        %v446 = vsub.f32 %v437, %v445
        %v447 = vmul.f32 %v446, %v446
        %v448 = vsel %vm440, %v447, 0.0
        %449 = vadd.xlane.f32.xlu0 %v448
        %v450 = vpop.xlane.xlu0 %449
        %v451 = vmul.f32 %v450, %v444
        %v452 = vadd.f32 %v451, 1e-05
        %v453 = vrsqrt.pop %v452
        %v454 = vmul.f32 %v446, %v453
        %v456 = vlaneseq
        %v457 = vshrl.u32 %v456, 7
        %v458 = vsub.s32 0, %v457
        %v459 = vrot.slane %v438, %v458
        %v461 = vmul.f32 %v454, %v459
        %v463 = vlaneseq
        %v464 = vshrl.u32 %v463, 7
        %v465 = vsub.s32 0, %v464
        %v466 = vrot.slane %v439, %v465
        %v468 = vadd.f32 %v461, %v466
        %v469 = vld [vmem:[%s3] sm:$0xf]
        %v470 = vld [vmem:[%s3 + $0x4] sm:$0xf]
        %v471 = vld [vmem:[%s3 + $0x8] sm:$0xf]
        %v472 = vld [vmem:[%s3 + $0xc] sm:$0xf]
        %v473 = vld [vmem:[%s3 + $0x10] sm:$0xf]
        %v474 = vld [vmem:[%s3 + $0x14] sm:$0xf]
        %v475 = vld [vmem:[%s3 + $0x18] sm:$0xf]
        %v476 = vld [vmem:[%s3 + $0x1c] sm:$0xf]
        %v477 = vld [vmem:[%s3 + $0x20] sm:$0xf]
        %v478 = vld [vmem:[%s3 + $0x24] sm:$0xf]
        %v479 = vld [vmem:[%s3 + $0x28] sm:$0xf]
        %v480 = vld [vmem:[%s3 + $0x2c] sm:$0xf]
        %v481 = vpack.c.bf16 %v468, %v468
        %v482 = vld [vmem:[%s4] sm:$0xff]
        %v483 = vld [vmem:[%s4 + $0x8] sm:$0xff]
        %v484 = vld [vmem:[%s4 + $0x10] sm:$0xff]
        %v485 = vld [vmem:[%s4 + $0x18] sm:$0xff]
        %v486 = vld [vmem:[%s4 + $0x20] sm:$0xff]
        %v487 = vld [vmem:[%s4 + $0x28] sm:$0xff]
        %v488 = vld [vmem:[%s4 + $0x30] sm:$0xff]
        %v489 = vld [vmem:[%s4 + $0x38] sm:$0xff]
        %v490 = vld [vmem:[%s4 + $0x40] sm:$0xff]
        %v491 = vld [vmem:[%s4 + $0x48] sm:$0xff]
        %v492 = vld [vmem:[%s4 + $0x50] sm:$0xff]
        %v493 = vld [vmem:[%s4 + $0x58] sm:$0xff]
        %495 = vset.pattern.permute.xlu0 0
        %496 = vperm.xlu0 %495, %v482
        %v497 = vpop.permute.xlu0 %496
        %500 = vset.pattern.permute.xlu0 0
        %501 = vperm.xlu0 %500, %v483
        %v502 = vpop.permute.xlu0 %501
        %505 = vset.pattern.permute.xlu0 0
        %506 = vperm.xlu0 %505, %v484
        %v507 = vpop.permute.xlu0 %506
        %510 = vset.pattern.permute.xlu0 0
        %511 = vperm.xlu0 %510, %v485
        %v512 = vpop.permute.xlu0 %511
        %515 = vset.pattern.permute.xlu0 0
        %516 = vperm.xlu0 %515, %v486
        %v517 = vpop.permute.xlu0 %516
        %520 = vset.pattern.permute.xlu0 0
        %521 = vperm.xlu0 %520, %v487
        %v522 = vpop.permute.xlu0 %521
        %525 = vset.pattern.permute.xlu0 0
        %526 = vperm.xlu0 %525, %v488
        %v527 = vpop.permute.xlu0 %526
        %530 = vset.pattern.permute.xlu0 0
        %531 = vperm.xlu0 %530, %v489
        %v532 = vpop.permute.xlu0 %531
        %535 = vset.pattern.permute.xlu0 0
        %536 = vperm.xlu0 %535, %v490
        %v537 = vpop.permute.xlu0 %536
        %540 = vset.pattern.permute.xlu0 0
        %541 = vperm.xlu0 %540, %v491
        %v542 = vpop.permute.xlu0 %541
        %545 = vset.pattern.permute.xlu0 0
        %546 = vperm.xlu0 %545, %v492
        %v547 = vpop.permute.xlu0 %546
        %550 = vset.pattern.permute.xlu0 0
        %551 = vperm.xlu0 %550, %v493
        %v552 = vpop.permute.xlu0 %551
        %v566 = vunpack.c.l.b16 %v469
        %v567 = vunpack.c.l.b16 %v470
        %v568 = vunpack.c.l.b16 %v471
        %v569 = vunpack.c.l.b16 %v472
        %v570 = vunpack.c.l.b16 %v473
        %v571 = vunpack.c.l.b16 %v474
        %v572 = vunpack.c.l.b16 %v475
        %v573 = vunpack.c.l.b16 %v476
        %v574 = vunpack.c.l.b16 %v477
        %v575 = vunpack.c.l.b16 %v478
        %v576 = vunpack.c.l.b16 %v479
        %v577 = vunpack.c.l.b16 %v480
        %v578 = vpack.c.b16 %v567, %v566
        %v579 = vpack.c.b16 %v569, %v568
        %v580 = vpack.c.b16 %v571, %v570
        %v581 = vpack.c.b16 %v573, %v572
        %v582 = vpack.c.b16 %v575, %v574
        %v583 = vpack.c.b16 %v577, %v576
        %v585 = vsel %vm440, %v578, 0
        %v588 = vsel %vm440, %v579, 0
        %v591 = vsel %vm440, %v580, 0
        %v594 = vsel %vm440, %v581, 0
        %v597 = vsel %vm440, %v582, 0
        %v600 = vsel %vm440, %v583, 0
        %v603 = vsel %vm440, %v481, 0
        %605 = vmatprep.subr.bf16.mxu0 0
        %606 = vmatpush1.bf16.xpose.msra.mxu0 %v603
        %607 = vmatprep.subr.bf16.mxu0 0
        %608 = vmatpush1.bf16.xpose.msra.mxu0 0
        %609 = vmatprep.subr.bf16.mxu0 0
        %610 = vmatpush1.bf16.xpose.msra.mxu0 0
        %611 = vmatprep.subr.bf16.mxu0 0
        %612 = vmatpush1.bf16.xpose.msra.mxu0 0
        %613 = vmatprep.subr.bf16.mxu0 0
        %614 = vmatpush1.bf16.xpose.msra.mxu0 0
        %615 = vmatprep.subr.bf16.mxu0 0
        %616 = vmatpush1.bf16.xpose.msra.mxu0 0
        %617 = vmatprep.subr.bf16.mxu0 0
        %618 = vmatpush1.bf16.xpose.msra.mxu0 0
        %619 = vmatprep.subr.bf16.mxu0 0
        %620 = vmatpush1.bf16.xpose.msra.mxu0 0
        %621 = vmatprep.subr.bf16.mxu0 0
        %622 = vmatpush1.bf16.xpose.msra.mxu0 0
        %623 = vmatprep.subr.bf16.mxu0 0
        %624 = vmatpush1.bf16.xpose.msra.mxu0 0
        %625 = vmatprep.subr.bf16.mxu0 0
        %626 = vmatpush1.bf16.xpose.msra.mxu0 0
        %627 = vmatprep.subr.bf16.mxu0 0
        %628 = vmatpush1.bf16.xpose.msra.mxu0 0
        %629 = vmatprep.subr.bf16.mxu0 0
        %630 = vmatpush1.bf16.xpose.msra.mxu0 0
        %631 = vmatprep.subr.bf16.mxu0 0
        %632 = vmatpush1.bf16.xpose.msra.mxu0 0
        %633 = vmatprep.subr.bf16.mxu0 0
        %634 = vmatpush1.bf16.xpose.msra.mxu0 0
        %635 = vmatprep.subr.bf16.mxu0 0
        %636 = vmatpush1.bf16.xpose.msra.mxu0 0
        %637 = vmatprep.mubr.bf16.mxu0 0
        %638 = vmatmul.mubr.bf16.gmra.mrb[0].mxu0 %v585
        %v639 = vpop.f32.mrb[0].mxu0
        %v640 = vadd.f32 %v497, %v639
        %v641 = vpop.f32.mrb[0].mxu0
        %v642 = vpop.f32.mrb[0].mxu0
        %v643 = vadd.f32 %v502, %v642
        %v644 = vpop.f32.mrb[0].mxu0
        %645 = vmatprep.mubr.bf16.mxu0 0
        %646 = vmatmul.mubr.bf16.gmra.mrb[0].mxu0 %v588
        %v647 = vpop.f32.mrb[0].mxu0
        %v648 = vadd.f32 %v507, %v647
        %v649 = vpop.f32.mrb[0].mxu0
        %v650 = vpop.f32.mrb[0].mxu0
        %v651 = vadd.f32 %v512, %v650
        %v652 = vpop.f32.mrb[0].mxu0
        %653 = vmatprep.mubr.bf16.mxu0 0
        %654 = vmatmul.mubr.bf16.gmra.mrb[0].mxu0 %v591
        %v655 = vpop.f32.mrb[0].mxu0
        %v656 = vadd.f32 %v517, %v655
        %v657 = vpop.f32.mrb[0].mxu0
        %v658 = vpop.f32.mrb[0].mxu0
        %v659 = vadd.f32 %v522, %v658
        %v660 = vpop.f32.mrb[0].mxu0
        %661 = vmatprep.mubr.bf16.mxu0 0
        %662 = vmatmul.mubr.bf16.gmra.mrb[0].mxu0 %v594
        %v663 = vpop.f32.mrb[0].mxu0
        %v664 = vadd.f32 %v527, %v663
        %v665 = vpop.f32.mrb[0].mxu0
        %v666 = vpop.f32.mrb[0].mxu0
        %v667 = vadd.f32 %v532, %v666
        %v668 = vpop.f32.mrb[0].mxu0
        %669 = vmatprep.mubr.bf16.mxu0 0
        %670 = vmatmul.mubr.bf16.gmra.mrb[0].mxu0 %v597
        %v671 = vpop.f32.mrb[0].mxu0
        %v672 = vadd.f32 %v537, %v671
        %v673 = vpop.f32.mrb[0].mxu0
        %v674 = vpop.f32.mrb[0].mxu0
        %v675 = vadd.f32 %v542, %v674
        %v676 = vpop.f32.mrb[0].mxu0
        %677 = vmatprep.mubr.bf16.mxu0 0
        %678 = vmatmul.mubr.bf16.gmra.mrb[0].mxu0 %v600
        %v679 = vpop.f32.mrb[0].mxu0
        %v680 = vadd.f32 %v547, %v679
        %v681 = vpop.f32.mrb[0].mxu0
        %v682 = vpop.f32.mrb[0].mxu0
        %v683 = vadd.f32 %v552, %v682
        %v684 = vpop.f32.mrb[0].mxu0
        %685 = vdwg.mxu0
        %v686 = vlaneseq
        %v687 = vshrl.u32 %v686, 7
        %v688 = vlaneseq
        %v689 = vand.u32 %v688, 127
        %vm690 = vcmp.gt.s32.totalorder %v689, %v687
        %v691 = vsel %vm690, -1e+30, 0.0
        %v692 = vpack.c.bf16 %v640, %v640
        %v693 = vpack.c.bf16 %v643, %v643
        %v694 = vpack.c.bf16 %v648, %v648
        %v695 = vpack.c.bf16 %v651, %v651
        %v696 = vpack.c.bf16 %v656, %v656
        %v697 = vpack.c.bf16 %v659, %v659
        %v698 = vpack.c.bf16 %v664, %v664
        %v699 = vpack.c.bf16 %v667, %v667
        %700 = vxpose.xlu0.c.b16.start [1/8] %v692, 128
        %701 = vxpose.xlu0.c.b16.cont [2/8] 0, 128
        %702 = vxpose.xlu0.c.b16.cont [3/8] 0, 128
        %703 = vxpose.xlu0.c.b16.cont [4/8] 0, 128
        %704 = vxpose.xlu0.c.b16.cont [5/8] 0, 128
        %705 = vxpose.xlu0.c.b16.cont [6/8] 0, 128
        %706 = vxpose.xlu0.c.b16.cont [7/8] 0, 128
        %707 = vxpose.xlu0.c.b16.end [8/8] 0, 128
        %v708 = vpop.trf.xlu0
        %v709 = vpop.trf.xlu0
        %v710 = vpop.trf.xlu0
        %v711 = vpop.trf.xlu0
        %v712 = vpop.trf.xlu0
        %v713 = vpop.trf.xlu0
        %v714 = vpop.trf.xlu0
        %v715 = vpop.trf.xlu0
        %vm716 = vcmask 64512
        %v718 = vsel %vm716, %v708, 0
        %vm720 = vcmask 1043456
        %v722 = vsel %vm720, %v696, 0
        %724 = vmatprep.subr.bf16.mxu0 0
        %725 = vmatpush1.bf16.msra.mxu0 %v722
        %726 = vmatprep.subr.bf16.mxu0 0
        %727 = vmatpush1.bf16.msra.mxu0 0
        %728 = vmatprep.subr.bf16.mxu0 0
        %729 = vmatpush1.bf16.msra.mxu0 0
        %730 = vmatprep.subr.bf16.mxu0 0
        %731 = vmatpush1.bf16.msra.mxu0 0
        %732 = vmatprep.subr.bf16.mxu0 0
        %733 = vmatpush1.bf16.msra.mxu0 0
        %734 = vmatprep.subr.bf16.mxu0 0
        %735 = vmatpush1.bf16.msra.mxu0 0
        %736 = vmatprep.subr.bf16.mxu0 0
        %737 = vmatpush1.bf16.msra.mxu0 0
        %738 = vmatprep.subr.bf16.mxu0 0
        %739 = vmatpush1.bf16.msra.mxu0 0
        %740 = vmatprep.subr.bf16.mxu0 0
        %741 = vmatpush1.bf16.msra.mxu0 0
        %742 = vmatprep.subr.bf16.mxu0 0
        %743 = vmatpush1.bf16.msra.mxu0 0
        %744 = vmatprep.subr.bf16.mxu0 0
        %745 = vmatpush1.bf16.msra.mxu0 0
        %746 = vmatprep.subr.bf16.mxu0 0
        %747 = vmatpush1.bf16.msra.mxu0 0
        %748 = vmatprep.subr.bf16.mxu0 0
        %749 = vmatpush1.bf16.msra.mxu0 0
        %750 = vmatprep.subr.bf16.mxu0 0
        %751 = vmatpush1.bf16.msra.mxu0 0
        %752 = vmatprep.subr.bf16.mxu0 0
        %753 = vmatpush1.bf16.msra.mxu0 0
        %754 = vmatprep.subr.bf16.mxu0 0
        %755 = vmatpush1.bf16.msra.mxu0 0
        %756 = vmatprep.mubr.bf16.mxu0 0
        %757 = vmatmul.mubr.bf16.gmra.mrb[0].mxu0 %v718
        %v758 = vpop.f32.mrb[0].mxu0
        %v759 = vadd.f32 %v691, %v758
        %v760 = vpop.f32.mrb[0].mxu0
        %v761 = vpop.f32.mrb[0].mxu0
        %v762 = vpop.f32.mrb[0].mxu0
        %763 = vdwg.mxu0
        %764 = vxpose.xlu0.c.b16.start [1/8] %v693, 128
        %765 = vxpose.xlu0.c.b16.cont [2/8] 0, 128
        %766 = vxpose.xlu0.c.b16.cont [3/8] 0, 128
        %767 = vxpose.xlu0.c.b16.cont [4/8] 0, 128
        %768 = vxpose.xlu0.c.b16.cont [5/8] 0, 128
        %769 = vxpose.xlu0.c.b16.cont [6/8] 0, 128
        %770 = vxpose.xlu0.c.b16.cont [7/8] 0, 128
        %771 = vxpose.xlu0.c.b16.end [8/8] 0, 128
        %v772 = vpop.trf.xlu0
        %v773 = vpop.trf.xlu0
        %v774 = vpop.trf.xlu0
        %v775 = vpop.trf.xlu0
        %v776 = vpop.trf.xlu0
        %v777 = vpop.trf.xlu0
        %v778 = vpop.trf.xlu0
        %v779 = vpop.trf.xlu0
        %v781 = vsel %vm716, %v772, 0
        %v784 = vsel %vm720, %v697, 0
        %786 = vmatprep.subr.bf16.mxu0 0
        %787 = vmatpush1.bf16.msra.mxu0 %v784
        %788 = vmatprep.subr.bf16.mxu0 0
        %789 = vmatpush1.bf16.msra.mxu0 0
        %790 = vmatprep.subr.bf16.mxu0 0
        %791 = vmatpush1.bf16.msra.mxu0 0
        %792 = vmatprep.subr.bf16.mxu0 0
        %793 = vmatpush1.bf16.msra.mxu0 0
        %794 = vmatprep.subr.bf16.mxu0 0
        %795 = vmatpush1.bf16.msra.mxu0 0
        %796 = vmatprep.subr.bf16.mxu0 0
        %797 = vmatpush1.bf16.msra.mxu0 0
        %798 = vmatprep.subr.bf16.mxu0 0
        %799 = vmatpush1.bf16.msra.mxu0 0
        %800 = vmatprep.subr.bf16.mxu0 0
        %801 = vmatpush1.bf16.msra.mxu0 0
        %802 = vmatprep.subr.bf16.mxu0 0
        %803 = vmatpush1.bf16.msra.mxu0 0
        %804 = vmatprep.subr.bf16.mxu0 0
        %805 = vmatpush1.bf16.msra.mxu0 0
        %806 = vmatprep.subr.bf16.mxu0 0
        %807 = vmatpush1.bf16.msra.mxu0 0
        %808 = vmatprep.subr.bf16.mxu0 0
        %809 = vmatpush1.bf16.msra.mxu0 0
        %810 = vmatprep.subr.bf16.mxu0 0
        %811 = vmatpush1.bf16.msra.mxu0 0
        %812 = vmatprep.subr.bf16.mxu0 0
        %813 = vmatpush1.bf16.msra.mxu0 0
        %814 = vmatprep.subr.bf16.mxu0 0
        %815 = vmatpush1.bf16.msra.mxu0 0
        %816 = vmatprep.subr.bf16.mxu0 0
        %817 = vmatpush1.bf16.msra.mxu0 0
        %818 = vmatprep.mubr.bf16.mxu0 0
        %819 = vmatmul.mubr.bf16.gmra.mrb[0].mxu0 %v781
        %v820 = vpop.f32.mrb[0].mxu0
        %v821 = vadd.f32 %v691, %v820
        %v822 = vpop.f32.mrb[0].mxu0
        %v823 = vpop.f32.mrb[0].mxu0
        %v824 = vpop.f32.mrb[0].mxu0
        %825 = vdwg.mxu0
        %826 = vxpose.xlu0.c.b16.start [1/8] %v694, 128
        %827 = vxpose.xlu0.c.b16.cont [2/8] 0, 128
        %828 = vxpose.xlu0.c.b16.cont [3/8] 0, 128
        %829 = vxpose.xlu0.c.b16.cont [4/8] 0, 128
        %830 = vxpose.xlu0.c.b16.cont [5/8] 0, 128
        %831 = vxpose.xlu0.c.b16.cont [6/8] 0, 128
        %832 = vxpose.xlu0.c.b16.cont [7/8] 0, 128
        %833 = vxpose.xlu0.c.b16.end [8/8] 0, 128
        %v834 = vpop.trf.xlu0
        %v835 = vpop.trf.xlu0
        %v836 = vpop.trf.xlu0
        %v837 = vpop.trf.xlu0
        %v838 = vpop.trf.xlu0
        %v839 = vpop.trf.xlu0
        %v840 = vpop.trf.xlu0
        %v841 = vpop.trf.xlu0
        %v843 = vsel %vm716, %v834, 0
        %v846 = vsel %vm720, %v698, 0
        %848 = vmatprep.subr.bf16.mxu0 0
        %849 = vmatpush1.bf16.msra.mxu0 %v846
        %850 = vmatprep.subr.bf16.mxu0 0
        %851 = vmatpush1.bf16.msra.mxu0 0
        %852 = vmatprep.subr.bf16.mxu0 0
        %853 = vmatpush1.bf16.msra.mxu0 0
        %854 = vmatprep.subr.bf16.mxu0 0
        %855 = vmatpush1.bf16.msra.mxu0 0
        %856 = vmatprep.subr.bf16.mxu0 0
        %857 = vmatpush1.bf16.msra.mxu0 0
        %858 = vmatprep.subr.bf16.mxu0 0
        %859 = vmatpush1.bf16.msra.mxu0 0
        %860 = vmatprep.subr.bf16.mxu0 0
        %861 = vmatpush1.bf16.msra.mxu0 0
        %862 = vmatprep.subr.bf16.mxu0 0
        %863 = vmatpush1.bf16.msra.mxu0 0
        %864 = vmatprep.subr.bf16.mxu0 0
        %865 = vmatpush1.bf16.msra.mxu0 0
        %866 = vmatprep.subr.bf16.mxu0 0
        %867 = vmatpush1.bf16.msra.mxu0 0
        %868 = vmatprep.subr.bf16.mxu0 0
        %869 = vmatpush1.bf16.msra.mxu0 0
        %870 = vmatprep.subr.bf16.mxu0 0
        %871 = vmatpush1.bf16.msra.mxu0 0
        %872 = vmatprep.subr.bf16.mxu0 0
        %873 = vmatpush1.bf16.msra.mxu0 0
        %874 = vmatprep.subr.bf16.mxu0 0
        %875 = vmatpush1.bf16.msra.mxu0 0
        %876 = vmatprep.subr.bf16.mxu0 0
        %877 = vmatpush1.bf16.msra.mxu0 0
        %878 = vmatprep.subr.bf16.mxu0 0
        %879 = vmatpush1.bf16.msra.mxu0 0
        %880 = vmatprep.mubr.bf16.mxu0 0
        %881 = vmatmul.mubr.bf16.gmra.mrb[0].mxu0 %v843
        %v882 = vpop.f32.mrb[0].mxu0
        %v883 = vadd.f32 %v691, %v882
        %v884 = vpop.f32.mrb[0].mxu0
        %v885 = vpop.f32.mrb[0].mxu0
        %v886 = vpop.f32.mrb[0].mxu0
        %887 = vdwg.mxu0
        %888 = vxpose.xlu0.c.b16.start [1/8] %v695, 128
        %889 = vxpose.xlu0.c.b16.cont [2/8] 0, 128
        %890 = vxpose.xlu0.c.b16.cont [3/8] 0, 128
        %891 = vxpose.xlu0.c.b16.cont [4/8] 0, 128
        %892 = vxpose.xlu0.c.b16.cont [5/8] 0, 128
        %893 = vxpose.xlu0.c.b16.cont [6/8] 0, 128
        %894 = vxpose.xlu0.c.b16.cont [7/8] 0, 128
        %895 = vxpose.xlu0.c.b16.end [8/8] 0, 128
        %v896 = vpop.trf.xlu0
        %v897 = vpop.trf.xlu0
        %v898 = vpop.trf.xlu0
        %v899 = vpop.trf.xlu0
        %v900 = vpop.trf.xlu0
        %v901 = vpop.trf.xlu0
        %v902 = vpop.trf.xlu0
        %v903 = vpop.trf.xlu0
        %v905 = vsel %vm716, %v896, 0
        %v908 = vsel %vm720, %v699, 0
        %910 = vmatprep.subr.bf16.mxu0 0
        %911 = vmatpush1.bf16.msra.mxu0 %v908
        %912 = vmatprep.subr.bf16.mxu0 0
        %913 = vmatpush1.bf16.msra.mxu0 0
        %914 = vmatprep.subr.bf16.mxu0 0
        %915 = vmatpush1.bf16.msra.mxu0 0
        %916 = vmatprep.subr.bf16.mxu0 0
        %917 = vmatpush1.bf16.msra.mxu0 0
        %918 = vmatprep.subr.bf16.mxu0 0
        %919 = vmatpush1.bf16.msra.mxu0 0
        %920 = vmatprep.subr.bf16.mxu0 0
        %921 = vmatpush1.bf16.msra.mxu0 0
        %922 = vmatprep.subr.bf16.mxu0 0
        %923 = vmatpush1.bf16.msra.mxu0 0
        %924 = vmatprep.subr.bf16.mxu0 0
        %925 = vmatpush1.bf16.msra.mxu0 0
        %926 = vmatprep.subr.bf16.mxu0 0
        %927 = vmatpush1.bf16.msra.mxu0 0
        %928 = vmatprep.subr.bf16.mxu0 0
        %929 = vmatpush1.bf16.msra.mxu0 0
        %930 = vmatprep.subr.bf16.mxu0 0
        %931 = vmatpush1.bf16.msra.mxu0 0
        %932 = vmatprep.subr.bf16.mxu0 0
        %933 = vmatpush1.bf16.msra.mxu0 0
        %934 = vmatprep.subr.bf16.mxu0 0
        %935 = vmatpush1.bf16.msra.mxu0 0
        %936 = vmatprep.subr.bf16.mxu0 0
        %937 = vmatpush1.bf16.msra.mxu0 0
        %938 = vmatprep.subr.bf16.mxu0 0
        %939 = vmatpush1.bf16.msra.mxu0 0
        %940 = vmatprep.subr.bf16.mxu0 0
        %941 = vmatpush1.bf16.msra.mxu0 0
        %942 = vmatprep.mubr.bf16.mxu0 0
        %943 = vmatmul.mubr.bf16.gmra.mrb[0].mxu0 %v905
        %v944 = vpop.f32.mrb[0].mxu0
        %v945 = vadd.f32 %v691, %v944
        %v946 = vpop.f32.mrb[0].mxu0
        %v947 = vpop.f32.mrb[0].mxu0
        %v948 = vpop.f32.mrb[0].mxu0
        %949 = vdwg.mxu0
        %v950 = vsel %vm716, %v759, -inf
        %951 = vmax.xlane.f32.xlu0 %v950
        %v952 = vpop.xlane.xlu0 %951
        %v953 = vsel %vm716, %v821, -inf
        %954 = vmax.xlane.f32.xlu0 %v953
        %v955 = vpop.xlane.xlu0 %954
        %v956 = vsel %vm716, %v883, -inf
        %957 = vmax.xlane.f32.xlu0 %v956
        %v958 = vpop.xlane.xlu0 %957
        %v959 = vsel %vm716, %v945, -inf
        %960 = vmax.xlane.f32.xlu0 %v959
        %v961 = vpop.xlane.xlu0 %960
        %v962 = vsub.f32 %v759, %v952
        %v963 = vsub.f32 %v821, %v955
        %v964 = vsub.f32 %v883, %v958
        %v965 = vsub.f32 %v945, %v961
        %v966 = vmul.f32 %v962, 1.442695
        %v967 = vpow.pop %v966
        %v968 = vmul.f32 %v963, 1.442695
        %v969 = vpow.pop %v968
        %v970 = vmul.f32 %v964, 1.442695
        %v971 = vpow.pop %v970
        %v972 = vmul.f32 %v965, 1.442695
        %v973 = vpow.pop %v972
        %v974 = vsel %vm716, %v967, 0.0
        %975 = vadd.xlane.f32.xlu0 %v974
        %v976 = vpop.xlane.xlu0 %975
        %v977 = vsel %vm716, %v969, 0.0
        %978 = vadd.xlane.f32.xlu0 %v977
        %v979 = vpop.xlane.xlu0 %978
        %v980 = vsel %vm716, %v971, 0.0
        %981 = vadd.xlane.f32.xlu0 %v980
        %v982 = vpop.xlane.xlu0 %981
        %v983 = vsel %vm716, %v973, 0.0
        %984 = vadd.xlane.f32.xlu0 %v983
        %v985 = vpop.xlane.xlu0 %984
        %v986 = vrcp.pop %v976
        %v987 = vrcp.pop %v979
        %v988 = vrcp.pop %v982
        %v989 = vrcp.pop %v985
        %v990 = vmul.f32 %v967, %v986
        %v991 = vmul.f32 %v969, %v987
        %v992 = vmul.f32 %v971, %v988
        %v993 = vmul.f32 %v973, %v989
        %v994 = vpack.c.bf16 %v672, %v672
        %v995 = vpack.c.bf16 %v675, %v675
        %v996 = vpack.c.bf16 %v680, %v680
        %v997 = vpack.c.bf16 %v683, %v683
        %v998 = vpack.c.bf16 %v990, %v990
        %v999 = vpack.c.bf16 %v991, %v991
        %v1000 = vpack.c.bf16 %v992, %v992
        %v1001 = vpack.c.bf16 %v993, %v993
        %v1003 = vsel %vm716, %v994, 0
        %v1006 = vsel %vm716, %v998, 0
        %1008 = vmatprep.subr.bf16.mxu0 0
        %1009 = vmatpush1.bf16.xpose.msra.mxu0 %v1006
        %1010 = vmatprep.subr.bf16.mxu0 0
        %1011 = vmatpush1.bf16.xpose.msra.mxu0 0
        %1012 = vmatprep.subr.bf16.mxu0 0
        %1013 = vmatpush1.bf16.xpose.msra.mxu0 0
        %1014 = vmatprep.subr.bf16.mxu0 0
        %1015 = vmatpush1.bf16.xpose.msra.mxu0 0
        %1016 = vmatprep.subr.bf16.mxu0 0
        %1017 = vmatpush1.bf16.xpose.msra.mxu0 0
        %1018 = vmatprep.subr.bf16.mxu0 0
        %1019 = vmatpush1.bf16.xpose.msra.mxu0 0
        %1020 = vmatprep.subr.bf16.mxu0 0
        %1021 = vmatpush1.bf16.xpose.msra.mxu0 0
        %1022 = vmatprep.subr.bf16.mxu0 0
        %1023 = vmatpush1.bf16.xpose.msra.mxu0 0
        %1024 = vmatprep.subr.bf16.mxu0 0
        %1025 = vmatpush1.bf16.xpose.msra.mxu0 0
        %1026 = vmatprep.subr.bf16.mxu0 0
        %1027 = vmatpush1.bf16.xpose.msra.mxu0 0
        %1028 = vmatprep.subr.bf16.mxu0 0
        %1029 = vmatpush1.bf16.xpose.msra.mxu0 0
        %1030 = vmatprep.subr.bf16.mxu0 0
        %1031 = vmatpush1.bf16.xpose.msra.mxu0 0
        %1032 = vmatprep.subr.bf16.mxu0 0
        %1033 = vmatpush1.bf16.xpose.msra.mxu0 0
        %1034 = vmatprep.subr.bf16.mxu0 0
        %1035 = vmatpush1.bf16.xpose.msra.mxu0 0
        %1036 = vmatprep.subr.bf16.mxu0 0
        %1037 = vmatpush1.bf16.xpose.msra.mxu0 0
        %1038 = vmatprep.subr.bf16.mxu0 0
        %1039 = vmatpush1.bf16.xpose.msra.mxu0 0
        %1040 = vmatprep.mubr.bf16.mxu0 0
        %1041 = vmatmul.mubr.bf16.gmra.mrb[0].mxu0 %v1003
        %v1042 = vpop.f32.mrb[0].mxu0
        %v1043 = vadd.f32 0.0, %v1042
        %v1044 = vpop.f32.mrb[0].mxu0
        %v1045 = vpop.f32.mrb[0].mxu0
        %v1046 = vpop.f32.mrb[0].mxu0
        %1047 = vdwg.mxu0
        %v1049 = vsel %vm716, %v995, 0
        %v1052 = vsel %vm716, %v999, 0
        %1054 = vmatprep.subr.bf16.mxu0 0
        %1055 = vmatpush1.bf16.xpose.msra.mxu0 %v1052
        %1056 = vmatprep.subr.bf16.mxu0 0
        %1057 = vmatpush1.bf16.xpose.msra.mxu0 0
        %1058 = vmatprep.subr.bf16.mxu0 0
        %1059 = vmatpush1.bf16.xpose.msra.mxu0 0
        %1060 = vmatprep.subr.bf16.mxu0 0
        %1061 = vmatpush1.bf16.xpose.msra.mxu0 0
        %1062 = vmatprep.subr.bf16.mxu0 0
        %1063 = vmatpush1.bf16.xpose.msra.mxu0 0
        %1064 = vmatprep.subr.bf16.mxu0 0
        %1065 = vmatpush1.bf16.xpose.msra.mxu0 0
        %1066 = vmatprep.subr.bf16.mxu0 0
        %1067 = vmatpush1.bf16.xpose.msra.mxu0 0
        %1068 = vmatprep.subr.bf16.mxu0 0
        %1069 = vmatpush1.bf16.xpose.msra.mxu0 0
        %1070 = vmatprep.subr.bf16.mxu0 0
        %1071 = vmatpush1.bf16.xpose.msra.mxu0 0
        %1072 = vmatprep.subr.bf16.mxu0 0
        %1073 = vmatpush1.bf16.xpose.msra.mxu0 0
        %1074 = vmatprep.subr.bf16.mxu0 0
        %1075 = vmatpush1.bf16.xpose.msra.mxu0 0
        %1076 = vmatprep.subr.bf16.mxu0 0
        %1077 = vmatpush1.bf16.xpose.msra.mxu0 0
        %1078 = vmatprep.subr.bf16.mxu0 0
        %1079 = vmatpush1.bf16.xpose.msra.mxu0 0
        %1080 = vmatprep.subr.bf16.mxu0 0
        %1081 = vmatpush1.bf16.xpose.msra.mxu0 0
        %1082 = vmatprep.subr.bf16.mxu0 0
        %1083 = vmatpush1.bf16.xpose.msra.mxu0 0
        %1084 = vmatprep.subr.bf16.mxu0 0
        %1085 = vmatpush1.bf16.xpose.msra.mxu0 0
        %1086 = vmatprep.mubr.bf16.mxu0 0
        %1087 = vmatmul.mubr.bf16.gmra.mrb[0].mxu0 %v1049
        %v1088 = vpop.f32.mrb[0].mxu0
        %v1089 = vadd.f32 0.0, %v1088
        %v1090 = vpop.f32.mrb[0].mxu0
        %v1091 = vpop.f32.mrb[0].mxu0
        %v1092 = vpop.f32.mrb[0].mxu0
        %1093 = vdwg.mxu0
        %v1095 = vsel %vm716, %v996, 0
        %v1098 = vsel %vm716, %v1000, 0
        %1100 = vmatprep.subr.bf16.mxu0 0
        %1101 = vmatpush1.bf16.xpose.msra.mxu0 %v1098
        %1102 = vmatprep.subr.bf16.mxu0 0
        %1103 = vmatpush1.bf16.xpose.msra.mxu0 0
        %1104 = vmatprep.subr.bf16.mxu0 0
        %1105 = vmatpush1.bf16.xpose.msra.mxu0 0
        %1106 = vmatprep.subr.bf16.mxu0 0
        %1107 = vmatpush1.bf16.xpose.msra.mxu0 0
        %1108 = vmatprep.subr.bf16.mxu0 0
        %1109 = vmatpush1.bf16.xpose.msra.mxu0 0
        %1110 = vmatprep.subr.bf16.mxu0 0
        %1111 = vmatpush1.bf16.xpose.msra.mxu0 0
        %1112 = vmatprep.subr.bf16.mxu0 0
        %1113 = vmatpush1.bf16.xpose.msra.mxu0 0
        %1114 = vmatprep.subr.bf16.mxu0 0
        %1115 = vmatpush1.bf16.xpose.msra.mxu0 0
        %1116 = vmatprep.subr.bf16.mxu0 0
        %1117 = vmatpush1.bf16.xpose.msra.mxu0 0
        %1118 = vmatprep.subr.bf16.mxu0 0
        %1119 = vmatpush1.bf16.xpose.msra.mxu0 0
        %1120 = vmatprep.subr.bf16.mxu0 0
        %1121 = vmatpush1.bf16.xpose.msra.mxu0 0
        %1122 = vmatprep.subr.bf16.mxu0 0
        %1123 = vmatpush1.bf16.xpose.msra.mxu0 0
        %1124 = vmatprep.subr.bf16.mxu0 0
        %1125 = vmatpush1.bf16.xpose.msra.mxu0 0
        %1126 = vmatprep.subr.bf16.mxu0 0
        %1127 = vmatpush1.bf16.xpose.msra.mxu0 0
        %1128 = vmatprep.subr.bf16.mxu0 0
        %1129 = vmatpush1.bf16.xpose.msra.mxu0 0
        %1130 = vmatprep.subr.bf16.mxu0 0
        %1131 = vmatpush1.bf16.xpose.msra.mxu0 0
        %1132 = vmatprep.mubr.bf16.mxu0 0
        %1133 = vmatmul.mubr.bf16.gmra.mrb[0].mxu0 %v1095
        %v1134 = vpop.f32.mrb[0].mxu0
        %v1135 = vadd.f32 0.0, %v1134
        %v1136 = vpop.f32.mrb[0].mxu0
        %v1137 = vpop.f32.mrb[0].mxu0
        %v1138 = vpop.f32.mrb[0].mxu0
        %1139 = vdwg.mxu0
        %v1141 = vsel %vm716, %v997, 0
        %v1144 = vsel %vm716, %v1001, 0
        %1146 = vmatprep.subr.bf16.mxu0 0
        %1147 = vmatpush1.bf16.xpose.msra.mxu0 %v1144
        %1148 = vmatprep.subr.bf16.mxu0 0
        %1149 = vmatpush1.bf16.xpose.msra.mxu0 0
        %1150 = vmatprep.subr.bf16.mxu0 0
        %1151 = vmatpush1.bf16.xpose.msra.mxu0 0
        %1152 = vmatprep.subr.bf16.mxu0 0
        %1153 = vmatpush1.bf16.xpose.msra.mxu0 0
        %1154 = vmatprep.subr.bf16.mxu0 0
        %1155 = vmatpush1.bf16.xpose.msra.mxu0 0
        %1156 = vmatprep.subr.bf16.mxu0 0
        %1157 = vmatpush1.bf16.xpose.msra.mxu0 0
        %1158 = vmatprep.subr.bf16.mxu0 0
        %1159 = vmatpush1.bf16.xpose.msra.mxu0 0
        %1160 = vmatprep.subr.bf16.mxu0 0
        %1161 = vmatpush1.bf16.xpose.msra.mxu0 0
        %1162 = vmatprep.subr.bf16.mxu0 0
        %1163 = vmatpush1.bf16.xpose.msra.mxu0 0
        %1164 = vmatprep.subr.bf16.mxu0 0
        %1165 = vmatpush1.bf16.xpose.msra.mxu0 0
        %1166 = vmatprep.subr.bf16.mxu0 0
        %1167 = vmatpush1.bf16.xpose.msra.mxu0 0
        %1168 = vmatprep.subr.bf16.mxu0 0
        %1169 = vmatpush1.bf16.xpose.msra.mxu0 0
        %1170 = vmatprep.subr.bf16.mxu0 0
        %1171 = vmatpush1.bf16.xpose.msra.mxu0 0
        %1172 = vmatprep.subr.bf16.mxu0 0
        %1173 = vmatpush1.bf16.xpose.msra.mxu0 0
        %1174 = vmatprep.subr.bf16.mxu0 0
        %1175 = vmatpush1.bf16.xpose.msra.mxu0 0
        %1176 = vmatprep.subr.bf16.mxu0 0
        %1177 = vmatpush1.bf16.xpose.msra.mxu0 0
        %1178 = vmatprep.mubr.bf16.mxu0 0
        %1179 = vmatmul.mubr.bf16.gmra.mrb[0].mxu0 %v1141
        %v1180 = vpop.f32.mrb[0].mxu0
        %v1181 = vadd.f32 0.0, %v1180
        %v1182 = vpop.f32.mrb[0].mxu0
        %v1183 = vpop.f32.mrb[0].mxu0
        %v1184 = vpop.f32.mrb[0].mxu0
        %1185 = vdwg.mxu0
        %v1186 = vpack.c.bf16 %v1089, %v1043
        %v1187 = vpack.c.bf16 %v1181, %v1135
        %v1188 = vld [vmem:[%s5] sm:$0xf]
        %v1189 = vld [vmem:[%s5 + $0x4] sm:$0xf]
        %v1190 = vld [vmem:[%s5 + $0x8] sm:$0xf]
        %v1191 = vld [vmem:[%s5 + $0xc] sm:$0xf]
        %v1192 = vld [vmem:[%s6] sm:$0x1]
        %v1194 = vlaneseq
        %v1195 = vshrl.u32 %v1194, 7
        %v1196 = vsub.s32 0, %v1195
        %v1197 = vrot.slane %v1192, %v1196
        %1199 = vxpose.xlu0.c.b16.start [1/8] %v1186, 128
        %1200 = vxpose.xlu0.c.b16.cont [2/8] %v1187, 128
        %1201 = vxpose.xlu0.c.b16.cont [3/8] 0, 128
        %1202 = vxpose.xlu0.c.b16.cont [4/8] 0, 128
        %1203 = vxpose.xlu0.c.b16.cont [5/8] 0, 128
        %1204 = vxpose.xlu0.c.b16.cont [6/8] 0, 128
        %1205 = vxpose.xlu0.c.b16.cont [7/8] 0, 128
        %1206 = vxpose.xlu0.c.b16.end [8/8] 0, 128
        %v1207 = vpop.trf.xlu0
        %v1208 = vpop.trf.xlu0
        %v1209 = vpop.trf.xlu0
        %v1210 = vpop.trf.xlu0
        %v1211 = vpop.trf.xlu0
        %v1212 = vpop.trf.xlu0
        %v1213 = vpop.trf.xlu0
        %v1214 = vpop.trf.xlu0
        %v1219 = vunpack.c.l.b16 %v1188
        %v1220 = vunpack.c.l.b16 %v1189
        %v1221 = vunpack.c.l.b16 %v1190
        %v1222 = vunpack.c.l.b16 %v1191
        %v1223 = vpack.c.b16 %v1220, %v1219
        %v1224 = vpack.c.b16 %v1222, %v1221
        %v1228 = vsel %vm440, %v1207, 0
        %1230 = vmatprep.subr.bf16.mxu0 0
        %1231 = vmatpush1.bf16.msra.mxu0 %v1223
        %1232 = vmatprep.subr.bf16.mxu0 0
        %1233 = vmatpush1.bf16.msra.mxu0 %v1224
        %1234 = vmatprep.subr.bf16.mxu0 0
        %1235 = vmatpush1.bf16.msra.mxu0 0
        %1236 = vmatprep.subr.bf16.mxu0 0
        %1237 = vmatpush1.bf16.msra.mxu0 0
        %1238 = vmatprep.subr.bf16.mxu0 0
        %1239 = vmatpush1.bf16.msra.mxu0 0
        %1240 = vmatprep.subr.bf16.mxu0 0
        %1241 = vmatpush1.bf16.msra.mxu0 0
        %1242 = vmatprep.subr.bf16.mxu0 0
        %1243 = vmatpush1.bf16.msra.mxu0 0
        %1244 = vmatprep.subr.bf16.mxu0 0
        %1245 = vmatpush1.bf16.msra.mxu0 0
        %1246 = vmatprep.subr.bf16.mxu0 0
        %1247 = vmatpush1.bf16.msra.mxu0 0
        %1248 = vmatprep.subr.bf16.mxu0 0
        %1249 = vmatpush1.bf16.msra.mxu0 0
        %1250 = vmatprep.subr.bf16.mxu0 0
        %1251 = vmatpush1.bf16.msra.mxu0 0
        %1252 = vmatprep.subr.bf16.mxu0 0
        %1253 = vmatpush1.bf16.msra.mxu0 0
        %1254 = vmatprep.subr.bf16.mxu0 0
        %1255 = vmatpush1.bf16.msra.mxu0 0
        %1256 = vmatprep.subr.bf16.mxu0 0
        %1257 = vmatpush1.bf16.msra.mxu0 0
        %1258 = vmatprep.subr.bf16.mxu0 0
        %1259 = vmatpush1.bf16.msra.mxu0 0
        %1260 = vmatprep.subr.bf16.mxu0 0
        %1261 = vmatpush1.bf16.msra.mxu0 0
        %1262 = vmatprep.mubr.bf16.mxu0 0
        %1263 = vmatmul.mubr.bf16.gmra.mrb[0].mxu0 %v1228
        %v1264 = vpop.f32.mrb[0].mxu0
        %v1265 = vadd.f32 %v1197, %v1264
        %v1266 = vpop.f32.mrb[0].mxu0
        %v1267 = vpop.f32.mrb[0].mxu0
        %v1268 = vpop.f32.mrb[0].mxu0
        %1269 = vdwg.mxu0
        %v1270 = vadd.f32 %v437, %v1265
        %v1271 = vld [vmem:[%s7] sm:$0x1]
        %v1272 = vld [vmem:[%s8] sm:$0x1]
        %v1273 = vsel %vm440, %v1270, 0.0
        %1274 = vadd.xlane.f32.xlu0 %v1273
        %v1275 = vpop.xlane.xlu0 %1274
        %v1276 = vmul.f32 %v1275, %v444
        %v1277 = vsub.f32 %v1270, %v1276
        %v1278 = vmul.f32 %v1277, %v1277
        %v1279 = vsel %vm440, %v1278, 0.0
        %1280 = vadd.xlane.f32.xlu0 %v1279
        %v1281 = vpop.xlane.xlu0 %1280
        %v1282 = vmul.f32 %v1281, %v444
        %v1283 = vadd.f32 %v1282, 1e-05
        %v1284 = vrsqrt.pop %v1283
        %v1285 = vmul.f32 %v1277, %v1284
        %v1287 = vlaneseq
        %v1288 = vshrl.u32 %v1287, 7
        %v1289 = vsub.s32 0, %v1288
        %v1290 = vrot.slane %v1271, %v1289
        %v1292 = vmul.f32 %v1285, %v1290
        %v1294 = vlaneseq
        %v1295 = vshrl.u32 %v1294, 7
        %v1296 = vsub.s32 0, %v1295
        %v1297 = vrot.slane %v1272, %v1296
        %v1299 = vadd.f32 %v1292, %v1297
        %v1300 = vpack.c.bf16 %v1299, %v1299
        %v1301 = vld [vmem:[%s9] sm:$0xf]
        %v1302 = vld [vmem:[%s9 + $0x4] sm:$0xf]
        %v1303 = vld [vmem:[%s9 + $0x8] sm:$0xf]
        %v1304 = vld [vmem:[%s9 + $0xc] sm:$0xf]
        %v1305 = vld [vmem:[%s10] sm:$0x1]
        %v1307 = vlaneseq
        %v1308 = vshrl.u32 %v1307, 7
        %v1309 = vsub.s32 0, %v1308
        %v1310 = vrot.slane %v1305, %v1309
        %v1316 = vunpack.c.l.b16 %v1301
        %v1317 = vunpack.c.l.b16 %v1302
        %v1318 = vunpack.c.l.b16 %v1303
        %v1319 = vunpack.c.l.b16 %v1304
        %v1320 = vpack.c.b16 %v1317, %v1316
        %v1321 = vpack.c.b16 %v1319, %v1318
        %v1325 = vsel %vm440, %v1300, 0
        %1327 = vmatprep.subr.bf16.mxu0 0
        %1328 = vmatpush1.bf16.msra.mxu0 %v1320
        %1329 = vmatprep.subr.bf16.mxu0 0
        %1330 = vmatpush1.bf16.msra.mxu0 %v1321
        %1331 = vmatprep.subr.bf16.mxu0 0
        %1332 = vmatpush1.bf16.msra.mxu0 0
        %1333 = vmatprep.subr.bf16.mxu0 0
        %1334 = vmatpush1.bf16.msra.mxu0 0
        %1335 = vmatprep.subr.bf16.mxu0 0
        %1336 = vmatpush1.bf16.msra.mxu0 0
        %1337 = vmatprep.subr.bf16.mxu0 0
        %1338 = vmatpush1.bf16.msra.mxu0 0
        %1339 = vmatprep.subr.bf16.mxu0 0
        %1340 = vmatpush1.bf16.msra.mxu0 0
        %1341 = vmatprep.subr.bf16.mxu0 0
        %1342 = vmatpush1.bf16.msra.mxu0 0
        %1343 = vmatprep.subr.bf16.mxu0 0
        %1344 = vmatpush1.bf16.msra.mxu0 0
        %1345 = vmatprep.subr.bf16.mxu0 0
        %1346 = vmatpush1.bf16.msra.mxu0 0
        %1347 = vmatprep.subr.bf16.mxu0 0
        %1348 = vmatpush1.bf16.msra.mxu0 0
        %1349 = vmatprep.subr.bf16.mxu0 0
        %1350 = vmatpush1.bf16.msra.mxu0 0
        %1351 = vmatprep.subr.bf16.mxu0 0
        %1352 = vmatpush1.bf16.msra.mxu0 0
        %1353 = vmatprep.subr.bf16.mxu0 0
        %1354 = vmatpush1.bf16.msra.mxu0 0
        %1355 = vmatprep.subr.bf16.mxu0 0
        %1356 = vmatpush1.bf16.msra.mxu0 0
        %1357 = vmatprep.subr.bf16.mxu0 0
        %1358 = vmatpush1.bf16.msra.mxu0 0
        %1359 = vmatprep.mubr.bf16.mxu0 0
        %1360 = vmatmul.mubr.bf16.gmra.mrb[0].mxu0 %v1325
        %v1361 = vpop.f32.mrb[0].mxu0
        %v1362 = vadd.f32 %v1310, %v1361
        %v1363 = vpop.f32.mrb[0].mxu0
        %v1364 = vpop.f32.mrb[0].mxu0
        %v1365 = vpop.f32.mrb[0].mxu0
        %1366 = vdwg.mxu0
        %v1367 = vmul.f32 %v1362, 0.5
        %v1368 = vmul.f32 %v1362, 0.044715
        %v1369 = vmul.f32 %v1368, %v1362
        %v1370 = vmul.f32 %v1369, %v1362
        %v1371 = vadd.f32 %v1362, %v1370
        %v1372 = vmul.f32 %v1371, 0.7978846
        %v1373 = vtanh.pop %v1372
        %v1374 = vadd.f32 %v1373, 1.0
        %v1375 = vmul.f32 %v1367, %v1374
        %v1376 = vpack.c.bf16 %v1375, %v1375
        %v1377 = vld [vmem:[%s11] sm:$0xf]
        %v1378 = vld [vmem:[%s11 + $0x4] sm:$0xf]
        %v1379 = vld [vmem:[%s11 + $0x8] sm:$0xf]
        %v1380 = vld [vmem:[%s11 + $0xc] sm:$0xf]
        %v1381 = vld [vmem:[%s11 + $0x10] sm:$0xf]
        %v1382 = vld [vmem:[%s11 + $0x14] sm:$0xf]
        %v1383 = vld [vmem:[%s11 + $0x18] sm:$0xf]
        %v1384 = vld [vmem:[%s11 + $0x1c] sm:$0xf]
        %v1385 = vld [vmem:[%s11 + $0x20] sm:$0xf]
        %v1386 = vld [vmem:[%s11 + $0x24] sm:$0xf]
        %v1387 = vld [vmem:[%s11 + $0x28] sm:$0xf]
        %v1388 = vld [vmem:[%s11 + $0x2c] sm:$0xf]
        %v1389 = vld [vmem:[%s11 + $0x30] sm:$0xf]
        %v1390 = vld [vmem:[%s11 + $0x34] sm:$0xf]
        %v1391 = vld [vmem:[%s11 + $0x38] sm:$0xf]
        %v1392 = vld [vmem:[%s11 + $0x3c] sm:$0xf]
        %v1393 = vld [vmem:[%s12] sm:$0x1]
        %v1395 = vlaneseq
        %v1396 = vshrl.u32 %v1395, 7
        %v1397 = vsub.s32 0, %v1396
        %v1398 = vrot.slane %v1393, %v1397
        %v1416 = vunpack.c.l.b16 %v1377
        %v1417 = vunpack.c.l.b16 %v1378
        %v1418 = vunpack.c.l.b16 %v1379
        %v1419 = vunpack.c.l.b16 %v1380
        %v1420 = vunpack.c.l.b16 %v1381
        %v1421 = vunpack.c.l.b16 %v1382
        %v1422 = vunpack.c.l.b16 %v1383
        %v1423 = vunpack.c.l.b16 %v1384
        %v1424 = vunpack.c.l.b16 %v1385
        %v1425 = vunpack.c.l.b16 %v1386
        %v1426 = vunpack.c.l.b16 %v1387
        %v1427 = vunpack.c.l.b16 %v1388
        %v1428 = vunpack.c.l.b16 %v1389
        %v1429 = vunpack.c.l.b16 %v1390
        %v1430 = vunpack.c.l.b16 %v1391
        %v1431 = vunpack.c.l.b16 %v1392
        %v1432 = vpack.c.b16 %v1417, %v1416
        %v1433 = vpack.c.b16 %v1419, %v1418
        %v1434 = vpack.c.b16 %v1421, %v1420
        %v1435 = vpack.c.b16 %v1423, %v1422
        %v1436 = vpack.c.b16 %v1425, %v1424
        %v1437 = vpack.c.b16 %v1427, %v1426
        %v1438 = vpack.c.b16 %v1429, %v1428
        %v1439 = vpack.c.b16 %v1431, %v1430
        %1448 = vmatprep.subr.bf16.mxu0 0
        %1449 = vmatpush1.bf16.msra.mxu0 %v1432
        %1450 = vmatprep.subr.bf16.mxu0 0
        %1451 = vmatpush1.bf16.msra.mxu0 %v1433
        %1452 = vmatprep.subr.bf16.mxu0 0
        %1453 = vmatpush1.bf16.msra.mxu0 %v1434
        %1454 = vmatprep.subr.bf16.mxu0 0
        %1455 = vmatpush1.bf16.msra.mxu0 %v1435
        %1456 = vmatprep.subr.bf16.mxu0 0
        %1457 = vmatpush1.bf16.msra.mxu0 %v1436
        %1458 = vmatprep.subr.bf16.mxu0 0
        %1459 = vmatpush1.bf16.msra.mxu0 %v1437
        %1460 = vmatprep.subr.bf16.mxu0 0
        %1461 = vmatpush1.bf16.msra.mxu0 %v1438
        %1462 = vmatprep.subr.bf16.mxu0 0
        %1463 = vmatpush1.bf16.msra.mxu0 %v1439
        %1464 = vmatprep.subr.bf16.mxu0 0
        %1465 = vmatpush1.bf16.msra.mxu0 0
        %1466 = vmatprep.subr.bf16.mxu0 0
        %1467 = vmatpush1.bf16.msra.mxu0 0
        %1468 = vmatprep.subr.bf16.mxu0 0
        %1469 = vmatpush1.bf16.msra.mxu0 0
        %1470 = vmatprep.subr.bf16.mxu0 0
        %1471 = vmatpush1.bf16.msra.mxu0 0
        %1472 = vmatprep.subr.bf16.mxu0 0
        %1473 = vmatpush1.bf16.msra.mxu0 0
        %1474 = vmatprep.subr.bf16.mxu0 0
        %1475 = vmatpush1.bf16.msra.mxu0 0
        %1476 = vmatprep.subr.bf16.mxu0 0
        %1477 = vmatpush1.bf16.msra.mxu0 0
        %1478 = vmatprep.subr.bf16.mxu0 0
        %1479 = vmatpush1.bf16.msra.mxu0 0
        %1480 = vmatprep.mubr.bf16.mxu0 0
        %1481 = vmatmul.mubr.bf16.gmra.mrb[0].mxu0 %v1376
        %v1482 = vpop.f32.mrb[0].mxu0
        %v1483 = vadd.f32 %v1398, %v1482
        %v1484 = vpop.f32.mrb[0].mxu0
        %v1485 = vpop.f32.mrb[0].mxu0
        %v1486 = vpop.f32.mrb[0].mxu0
        %1487 = vdwg.mxu0
        %v1488 = vadd.f32 %v1270, %v1483
        %1489 = vst.msk [vmem:[%s431] sm:$0xff] %vm440, %v1488
        %s1490 = sand.u32 %s313, 1
        %s1491 = scalar_lea.sflag [#allocation3], %s1490
        %s1492 = sand.u32 %s313, 1
        %s1493 = smul.addr %s1492, 8
        %s1494 = scalar_lea.vmem [#allocation2], %s1493
        // Predicated region
        $region73: #{tpu_custom_call.1} parent=71 // pred_check
          %p1495 = pneg %p323
        $region74: #{tpu_custom_call.1} parent=71 // pred_check_branch
          %1497 = sbr.rel (%p1495) target = $region76
        $region75: #{tpu_custom_call.1} parent=71 // pred_region
          %s1499 = ssub.s32 128, 128
          %1500 = vsyncadd %s1491, %s1499
          %s1501 = smul.addr %s27, 128
          %s1502 = scalar_lea.hbm %s13, %s1501
          %s1504 = sshll.u32 %s1494, 4
          %s1505 = int_to_ptr.vmem [resolvable:$true] %s1504
          %1507 = dma.vmem_to_hbm [thread:$0]  %s1505, 128, %s1502, %s1491
        $region76: #{tpu_custom_call.1} parent=71 // pred_fallthru
          _
      $region72: #{tpu_custom_call.1} parent=5 // pred_fallthru
        _
      %p1508 = scmp.le.s32.totalorder 2, %s22
      // Predicated region
      $region77: #{tpu_custom_call.1} parent=5 // pred_check
        %p1509 = pneg %p1508
      $region78: #{tpu_custom_call.1} parent=5 // pred_check_branch
        %1511 = sbr.rel (%p1509) target = $region80
      $region79: #{tpu_custom_call.1} parent=5 // pred_region
        %s1512 = ssub.s32 %s22, 2
        // Predicated region
        $region81: #{tpu_custom_call.1} parent=79 // pred_check
          %p1513 = pneg %p329
        $region82: #{tpu_custom_call.1} parent=79 // pred_check_branch
          %1515 = sbr.rel (%p1513) target = $region84
        $region83: #{tpu_custom_call.1} parent=79 // pred_region
          %s1516 = sand.u32 %s314, 1
          %s1517 = scalar_lea.sflag [#allocation3], %s1516
          %s1518 = sand.u32 %s314, 1
          %s1519 = smul.addr %s1518, 8
          %s1520 = scalar_lea.vmem [#allocation2], %s1519
          %1521 = dma.done %s1517, 128
        $region84: #{tpu_custom_call.1} parent=79 // pred_fallthru
          _
      $region80: #{tpu_custom_call.1} parent=5 // pred_fallthru
        _
    $region6: #{tpu_custom_call.1} parent=1 // loop_footer
      %s26 = sadd.s32 1, %s22
    $region7: #{tpu_custom_call.1} parent=1 // loop_footer_branch
      %21 = sbr.rel target = $region3
    $region8: #{tpu_custom_call.1} parent=1 // loop_exit
      _
    %1522 = vsyncpa [#allocation3], 1
    %s1523 = scalar_lea.sflag [#allocation3], 1
    %1524 = vsyncpa %s1523, 1

</llo_original>
